<compile_context>
chip_gen: v7x
topology: tpu7x:2x2x1
jax: 0.10.0
libtpu: 0.0.40
codegen_flags: <defaults>
</compile_context>

<pallas_src>
import functools

import jax
import jax.numpy as jnp
from jax import lax
from jax.experimental import pallas as pl
from jax.experimental.pallas import tpu as pltpu

MAX_TM = 512                       # max row tile for the matmul kernels
_VMEM_LIMIT = 48 * 1024 * 1024     # explicit scoped-VMEM budget (ok on v5e/v6e/v7x)


# ---------------------------------------------------------------- kernels ---
def _matmul_bias_kernel(x_ref, w_ref, b_ref, o_ref):
    acc = jnp.dot(x_ref[...], w_ref[...], preferred_element_type=jnp.float32)
    o_ref[...] = (acc + b_ref[...]).astype(o_ref.dtype)


def _matmul_bias_gdn_kernel(x_ref, w_ref, b_ref, g_ref, beta_ref, o_ref, *, inverse):
    # conv (bf16 operands, f32 accumulation on the MXU) + bias
    y = jnp.dot(x_ref[...], w_ref[...], preferred_element_type=jnp.float32) + b_ref[...]
    # fused (I)GDN epilogue: s = y^2 @ gamma + beta ; y * rsqrt(s) (or * sqrt(s))
    s = jnp.dot(y * y, g_ref[...], preferred_element_type=jnp.float32) + beta_ref[...]
    if inverse:
        out = y * jnp.sqrt(s)          # EUP sqrt
    else:
        out = y * lax.rsqrt(s)         # EUP rsqrt, no VALU divide
    o_ref[...] = out.astype(o_ref.dtype)


# --------------------------------------------------------------- wrappers ---
def _row_tiles(m):
    """Row tile tm (multiple of 8, <=512) and padded row count mp (>=2 grid
    steps when the row count allows, so both v7x TensorCores get work)."""
    mp8 = ((m + 7) // 8) * 8
    tm = min(MAX_TM, mp8)
    if mp8 // tm < 2 and mp8 >= 16:
        tm = ((mp8 // 2 + 7) // 8) * 8
    mp = ((m + tm - 1) // tm) * tm
    return tm, mp


def fused_matmul(x, w, b, gamma=None, beta=None, inverse=False):
    """y = x:(M,K) @ w:(K,N) + b:(N,), optionally followed by (I)GDN over N."""
    m, kdim = x.shape
    n = w.shape[1]
    tm, mp = _row_tiles(m)

    xb = x.astype(jnp.bfloat16)                    # bf16 operands, f32 accum
    if mp != m:                                    # small row pad, fused by XLA
        xb = jnp.pad(xb, ((0, mp - m), (0, 0)))    # into the im2col fusion
    wb = w.astype(jnp.bfloat16)
    b2 = b.reshape(1, n).astype(jnp.float32)

    cparams = pltpu.CompilerParams(
        dimension_semantics=("parallel",),
        vmem_limit_bytes=_VMEM_LIMIT,
    )
    grid = (mp // tm,)

    if gamma is None:
        out = pl.pallas_call(
            _matmul_bias_kernel,
            out_shape=jax.ShapeDtypeStruct((mp, n), jnp.float32),
            grid_spec=pltpu.PrefetchScalarGridSpec(
                num_scalar_prefetch=0,
                grid=grid,
                in_specs=[
                    pl.BlockSpec((tm, kdim), lambda i: (i, 0)),
                    pl.BlockSpec((kdim, n), lambda i: (0, 0)),
                    pl.BlockSpec((1, n), lambda i: (0, 0)),
                ],
                out_specs=pl.BlockSpec((tm, n), lambda i: (i, 0)),
            ),
            compiler_params=cparams,
        )(xb, wb, b2)
    else:
        g2 = gamma.astype(jnp.float32)
        bt2 = beta.reshape(1, n).astype(jnp.float32)
        out = pl.pallas_call(
            functools.partial(_matmul_bias_gdn_kernel, inverse=inverse),
            out_shape=jax.ShapeDtypeStruct((mp, n), jnp.float32),
            grid_spec=pltpu.PrefetchScalarGridSpec(
                num_scalar_prefetch=0,
                grid=grid,
                in_specs=[
                    pl.BlockSpec((tm, kdim), lambda i: (i, 0)),
                    pl.BlockSpec((kdim, n), lambda i: (0, 0)),
                    pl.BlockSpec((1, n), lambda i: (0, 0)),
                    pl.BlockSpec((n, n), lambda i: (0, 0)),
                    pl.BlockSpec((1, n), lambda i: (0, 0)),
                ],
                out_specs=pl.BlockSpec((tm, n), lambda i: (i, 0)),
            ),
            compiler_params=cparams,
        )(xb, wb, b2, g2, bt2)
    # padded rows (bias -> sqrt(beta) garbage) must be sliced off
    return out[:m] if mp != m else out


def conv2d_gdn(x_nhwc, weight, bias, stride, padding, gamma=None, beta=None):
    """Conv2d (weight: (Cout,Cin,k,k) PyTorch layout), optionally fused GDN."""
    cout, cin, k, _ = weight.shape
    xp = jnp.pad(x_nhwc, ((0, 0), (padding, padding), (padding, padding), (0, 0)))
    nb, hp, wp, _ = xp.shape
    ho = (hp - k) // stride + 1
    wo = (wp - k) // stride + 1
    # im2col: slabs concatenated on the trailing axis -> K ordered (kh, kw, ci);
    # no transpose of the expanded tensor (the tiny weight is permuted instead).
    slabs = []
    for kh in range(k):
        for kw in range(k):
            slabs.append(
                xp[:, kh:kh + stride * (ho - 1) + 1:stride,
                   kw:kw + stride * (wo - 1) + 1:stride, :])
    cols = jnp.concatenate(slabs, axis=-1).reshape(nb * ho * wo, k * k * cin)
    w2 = jnp.transpose(weight, (2, 3, 1, 0)).reshape(k * k * cin, cout)
    y = fused_matmul(cols, w2, bias, gamma, beta, inverse=False)
    return y.reshape(nb, ho, wo, cout)


def conv_transpose2d_gdn(x_nhwc, weight, bias, gamma=None, beta=None):
    """ConvTranspose2d k=5, stride=2, padding=2, output_padding=1
    (weight: (Cin,Cout,5,5) PyTorch layout), optionally fused inverse GDN.

    4-phase (sub-pixel) decomposition: every output pixel with parity (py,px)
    only sees input taps in a 3x3 neighborhood of the *undilated* input, so we
    do one 9-tap im2col and a single matmul with a (9*Cin, 4*Cout) combined
    phase weight, then interleave the 4 phases spatially."""
    cin, cout, k, _ = weight.shape
    assert k == 5, "phase decomposition specialised to k=5, s=2, p=2, op=1"
    nb, h, w, _ = x_nhwc.shape

    # 3x3-neighborhood im2col (pad 1 all around), K ordered (dy, dx, ci)
    xp = jnp.pad(x_nhwc, ((0, 0), (1, 1), (1, 1), (0, 0)))
    slabs = []
    for dy in range(3):
        for dx in range(3):
            slabs.append(xp[:, dy:dy + h, dx:dx + w, :])
    cols = jnp.concatenate(slabs, axis=-1).reshape(nb * h * w, 9 * cin)

    # combined phase weight: out col (py*2+px)*cout + co
    #   tap (dy,dx) of phase (py,px) uses kernel index ky = 4-2dy (py=0) or
    #   5-2dy (py=1, dy=0 tap is zero); same for kx/px.
    wt = jnp.transpose(weight, (2, 3, 0, 1))          # (ky, kx, cin, cout)
    zero_blk = jnp.zeros((cin, cout), weight.dtype)
    phase_mats = []
    for py in range(2):
        for px in range(2):
            blocks = []
            for dy in range(3):
                for dx in range(3):
                    ky = 4 - 2 * dy if py == 0 else 5 - 2 * dy
                    kx = 4 - 2 * dx if px == 0 else 5 - 2 * dx
                    if 0 <= ky < k and 0 <= kx < k:
                        blocks.append(wt[ky, kx])
                    else:
                        blocks.append(zero_blk)
            phase_mats.append(jnp.concatenate(blocks, axis=0))   # (9*cin, cout)
    w_comb = jnp.concatenate(phase_mats, axis=1)                 # (9*cin, 4*cout)
    b_comb = jnp.tile(bias, 4)                                   # (4*cout,)

    if gamma is not None:
        g_comb = jnp.kron(jnp.eye(4, dtype=gamma.dtype), gamma)  # block-diag
        beta_comb = jnp.tile(beta, 4)
        y = fused_matmul(cols, w_comb, b_comb, g_comb, beta_comb, inverse=True)
    else:
        y = fused_matmul(cols, w_comb, b_comb)

    # interleave the 4 phases: out[:, 2u+py, 2v+px, :] = y[u, v, py, px, :]
    y = y.reshape(nb, h, w, 2, 2, cout)
    y = jnp.transpose(y, (0, 1, 3, 2, 4, 5))
    return y.reshape(nb, 2 * h, 2 * w, cout)


# ----------------------------------------------------------------- params ---
def init_params(key, n_ch, m_ch):
    ks = iter(jax.random.split(key, 32))

    def cw(cout, cin, k=5):
        return jax.random.normal(next(ks), (cout, cin, k, k), jnp.float32) / jnp.sqrt(cin * k * k)

    def tw(cin, cout, k=5):
        return jax.random.normal(next(ks), (cin, cout, k, k), jnp.float32) / jnp.sqrt(cin * k * k)

    def gdn_p(c):
        gamma = 0.1 * jnp.eye(c, dtype=jnp.float32) + 1e-3
        beta = jnp.ones((c,), jnp.float32)
        return gamma, beta

    p = {}
    # encoder (AnalysisNet): 4x conv5x5 s2 p2, GDN after the first three
    p["e1_w"], p["e1_b"] = cw(n_ch, 3), jnp.zeros((n_ch,), jnp.float32)
    p["g1_g"], p["g1_b"] = gdn_p(n_ch)
    p["e2_w"], p["e2_b"] = cw(n_ch, n_ch), jnp.zeros((n_ch,), jnp.float32)
    p["g2_g"], p["g2_b"] = gdn_p(n_ch)
    p["e3_w"], p["e3_b"] = cw(n_ch, n_ch), jnp.zeros((n_ch,), jnp.float32)
    p["g3_g"], p["g3_b"] = gdn_p(n_ch)
    p["e4_w"], p["e4_b"] = cw(m_ch, n_ch), jnp.zeros((m_ch,), jnp.float32)
    # decoder (SynthesisNet): 4x convT5x5 s2 p2 op1, IGDN after the first three
    p["d1_w"], p["d1_b"] = tw(m_ch, n_ch), jnp.zeros((n_ch,), jnp.float32)
    p["ig1_g"], p["ig1_b"] = gdn_p(n_ch)
    p["d2_w"], p["d2_b"] = tw(n_ch, n_ch), jnp.zeros((n_ch,), jnp.float32)
    p["ig2_g"], p["ig2_b"] = gdn_p(n_ch)
    p["d3_w"], p["d3_b"] = tw(n_ch, n_ch), jnp.zeros((n_ch,), jnp.float32)
    p["ig3_g"], p["ig3_b"] = gdn_p(n_ch)
    p["d4_w"], p["d4_b"] = tw(n_ch, 3), jnp.zeros((3,), jnp.float32)
    return p


# ---------------------------------------------------------------- forward ---
def edic_forward(x_nchw, p):
    x = jnp.transpose(x_nchw, (0, 2, 3, 1))  # -> NHWC
    # encoder: conv5x5 s2 p2 (+ fused GDN for the first three)
    x = conv2d_gdn(x, p["e1_w"], p["e1_b"], 2, 2, p["g1_g"], p["g1_b"])
    x = conv2d_gdn(x, p["e2_w"], p["e2_b"], 2, 2, p["g2_g"], p["g2_b"])
    x = conv2d_gdn(x, p["e3_w"], p["e3_b"], 2, 2, p["g3_g"], p["g3_b"])
    feature = conv2d_gdn(x, p["e4_w"], p["e4_b"], 2, 2)
    # decoder: convT5x5 s2 p2 op1 (+ fused IGDN for the first three)
    y = conv_transpose2d_gdn(feature, p["d1_w"], p["d1_b"], p["ig1_g"], p["ig1_b"])
    y = conv_transpose2d_gdn(y, p["d2_w"], p["d2_b"], p["ig2_g"], p["ig2_b"])
    y = conv_transpose2d_gdn(y, p["d3_w"], p["d3_b"], p["ig3_g"], p["ig3_b"])
    recon = conv_transpose2d_gdn(y, p["d4_w"], p["d4_b"])
    return jnp.transpose(recon, (0, 3, 1, 2))  # -> NCHW


if __name__ == "__main__":
    key = jax.random.PRNGKey(0)
    k_x, k_p = jax.random.split(key)

    # small config consistent with the module: out_channels_n=32, out_channels_m=48
    N_CH, M_CH = 32, 48
    x = jax.random.normal(k_x, (2, 3, 16, 16), jnp.float32)  # NCHW, like PyTorch
    params = init_params(k_p, N_CH, M_CH)

    recon = jax.jit(edic_forward)(x, params)
    recon = jax.block_until_ready(recon)

    assert recon.shape == (2, 3, 16, 16), recon.shape
    assert recon.dtype == jnp.float32
    assert bool(jnp.all(jnp.isfinite(recon)))
    print("KERNEL_OK")
</pallas_src>

<mosaic_0001>
module attributes {stable_mosaic.version = 11 : i64} {
  func.func @_matmul_bias_gdn_kernel(%arg0: i32, %arg1: memref<64x75xbf16, #tpu.memory_space<vmem>>, %arg2: memref<75x32xbf16, #tpu.memory_space<vmem>>, %arg3: memref<1x32xf32, #tpu.memory_space<vmem>>, %arg4: memref<32x32xf32, #tpu.memory_space<vmem>>, %arg5: memref<1x32xf32, #tpu.memory_space<vmem>>, %arg6: memref<64x32xf32, #tpu.memory_space<vmem>>) attributes {dimension_semantics = [#tpu.dimension_semantics<parallel>], iteration_bounds = array<i64: 2>, scalar_prefetch = 0 : i64, scratch_operands = 0 : i64, tpu.core_type = #tpu.core_type<tc>, window_params = [{transform_indices = @transform_0, window_bounds = array<i64: 64, 75>}, {pipeline_mode = #tpu.pipeline_mode<synchronous>, transform_indices = @transform_1, window_bounds = array<i64: 75, 32>}, {pipeline_mode = #tpu.pipeline_mode<synchronous>, transform_indices = @transform_2, window_bounds = array<i64: 1, 32>}, {pipeline_mode = #tpu.pipeline_mode<synchronous>, transform_indices = @transform_3, window_bounds = array<i64: 32, 32>}, {pipeline_mode = #tpu.pipeline_mode<synchronous>, transform_indices = @transform_4, window_bounds = array<i64: 1, 32>}, {transform_indices = @transform_5, window_bounds = array<i64: 64, 32>}]} {
    %c0 = arith.constant 0 : index
    %c0_0 = arith.constant 0 : index
    %0 = vector.load %arg1[%c0, %c0_0] : memref<64x75xbf16, #tpu.memory_space<vmem>>, vector<64x75xbf16>
    %c0_1 = arith.constant 0 : index
    %c0_2 = arith.constant 0 : index
    %1 = vector.load %arg2[%c0_1, %c0_2] : memref<75x32xbf16, #tpu.memory_space<vmem>>, vector<75x32xbf16>
    %cst = arith.constant dense<0.000000e+00> : vector<64x32xf32>
    %2 = tpu.matmul %0, %1, %cst {dimension_numbers = #tpu.dot_dimension_numbers<[1], [0], [0], [1], [0, 0, 1, 1], [], []>} : vector<64x75xbf16>, vector<75x32xbf16>, vector<64x32xf32> -> vector<64x32xf32>
    %c0_3 = arith.constant 0 : index
    %c0_4 = arith.constant 0 : index
    %3 = vector.load %arg3[%c0_3, %c0_4] : memref<1x32xf32, #tpu.memory_space<vmem>>, vector<1x32xf32>
    %4 = vector.broadcast %3 : vector<1x32xf32> to vector<64x32xf32>
    %5 = arith.addf %2, %4 : vector<64x32xf32>
    %6 = arith.mulf %5, %5 : vector<64x32xf32>
    %c0_5 = arith.constant 0 : index
    %c0_6 = arith.constant 0 : index
    %7 = vector.load %arg4[%c0_5, %c0_6] : memref<32x32xf32, #tpu.memory_space<vmem>>, vector<32x32xf32>
    %cst_7 = arith.constant dense<0.000000e+00> : vector<64x32xf32>
    %8 = tpu.matmul %6, %7, %cst_7 {dimension_numbers = #tpu.dot_dimension_numbers<[1], [0], [0], [1], [0, 0, 1, 1], [], []>} : vector<64x32xf32>, vector<32x32xf32>, vector<64x32xf32> -> vector<64x32xf32>
    %c0_8 = arith.constant 0 : index
    %c0_9 = arith.constant 0 : index
    %9 = vector.load %arg5[%c0_8, %c0_9] : memref<1x32xf32, #tpu.memory_space<vmem>>, vector<1x32xf32>
    %10 = vector.broadcast %9 : vector<1x32xf32> to vector<64x32xf32>
    %11 = arith.addf %8, %10 : vector<64x32xf32>
    %12 = math.rsqrt %11 : vector<64x32xf32>
    %13 = arith.mulf %5, %12 : vector<64x32xf32>
    %c0_10 = arith.constant 0 : index
    %c0_11 = arith.constant 0 : index
    %14 = vector.load %arg6[%c0_10, %c0_11] : memref<64x32xf32, #tpu.memory_space<vmem>>, vector<64x32xf32>
    tpu.vector_store %arg6[%c0_10, %c0_11], %13 {strides = array<i32>} : memref<64x32xf32, #tpu.memory_space<vmem>>, vector<64x32xf32>,
    return
  }
  func.func @transform_0(%arg0: i32) -> (i32, i32) {
    %c0_i32 = arith.constant 0 : i32
    %c0_i32_0 = arith.constant 0 : i32
    return %arg0, %c0_i32 : i32, i32
  }
  func.func @transform_1(%arg0: i32) -> (i32, i32) {
    %c0_i32 = arith.constant 0 : i32
    %c0_i32_0 = arith.constant 0 : i32
    %c0_i32_1 = arith.constant 0 : i32
    return %c0_i32, %c0_i32_0 : i32, i32
  }
  func.func @transform_2(%arg0: i32) -> (i32, i32) {
    %c0_i32 = arith.constant 0 : i32
    %c0_i32_0 = arith.constant 0 : i32
    %c0_i32_1 = arith.constant 0 : i32
    return %c0_i32, %c0_i32_0 : i32, i32
  }
  func.func @transform_3(%arg0: i32) -> (i32, i32) {
    %c0_i32 = arith.constant 0 : i32
    %c0_i32_0 = arith.constant 0 : i32
    %c0_i32_1 = arith.constant 0 : i32
    return %c0_i32, %c0_i32_0 : i32, i32
  }
  func.func @transform_4(%arg0: i32) -> (i32, i32) {
    %c0_i32 = arith.constant 0 : i32
    %c0_i32_0 = arith.constant 0 : i32
    %c0_i32_1 = arith.constant 0 : i32
    return %c0_i32, %c0_i32_0 : i32, i32
  }
  func.func @transform_5(%arg0: i32) -> (i32, i32) {
    %c0_i32 = arith.constant 0 : i32
    %c0_i32_0 = arith.constant 0 : i32
    return %arg0, %c0_i32 : i32, i32
  }
}

module attributes {stable_mosaic.version = 11 : i64} {
  func.func @_matmul_bias_gdn_kernel(%arg0: i32, %arg1: memref<16x800xbf16, #tpu.memory_space<vmem>>, %arg2: memref<800x32xbf16, #tpu.memory_space<vmem>>, %arg3: memref<1x32xf32, #tpu.memory_space<vmem>>, %arg4: memref<32x32xf32, #tpu.memory_space<vmem>>, %arg5: memref<1x32xf32, #tpu.memory_space<vmem>>, %arg6: memref<16x32xf32, #tpu.memory_space<vmem>>) attributes {dimension_semantics = [#tpu.dimension_semantics<parallel>], iteration_bounds = array<i64: 2>, scalar_prefetch = 0 : i64, scratch_operands = 0 : i64, tpu.core_type = #tpu.core_type<tc>, window_params = [{transform_indices = @transform_0, window_bounds = array<i64: 16, 800>}, {pipeline_mode = #tpu.pipeline_mode<synchronous>, transform_indices = @transform_1, window_bounds = array<i64: 800, 32>}, {pipeline_mode = #tpu.pipeline_mode<synchronous>, transform_indices = @transform_2, window_bounds = array<i64: 1, 32>}, {pipeline_mode = #tpu.pipeline_mode<synchronous>, transform_indices = @transform_3, window_bounds = array<i64: 32, 32>}, {pipeline_mode = #tpu.pipeline_mode<synchronous>, transform_indices = @transform_4, window_bounds = array<i64: 1, 32>}, {transform_indices = @transform_5, window_bounds = array<i64: 16, 32>}]} {
    %c0 = arith.constant 0 : index
    %c0_0 = arith.constant 0 : index
    %0 = vector.load %arg1[%c0, %c0_0] : memref<16x800xbf16, #tpu.memory_space<vmem>>, vector<16x800xbf16>
    %c0_1 = arith.constant 0 : index
    %c0_2 = arith.constant 0 : index
    %1 = vector.load %arg2[%c0_1, %c0_2] : memref<800x32xbf16, #tpu.memory_space<vmem>>, vector<800x32xbf16>
    %cst = arith.constant dense<0.000000e+00> : vector<16x32xf32>
    %2 = tpu.matmul %0, %1, %cst {dimension_numbers = #tpu.dot_dimension_numbers<[1], [0], [0], [1], [0, 0, 1, 1], [], []>} : vector<16x800xbf16>, vector<800x32xbf16>, vector<16x32xf32> -> vector<16x32xf32>
    %c0_3 = arith.constant 0 : index
    %c0_4 = arith.constant 0 : index
    %3 = vector.load %arg3[%c0_3, %c0_4] : memref<1x32xf32, #tpu.memory_space<vmem>>, vector<1x32xf32>
    %4 = vector.broadcast %3 : vector<1x32xf32> to vector<16x32xf32>
    %5 = arith.addf %2, %4 : vector<16x32xf32>
    %6 = arith.mulf %5, %5 : vector<16x32xf32>
    %c0_5 = arith.constant 0 : index
    %c0_6 = arith.constant 0 : index
    %7 = vector.load %arg4[%c0_5, %c0_6] : memref<32x32xf32, #tpu.memory_space<vmem>>, vector<32x32xf32>
    %cst_7 = arith.constant dense<0.000000e+00> : vector<16x32xf32>
    %8 = tpu.matmul %6, %7, %cst_7 {dimension_numbers = #tpu.dot_dimension_numbers<[1], [0], [0], [1], [0, 0, 1, 1], [], []>} : vector<16x32xf32>, vector<32x32xf32>, vector<16x32xf32> -> vector<16x32xf32>
    %c0_8 = arith.constant 0 : index
    %c0_9 = arith.constant 0 : index
    %9 = vector.load %arg5[%c0_8, %c0_9] : memref<1x32xf32, #tpu.memory_space<vmem>>, vector<1x32xf32>
    %10 = vector.broadcast %9 : vector<1x32xf32> to vector<16x32xf32>
    %11 = arith.addf %8, %10 : vector<16x32xf32>
    %12 = math.rsqrt %11 : vector<16x32xf32>
    %13 = arith.mulf %5, %12 : vector<16x32xf32>
    %c0_10 = arith.constant 0 : index
    %c0_11 = arith.constant 0 : index
    %14 = vector.load %arg6[%c0_10, %c0_11] : memref<16x32xf32, #tpu.memory_space<vmem>>, vector<16x32xf32>
    tpu.vector_store %arg6[%c0_10, %c0_11], %13 {strides = array<i32>} : memref<16x32xf32, #tpu.memory_space<vmem>>, vector<16x32xf32>,
    return
  }
  func.func @transform_0(%arg0: i32) -> (i32, i32) {
    %c0_i32 = arith.constant 0 : i32
    %c0_i32_0 = arith.constant 0 : i32
    return %arg0, %c0_i32 : i32, i32
  }
  func.func @transform_1(%arg0: i32) -> (i32, i32) {
    %c0_i32 = arith.constant 0 : i32
    %c0_i32_0 = arith.constant 0 : i32
    %c0_i32_1 = arith.constant 0 : i32
    return %c0_i32, %c0_i32_0 : i32, i32
  }
  func.func @transform_2(%arg0: i32) -> (i32, i32) {
    %c0_i32 = arith.constant 0 : i32
    %c0_i32_0 = arith.constant 0 : i32
    %c0_i32_1 = arith.constant 0 : i32
    return %c0_i32, %c0_i32_0 : i32, i32
  }
  func.func @transform_3(%arg0: i32) -> (i32, i32) {
    %c0_i32 = arith.constant 0 : i32
    %c0_i32_0 = arith.constant 0 : i32
    %c0_i32_1 = arith.constant 0 : i32
    return %c0_i32, %c0_i32_0 : i32, i32
  }
  func.func @transform_4(%arg0: i32) -> (i32, i32) {
    %c0_i32 = arith.constant 0 : i32
    %c0_i32_0 = arith.constant 0 : i32
    %c0_i32_1 = arith.constant 0 : i32
    return %c0_i32, %c0_i32_0 : i32, i32
  }
  func.func @transform_5(%arg0: i32) -> (i32, i32) {
    %c0_i32 = arith.constant 0 : i32
    %c0_i32_0 = arith.constant 0 : i32
    return %arg0, %c0_i32 : i32, i32
  }
}

module attributes {stable_mosaic.version = 11 : i64} {
  func.func @_matmul_bias_gdn_kernel(%arg0: i32, %arg1: memref<8x800xbf16, #tpu.memory_space<vmem>>, %arg2: memref<800x32xbf16, #tpu.memory_space<vmem>>, %arg3: memref<1x32xf32, #tpu.memory_space<vmem>>, %arg4: memref<32x32xf32, #tpu.memory_space<vmem>>, %arg5: memref<1x32xf32, #tpu.memory_space<vmem>>, %arg6: memref<8x32xf32, #tpu.memory_space<vmem>>) attributes {dimension_semantics = [#tpu.dimension_semantics<parallel>], iteration_bounds = array<i64: 1>, scalar_prefetch = 0 : i64, scratch_operands = 0 : i64, tpu.core_type = #tpu.core_type<tc>, window_params = [{transform_indices = @transform_0, window_bounds = array<i64: 8, 800>}, {pipeline_mode = #tpu.pipeline_mode<synchronous>, transform_indices = @transform_1, window_bounds = array<i64: 800, 32>}, {pipeline_mode = #tpu.pipeline_mode<synchronous>, transform_indices = @transform_2, window_bounds = array<i64: 1, 32>}, {pipeline_mode = #tpu.pipeline_mode<synchronous>, transform_indices = @transform_3, window_bounds = array<i64: 32, 32>}, {pipeline_mode = #tpu.pipeline_mode<synchronous>, transform_indices = @transform_4, window_bounds = array<i64: 1, 32>}, {transform_indices = @transform_5, window_bounds = array<i64: 8, 32>}]} {
    %c0 = arith.constant 0 : index
    %c0_0 = arith.constant 0 : index
    %0 = vector.load %arg1[%c0, %c0_0] : memref<8x800xbf16, #tpu.memory_space<vmem>>, vector<8x800xbf16>
    %c0_1 = arith.constant 0 : index
    %c0_2 = arith.constant 0 : index
    %1 = vector.load %arg2[%c0_1, %c0_2] : memref<800x32xbf16, #tpu.memory_space<vmem>>, vector<800x32xbf16>
    %cst = arith.constant dense<0.000000e+00> : vector<8x32xf32>
    %2 = tpu.matmul %0, %1, %cst {dimension_numbers = #tpu.dot_dimension_numbers<[1], [0], [0], [1], [0, 0, 1, 1], [], []>} : vector<8x800xbf16>, vector<800x32xbf16>, vector<8x32xf32> -> vector<8x32xf32>
    %c0_3 = arith.constant 0 : index
    %c0_4 = arith.constant 0 : index
    %3 = vector.load %arg3[%c0_3, %c0_4] : memref<1x32xf32, #tpu.memory_space<vmem>>, vector<1x32xf32>
    %4 = vector.broadcast %3 : vector<1x32xf32> to vector<8x32xf32>
    %5 = arith.addf %2, %4 : vector<8x32xf32>
    %6 = arith.mulf %5, %5 : vector<8x32xf32>
    %c0_5 = arith.constant 0 : index
    %c0_6 = arith.constant 0 : index
    %7 = vector.load %arg4[%c0_5, %c0_6] : memref<32x32xf32, #tpu.memory_space<vmem>>, vector<32x32xf32>
    %cst_7 = arith.constant dense<0.000000e+00> : vector<8x32xf32>
    %8 = tpu.matmul %6, %7, %cst_7 {dimension_numbers = #tpu.dot_dimension_numbers<[1], [0], [0], [1], [0, 0, 1, 1], [], []>} : vector<8x32xf32>, vector<32x32xf32>, vector<8x32xf32> -> vector<8x32xf32>
    %c0_8 = arith.constant 0 : index
    %c0_9 = arith.constant 0 : index
    %9 = vector.load %arg5[%c0_8, %c0_9] : memref<1x32xf32, #tpu.memory_space<vmem>>, vector<1x32xf32>
    %10 = vector.broadcast %9 : vector<1x32xf32> to vector<8x32xf32>
    %11 = arith.addf %8, %10 : vector<8x32xf32>
    %12 = math.rsqrt %11 : vector<8x32xf32>
    %13 = arith.mulf %5, %12 : vector<8x32xf32>
    %c0_10 = arith.constant 0 : index
    %c0_11 = arith.constant 0 : index
    %14 = vector.load %arg6[%c0_10, %c0_11] : memref<8x32xf32, #tpu.memory_space<vmem>>, vector<8x32xf32>
    tpu.vector_store %arg6[%c0_10, %c0_11], %13 {strides = array<i32>} : memref<8x32xf32, #tpu.memory_space<vmem>>, vector<8x32xf32>,
    return
  }
  func.func @transform_0(%arg0: i32) -> (i32, i32) {
    %c0_i32 = arith.constant 0 : i32
    %c0_i32_0 = arith.constant 0 : i32
    return %arg0, %c0_i32 : i32, i32
  }
  func.func @transform_1(%arg0: i32) -> (i32, i32) {
    %c0_i32 = arith.constant 0 : i32
    %c0_i32_0 = arith.constant 0 : i32
    %c0_i32_1 = arith.constant 0 : i32
    return %c0_i32, %c0_i32_0 : i32, i32
  }
  func.func @transform_2(%arg0: i32) -> (i32, i32) {
    %c0_i32 = arith.constant 0 : i32
    %c0_i32_0 = arith.constant 0 : i32
    %c0_i32_1 = arith.constant 0 : i32
    return %c0_i32, %c0_i32_0 : i32, i32
  }
  func.func @transform_3(%arg0: i32) -> (i32, i32) {
    %c0_i32 = arith.constant 0 : i32
    %c0_i32_0 = arith.constant 0 : i32
    %c0_i32_1 = arith.constant 0 : i32
    return %c0_i32, %c0_i32_0 : i32, i32
  }
  func.func @transform_4(%arg0: i32) -> (i32, i32) {
    %c0_i32 = arith.constant 0 : i32
    %c0_i32_0 = arith.constant 0 : i32
    %c0_i32_1 = arith.constant 0 : i32
    return %c0_i32, %c0_i32_0 : i32, i32
  }
  func.func @transform_5(%arg0: i32) -> (i32, i32) {
    %c0_i32 = arith.constant 0 : i32
    %c0_i32_0 = arith.constant 0 : i32
    return %arg0, %c0_i32 : i32, i32
  }
}

module attributes {stable_mosaic.version = 11 : i64} {
  func.func @_matmul_bias_kernel(%arg0: i32, %arg1: memref<8x800xbf16, #tpu.memory_space<vmem>>, %arg2: memref<800x48xbf16, #tpu.memory_space<vmem>>, %arg3: memref<1x48xf32, #tpu.memory_space<vmem>>, %arg4: memref<8x48xf32, #tpu.memory_space<vmem>>) attributes {dimension_semantics = [#tpu.dimension_semantics<parallel>], iteration_bounds = array<i64: 1>, scalar_prefetch = 0 : i64, scratch_operands = 0 : i64, tpu.core_type = #tpu.core_type<tc>, window_params = [{transform_indices = @transform_0, window_bounds = array<i64: 8, 800>}, {pipeline_mode = #tpu.pipeline_mode<synchronous>, transform_indices = @transform_1, window_bounds = array<i64: 800, 48>}, {pipeline_mode = #tpu.pipeline_mode<synchronous>, transform_indices = @transform_2, window_bounds = array<i64: 1, 48>}, {transform_indices = @transform_3, window_bounds = array<i64: 8, 48>}]} {
    %c0 = arith.constant 0 : index
    %c0_0 = arith.constant 0 : index
    %0 = vector.load %arg1[%c0, %c0_0] : memref<8x800xbf16, #tpu.memory_space<vmem>>, vector<8x800xbf16>
    %c0_1 = arith.constant 0 : index
    %c0_2 = arith.constant 0 : index
    %1 = vector.load %arg2[%c0_1, %c0_2] : memref<800x48xbf16, #tpu.memory_space<vmem>>, vector<800x48xbf16>
    %cst = arith.constant dense<0.000000e+00> : vector<8x48xf32>
    %2 = tpu.matmul %0, %1, %cst {dimension_numbers = #tpu.dot_dimension_numbers<[1], [0], [0], [1], [0, 0, 1, 1], [], []>} : vector<8x800xbf16>, vector<800x48xbf16>, vector<8x48xf32> -> vector<8x48xf32>
    %c0_3 = arith.constant 0 : index
    %c0_4 = arith.constant 0 : index
    %3 = vector.load %arg3[%c0_3, %c0_4] : memref<1x48xf32, #tpu.memory_space<vmem>>, vector<1x48xf32>
    %4 = vector.broadcast %3 : vector<1x48xf32> to vector<8x48xf32>
    %5 = arith.addf %2, %4 : vector<8x48xf32>
    %c0_5 = arith.constant 0 : index
    %c0_6 = arith.constant 0 : index
    %6 = vector.load %arg4[%c0_5, %c0_6] : memref<8x48xf32, #tpu.memory_space<vmem>>, vector<8x48xf32>
    tpu.vector_store %arg4[%c0_5, %c0_6], %5 {strides = array<i32>} : memref<8x48xf32, #tpu.memory_space<vmem>>, vector<8x48xf32>,
    return
  }
  func.func @transform_0(%arg0: i32) -> (i32, i32) {
    %c0_i32 = arith.constant 0 : i32
    %c0_i32_0 = arith.constant 0 : i32
    return %arg0, %c0_i32 : i32, i32
  }
  func.func @transform_1(%arg0: i32) -> (i32, i32) {
    %c0_i32 = arith.constant 0 : i32
    %c0_i32_0 = arith.constant 0 : i32
    %c0_i32_1 = arith.constant 0 : i32
    return %c0_i32, %c0_i32_0 : i32, i32
  }
  func.func @transform_2(%arg0: i32) -> (i32, i32) {
    %c0_i32 = arith.constant 0 : i32
    %c0_i32_0 = arith.constant 0 : i32
    %c0_i32_1 = arith.constant 0 : i32
    return %c0_i32, %c0_i32_0 : i32, i32
  }
  func.func @transform_3(%arg0: i32) -> (i32, i32) {
    %c0_i32 = arith.constant 0 : i32
    %c0_i32_0 = arith.constant 0 : i32
    return %arg0, %c0_i32 : i32, i32
  }
}

module attributes {stable_mosaic.version = 11 : i64} {
  func.func @_matmul_bias_gdn_kernel(%arg0: i32, %arg1: memref<8x432xbf16, #tpu.memory_space<vmem>>, %arg2: memref<432x128xbf16, #tpu.memory_space<vmem>>, %arg3: memref<1x128xf32, #tpu.memory_space<vmem>>, %arg4: memref<128x128xf32, #tpu.memory_space<vmem>>, %arg5: memref<1x128xf32, #tpu.memory_space<vmem>>, %arg6: memref<8x128xf32, #tpu.memory_space<vmem>>) attributes {dimension_semantics = [#tpu.dimension_semantics<parallel>], iteration_bounds = array<i64: 1>, scalar_prefetch = 0 : i64, scratch_operands = 0 : i64, tpu.core_type = #tpu.core_type<tc>, window_params = [{transform_indices = @transform_0, window_bounds = array<i64: 8, 432>}, {pipeline_mode = #tpu.pipeline_mode<synchronous>, transform_indices = @transform_1, window_bounds = array<i64: 432, 128>}, {pipeline_mode = #tpu.pipeline_mode<synchronous>, transform_indices = @transform_2, window_bounds = array<i64: 1, 128>}, {pipeline_mode = #tpu.pipeline_mode<synchronous>, transform_indices = @transform_3, window_bounds = array<i64: 128, 128>}, {pipeline_mode = #tpu.pipeline_mode<synchronous>, transform_indices = @transform_4, window_bounds = array<i64: 1, 128>}, {transform_indices = @transform_5, window_bounds = array<i64: 8, 128>}]} {
    %c0 = arith.constant 0 : index
    %c0_0 = arith.constant 0 : index
    %0 = vector.load %arg1[%c0, %c0_0] : memref<8x432xbf16, #tpu.memory_space<vmem>>, vector<8x432xbf16>
    %c0_1 = arith.constant 0 : index
    %c0_2 = arith.constant 0 : index
    %1 = vector.load %arg2[%c0_1, %c0_2] : memref<432x128xbf16, #tpu.memory_space<vmem>>, vector<432x128xbf16>
    %cst = arith.constant dense<0.000000e+00> : vector<8x128xf32>
    %2 = tpu.matmul %0, %1, %cst {dimension_numbers = #tpu.dot_dimension_numbers<[1], [0], [0], [1], [0, 0, 1, 1], [], []>} : vector<8x432xbf16>, vector<432x128xbf16>, vector<8x128xf32> -> vector<8x128xf32>
    %c0_3 = arith.constant 0 : index
    %c0_4 = arith.constant 0 : index
    %3 = vector.load %arg3[%c0_3, %c0_4] : memref<1x128xf32, #tpu.memory_space<vmem>>, vector<1x128xf32>
    %4 = vector.broadcast %3 : vector<1x128xf32> to vector<8x128xf32>
    %5 = arith.addf %2, %4 : vector<8x128xf32>
    %6 = arith.mulf %5, %5 : vector<8x128xf32>
    %c0_5 = arith.constant 0 : index
    %c0_6 = arith.constant 0 : index
    %7 = vector.load %arg4[%c0_5, %c0_6] : memref<128x128xf32, #tpu.memory_space<vmem>>, vector<128x128xf32>
    %cst_7 = arith.constant dense<0.000000e+00> : vector<8x128xf32>
    %8 = tpu.matmul %6, %7, %cst_7 {dimension_numbers = #tpu.dot_dimension_numbers<[1], [0], [0], [1], [0, 0, 1, 1], [], []>} : vector<8x128xf32>, vector<128x128xf32>, vector<8x128xf32> -> vector<8x128xf32>
    %c0_8 = arith.constant 0 : index
    %c0_9 = arith.constant 0 : index
    %9 = vector.load %arg5[%c0_8, %c0_9] : memref<1x128xf32, #tpu.memory_space<vmem>>, vector<1x128xf32>
    %10 = vector.broadcast %9 : vector<1x128xf32> to vector<8x128xf32>
    %11 = arith.addf %8, %10 : vector<8x128xf32>
    %12 = math.sqrt %11 : vector<8x128xf32>
    %13 = arith.mulf %5, %12 : vector<8x128xf32>
    %c0_10 = arith.constant 0 : index
    %c0_11 = arith.constant 0 : index
    %14 = vector.load %arg6[%c0_10, %c0_11] : memref<8x128xf32, #tpu.memory_space<vmem>>, vector<8x128xf32>
    tpu.vector_store %arg6[%c0_10, %c0_11], %13 {strides = array<i32>} : memref<8x128xf32, #tpu.memory_space<vmem>>, vector<8x128xf32>,
    return
  }
  func.func @transform_0(%arg0: i32) -> (i32, i32) {
    %c0_i32 = arith.constant 0 : i32
    %c0_i32_0 = arith.constant 0 : i32
    return %arg0, %c0_i32 : i32, i32
  }
  func.func @transform_1(%arg0: i32) -> (i32, i32) {
    %c0_i32 = arith.constant 0 : i32
    %c0_i32_0 = arith.constant 0 : i32
    %c0_i32_1 = arith.constant 0 : i32
    return %c0_i32, %c0_i32_0 : i32, i32
  }
  func.func @transform_2(%arg0: i32) -> (i32, i32) {
    %c0_i32 = arith.constant 0 : i32
    %c0_i32_0 = arith.constant 0 : i32
    %c0_i32_1 = arith.constant 0 : i32
    return %c0_i32, %c0_i32_0 : i32, i32
  }
  func.func @transform_3(%arg0: i32) -> (i32, i32) {
    %c0_i32 = arith.constant 0 : i32
    %c0_i32_0 = arith.constant 0 : i32
    %c0_i32_1 = arith.constant 0 : i32
    return %c0_i32, %c0_i32_0 : i32, i32
  }
  func.func @transform_4(%arg0: i32) -> (i32, i32) {
    %c0_i32 = arith.constant 0 : i32
    %c0_i32_0 = arith.constant 0 : i32
    %c0_i32_1 = arith.constant 0 : i32
    return %c0_i32, %c0_i32_0 : i32, i32
  }
  func.func @transform_5(%arg0: i32) -> (i32, i32) {
    %c0_i32 = arith.constant 0 : i32
    %c0_i32_0 = arith.constant 0 : i32
    return %arg0, %c0_i32 : i32, i32
  }
}

module attributes {stable_mosaic.version = 11 : i64} {
  func.func @_matmul_bias_gdn_kernel(%arg0: i32, %arg1: memref<8x288xbf16, #tpu.memory_space<vmem>>, %arg2: memref<288x128xbf16, #tpu.memory_space<vmem>>, %arg3: memref<1x128xf32, #tpu.memory_space<vmem>>, %arg4: memref<128x128xf32, #tpu.memory_space<vmem>>, %arg5: memref<1x128xf32, #tpu.memory_space<vmem>>, %arg6: memref<8x128xf32, #tpu.memory_space<vmem>>) attributes {dimension_semantics = [#tpu.dimension_semantics<parallel>], iteration_bounds = array<i64: 1>, scalar_prefetch = 0 : i64, scratch_operands = 0 : i64, tpu.core_type = #tpu.core_type<tc>, window_params = [{transform_indices = @transform_0, window_bounds = array<i64: 8, 288>}, {pipeline_mode = #tpu.pipeline_mode<synchronous>, transform_indices = @transform_1, window_bounds = array<i64: 288, 128>}, {pipeline_mode = #tpu.pipeline_mode<synchronous>, transform_indices = @transform_2, window_bounds = array<i64: 1, 128>}, {pipeline_mode = #tpu.pipeline_mode<synchronous>, transform_indices = @transform_3, window_bounds = array<i64: 128, 128>}, {pipeline_mode = #tpu.pipeline_mode<synchronous>, transform_indices = @transform_4, window_bounds = array<i64: 1, 128>}, {transform_indices = @transform_5, window_bounds = array<i64: 8, 128>}]} {
    %c0 = arith.constant 0 : index
    %c0_0 = arith.constant 0 : index
    %0 = vector.load %arg1[%c0, %c0_0] : memref<8x288xbf16, #tpu.memory_space<vmem>>, vector<8x288xbf16>
    %c0_1 = arith.constant 0 : index
    %c0_2 = arith.constant 0 : index
    %1 = vector.load %arg2[%c0_1, %c0_2] : memref<288x128xbf16, #tpu.memory_space<vmem>>, vector<288x128xbf16>
    %cst = arith.constant dense<0.000000e+00> : vector<8x128xf32>
    %2 = tpu.matmul %0, %1, %cst {dimension_numbers = #tpu.dot_dimension_numbers<[1], [0], [0], [1], [0, 0, 1, 1], [], []>} : vector<8x288xbf16>, vector<288x128xbf16>, vector<8x128xf32> -> vector<8x128xf32>
    %c0_3 = arith.constant 0 : index
    %c0_4 = arith.constant 0 : index
    %3 = vector.load %arg3[%c0_3, %c0_4] : memref<1x128xf32, #tpu.memory_space<vmem>>, vector<1x128xf32>
    %4 = vector.broadcast %3 : vector<1x128xf32> to vector<8x128xf32>
    %5 = arith.addf %2, %4 : vector<8x128xf32>
    %6 = arith.mulf %5, %5 : vector<8x128xf32>
    %c0_5 = arith.constant 0 : index
    %c0_6 = arith.constant 0 : index
    %7 = vector.load %arg4[%c0_5, %c0_6] : memref<128x128xf32, #tpu.memory_space<vmem>>, vector<128x128xf32>
    %cst_7 = arith.constant dense<0.000000e+00> : vector<8x128xf32>
    %8 = tpu.matmul %6, %7, %cst_7 {dimension_numbers = #tpu.dot_dimension_numbers<[1], [0], [0], [1], [0, 0, 1, 1], [], []>} : vector<8x128xf32>, vector<128x128xf32>, vector<8x128xf32> -> vector<8x128xf32>
    %c0_8 = arith.constant 0 : index
    %c0_9 = arith.constant 0 : index
    %9 = vector.load %arg5[%c0_8, %c0_9] : memref<1x128xf32, #tpu.memory_space<vmem>>, vector<1x128xf32>
    %10 = vector.broadcast %9 : vector<1x128xf32> to vector<8x128xf32>
    %11 = arith.addf %8, %10 : vector<8x128xf32>
    %12 = math.sqrt %11 : vector<8x128xf32>
    %13 = arith.mulf %5, %12 : vector<8x128xf32>
    %c0_10 = arith.constant 0 : index
    %c0_11 = arith.constant 0 : index
    %14 = vector.load %arg6[%c0_10, %c0_11] : memref<8x128xf32, #tpu.memory_space<vmem>>, vector<8x128xf32>
    tpu.vector_store %arg6[%c0_10, %c0_11], %13 {strides = array<i32>} : memref<8x128xf32, #tpu.memory_space<vmem>>, vector<8x128xf32>,
    return
  }
  func.func @transform_0(%arg0: i32) -> (i32, i32) {
    %c0_i32 = arith.constant 0 : i32
    %c0_i32_0 = arith.constant 0 : i32
    return %arg0, %c0_i32 : i32, i32
  }
  func.func @transform_1(%arg0: i32) -> (i32, i32) {
    %c0_i32 = arith.constant 0 : i32
    %c0_i32_0 = arith.constant 0 : i32
    %c0_i32_1 = arith.constant 0 : i32
    return %c0_i32, %c0_i32_0 : i32, i32
  }
  func.func @transform_2(%arg0: i32) -> (i32, i32) {
    %c0_i32 = arith.constant 0 : i32
    %c0_i32_0 = arith.constant 0 : i32
    %c0_i32_1 = arith.constant 0 : i32
    return %c0_i32, %c0_i32_0 : i32, i32
  }
  func.func @transform_3(%arg0: i32) -> (i32, i32) {
    %c0_i32 = arith.constant 0 : i32
    %c0_i32_0 = arith.constant 0 : i32
    %c0_i32_1 = arith.constant 0 : i32
    return %c0_i32, %c0_i32_0 : i32, i32
  }
  func.func @transform_4(%arg0: i32) -> (i32, i32) {
    %c0_i32 = arith.constant 0 : i32
    %c0_i32_0 = arith.constant 0 : i32
    %c0_i32_1 = arith.constant 0 : i32
    return %c0_i32, %c0_i32_0 : i32, i32
  }
  func.func @transform_5(%arg0: i32) -> (i32, i32) {
    %c0_i32 = arith.constant 0 : i32
    %c0_i32_0 = arith.constant 0 : i32
    return %arg0, %c0_i32 : i32, i32
  }
}

module attributes {stable_mosaic.version = 11 : i64} {
  func.func @_matmul_bias_gdn_kernel(%arg0: i32, %arg1: memref<16x288xbf16, #tpu.memory_space<vmem>>, %arg2: memref<288x128xbf16, #tpu.memory_space<vmem>>, %arg3: memref<1x128xf32, #tpu.memory_space<vmem>>, %arg4: memref<128x128xf32, #tpu.memory_space<vmem>>, %arg5: memref<1x128xf32, #tpu.memory_space<vmem>>, %arg6: memref<16x128xf32, #tpu.memory_space<vmem>>) attributes {dimension_semantics = [#tpu.dimension_semantics<parallel>], iteration_bounds = array<i64: 2>, scalar_prefetch = 0 : i64, scratch_operands = 0 : i64, tpu.core_type = #tpu.core_type<tc>, window_params = [{transform_indices = @transform_0, window_bounds = array<i64: 16, 288>}, {pipeline_mode = #tpu.pipeline_mode<synchronous>, transform_indices = @transform_1, window_bounds = array<i64: 288, 128>}, {pipeline_mode = #tpu.pipeline_mode<synchronous>, transform_indices = @transform_2, window_bounds = array<i64: 1, 128>}, {pipeline_mode = #tpu.pipeline_mode<synchronous>, transform_indices = @transform_3, window_bounds = array<i64: 128, 128>}, {pipeline_mode = #tpu.pipeline_mode<synchronous>, transform_indices = @transform_4, window_bounds = array<i64: 1, 128>}, {transform_indices = @transform_5, window_bounds = array<i64: 16, 128>}]} {
    %c0 = arith.constant 0 : index
    %c0_0 = arith.constant 0 : index
    %0 = vector.load %arg1[%c0, %c0_0] : memref<16x288xbf16, #tpu.memory_space<vmem>>, vector<16x288xbf16>
    %c0_1 = arith.constant 0 : index
    %c0_2 = arith.constant 0 : index
    %1 = vector.load %arg2[%c0_1, %c0_2] : memref<288x128xbf16, #tpu.memory_space<vmem>>, vector<288x128xbf16>
    %cst = arith.constant dense<0.000000e+00> : vector<16x128xf32>
    %2 = tpu.matmul %0, %1, %cst {dimension_numbers = #tpu.dot_dimension_numbers<[1], [0], [0], [1], [0, 0, 1, 1], [], []>} : vector<16x288xbf16>, vector<288x128xbf16>, vector<16x128xf32> -> vector<16x128xf32>
    %c0_3 = arith.constant 0 : index
    %c0_4 = arith.constant 0 : index
    %3 = vector.load %arg3[%c0_3, %c0_4] : memref<1x128xf32, #tpu.memory_space<vmem>>, vector<1x128xf32>
    %4 = vector.broadcast %3 : vector<1x128xf32> to vector<16x128xf32>
    %5 = arith.addf %2, %4 : vector<16x128xf32>
    %6 = arith.mulf %5, %5 : vector<16x128xf32>
    %c0_5 = arith.constant 0 : index
    %c0_6 = arith.constant 0 : index
    %7 = vector.load %arg4[%c0_5, %c0_6] : memref<128x128xf32, #tpu.memory_space<vmem>>, vector<128x128xf32>
    %cst_7 = arith.constant dense<0.000000e+00> : vector<16x128xf32>
    %8 = tpu.matmul %6, %7, %cst_7 {dimension_numbers = #tpu.dot_dimension_numbers<[1], [0], [0], [1], [0, 0, 1, 1], [], []>} : vector<16x128xf32>, vector<128x128xf32>, vector<16x128xf32> -> vector<16x128xf32>
    %c0_8 = arith.constant 0 : index
    %c0_9 = arith.constant 0 : index
    %9 = vector.load %arg5[%c0_8, %c0_9] : memref<1x128xf32, #tpu.memory_space<vmem>>, vector<1x128xf32>
    %10 = vector.broadcast %9 : vector<1x128xf32> to vector<16x128xf32>
    %11 = arith.addf %8, %10 : vector<16x128xf32>
    %12 = math.sqrt %11 : vector<16x128xf32>
    %13 = arith.mulf %5, %12 : vector<16x128xf32>
    %c0_10 = arith.constant 0 : index
    %c0_11 = arith.constant 0 : index
    %14 = vector.load %arg6[%c0_10, %c0_11] : memref<16x128xf32, #tpu.memory_space<vmem>>, vector<16x128xf32>
    tpu.vector_store %arg6[%c0_10, %c0_11], %13 {strides = array<i32>} : memref<16x128xf32, #tpu.memory_space<vmem>>, vector<16x128xf32>,
    return
  }
  func.func @transform_0(%arg0: i32) -> (i32, i32) {
    %c0_i32 = arith.constant 0 : i32
    %c0_i32_0 = arith.constant 0 : i32
    return %arg0, %c0_i32 : i32, i32
  }
  func.func @transform_1(%arg0: i32) -> (i32, i32) {
    %c0_i32 = arith.constant 0 : i32
    %c0_i32_0 = arith.constant 0 : i32
    %c0_i32_1 = arith.constant 0 : i32
    return %c0_i32, %c0_i32_0 : i32, i32
  }
  func.func @transform_2(%arg0: i32) -> (i32, i32) {
    %c0_i32 = arith.constant 0 : i32
    %c0_i32_0 = arith.constant 0 : i32
    %c0_i32_1 = arith.constant 0 : i32
    return %c0_i32, %c0_i32_0 : i32, i32
  }
  func.func @transform_3(%arg0: i32) -> (i32, i32) {
    %c0_i32 = arith.constant 0 : i32
    %c0_i32_0 = arith.constant 0 : i32
    %c0_i32_1 = arith.constant 0 : i32
    return %c0_i32, %c0_i32_0 : i32, i32
  }
  func.func @transform_4(%arg0: i32) -> (i32, i32) {
    %c0_i32 = arith.constant 0 : i32
    %c0_i32_0 = arith.constant 0 : i32
    %c0_i32_1 = arith.constant 0 : i32
    return %c0_i32, %c0_i32_0 : i32, i32
  }
  func.func @transform_5(%arg0: i32) -> (i32, i32) {
    %c0_i32 = arith.constant 0 : i32
    %c0_i32_0 = arith.constant 0 : i32
    return %arg0, %c0_i32 : i32, i32
  }
}

module attributes {stable_mosaic.version = 11 : i64} {
  func.func @_matmul_bias_kernel(%arg0: i32, %arg1: memref<64x288xbf16, #tpu.memory_space<vmem>>, %arg2: memref<288x12xbf16, #tpu.memory_space<vmem>>, %arg3: memref<1x12xf32, #tpu.memory_space<vmem>>, %arg4: memref<64x12xf32, #tpu.memory_space<vmem>>) attributes {dimension_semantics = [#tpu.dimension_semantics<parallel>], iteration_bounds = array<i64: 2>, scalar_prefetch = 0 : i64, scratch_operands = 0 : i64, tpu.core_type = #tpu.core_type<tc>, window_params = [{transform_indices = @transform_0, window_bounds = array<i64: 64, 288>}, {pipeline_mode = #tpu.pipeline_mode<synchronous>, transform_indices = @transform_1, window_bounds = array<i64: 288, 12>}, {pipeline_mode = #tpu.pipeline_mode<synchronous>, transform_indices = @transform_2, window_bounds = array<i64: 1, 12>}, {transform_indices = @transform_3, window_bounds = array<i64: 64, 12>}]} {
    %c0 = arith.constant 0 : index
    %c0_0 = arith.constant 0 : index
    %0 = vector.load %arg1[%c0, %c0_0] : memref<64x288xbf16, #tpu.memory_space<vmem>>, vector<64x288xbf16>
    %c0_1 = arith.constant 0 : index
    %c0_2 = arith.constant 0 : index
    %1 = vector.load %arg2[%c0_1, %c0_2] : memref<288x12xbf16, #tpu.memory_space<vmem>>, vector<288x12xbf16>
    %cst = arith.constant dense<0.000000e+00> : vector<64x12xf32>
    %2 = tpu.matmul %0, %1, %cst {dimension_numbers = #tpu.dot_dimension_numbers<[1], [0], [0], [1], [0, 0, 1, 1], [], []>} : vector<64x288xbf16>, vector<288x12xbf16>, vector<64x12xf32> -> vector<64x12xf32>
    %c0_3 = arith.constant 0 : index
    %c0_4 = arith.constant 0 : index
    %3 = vector.load %arg3[%c0_3, %c0_4] : memref<1x12xf32, #tpu.memory_space<vmem>>, vector<1x12xf32>
    %4 = vector.broadcast %3 : vector<1x12xf32> to vector<64x12xf32>
    %5 = arith.addf %2, %4 : vector<64x12xf32>
    %c0_5 = arith.constant 0 : index
    %c0_6 = arith.constant 0 : index
    %6 = vector.load %arg4[%c0_5, %c0_6] : memref<64x12xf32, #tpu.memory_space<vmem>>, vector<64x12xf32>
    tpu.vector_store %arg4[%c0_5, %c0_6], %5 {strides = array<i32>} : memref<64x12xf32, #tpu.memory_space<vmem>>, vector<64x12xf32>,
    return
  }
  func.func @transform_0(%arg0: i32) -> (i32, i32) {
    %c0_i32 = arith.constant 0 : i32
    %c0_i32_0 = arith.constant 0 : i32
    return %arg0, %c0_i32 : i32, i32
  }
  func.func @transform_1(%arg0: i32) -> (i32, i32) {
    %c0_i32 = arith.constant 0 : i32
    %c0_i32_0 = arith.constant 0 : i32
    %c0_i32_1 = arith.constant 0 : i32
    return %c0_i32, %c0_i32_0 : i32, i32
  }
  func.func @transform_2(%arg0: i32) -> (i32, i32) {
    %c0_i32 = arith.constant 0 : i32
    %c0_i32_0 = arith.constant 0 : i32
    %c0_i32_1 = arith.constant 0 : i32
    return %c0_i32, %c0_i32_0 : i32, i32
  }
  func.func @transform_3(%arg0: i32) -> (i32, i32) {
    %c0_i32 = arith.constant 0 : i32
    %c0_i32_0 = arith.constant 0 : i32
    return %arg0, %c0_i32 : i32, i32
  }
}

</mosaic_0001>

<llo_original>
// kernel: edic_forward.8
$region0: #{edic_forward.8}
  #allocation0 [shape = 'u32[]', space=smem, size = 0x4, offset = 0x4, fixed_abs, tag = 'smem constant byte address 0x4 - core index']
  #allocation1 [shape = 'u32[144,128]{1,0:T(1,128)}', space=vmem, size = 0x12000, scoped, tag = 'internal scratch']
  %s0 = inlined_call_operand.vmem [shape: bf16[128,75], index: 0, kind: input, shape index: {}]
  %s1 = inlined_call_operand.vmem [shape: bf16[75,32], index: 1, kind: input, shape index: {}]
  %s2 = inlined_call_operand.vmem [shape: f32[1,32], index: 2, kind: input, shape index: {}]
  %s3 = inlined_call_operand.vmem [shape: f32[32,32], index: 3, kind: input, shape index: {}]
  %s4 = inlined_call_operand.vmem [shape: f32[1,32], index: 4, kind: input, shape index: {}]
  %s5 = inlined_call_operand.vmem [shape: f32[128,32], index: 5, kind: output, shape index: {}]
  %s6 = sld [smem:[#allocation0]]
  $region53: #{edic_forward.8} parent=0
    _
  %s8 = ssub.s32 1, %s6
  %s9 = scalar_select 0, %s8, %s6
  loop: start=0, step=1, limit=4
  $region2: #{edic_forward.8} parent=0 // loop_pre_header
    _
  $region3: #{edic_forward.8} parent=0 // loop_header
    %s11 = sphi 0, %s15
    %p12 = scmp.ge.s32.totalorder %s11, 4
    %s21 = sphi 0, %s23
    %s24 = sphi 0, %s21
    %s25 = sphi 0, %s24
    %s41 = sphi 0, %s25
    %s45 = sphi 0, %s45
    %s47 = sphi 0, %s45
    %s48 = sphi 0, %s47
    %s62 = sphi 0, %s48
    %s66 = sphi 0, %s66
    %s68 = sphi 0, %s66
    %s69 = sphi 0, %s68
    %s83 = sphi 0, %s69
    %s87 = sphi 0, %s87
    %s89 = sphi 0, %s87
    %s90 = sphi 0, %s89
    %s104 = sphi 0, %s90
    %s108 = sphi 0, %s108
    %s110 = sphi 0, %s108
    %s111 = sphi 0, %s110
    %s125 = sphi 0, %s111
    %s131 = sphi 0, %s133
    %s134 = sphi 0, %s131
    %s135 = sphi 0, %s134
    %s151 = sphi 0, %s135
  $region4: #{edic_forward.8} parent=0 // loop_header_branch
    %14 = sbr.rel (%p12) target = $region8
  $region5: #{edic_forward.8} parent=0 // loop_body
    %s16 = ssub.s32 %s11, 1
    %s17 = ssub.s32 %s11, 2
    %s18 = sadd.s32 %s11, 1
    %s19 = ssub.s32 %s11, %s18
    %p20 = scmp.eq.s32.totalorder %s19, 0
    %s22 = sadd.s32 %s21, 1
    %s23 = scalar_select %p20, %s21, %s22
    %p26 = pneg %p20
    %p27 = scmp.eq.s32.totalorder %s11, 1
    %p28 = por %p26, %p27
    %p29 = scmp.ne.s32.totalorder %s21, %s24
    %p30 = scmp.eq.s32.totalorder %s11, 0
    %p31 = por %p29, %p30
    %p32 = scmp.ne.s32.totalorder %s21, %s24
    %p33 = scmp.eq.s32.totalorder %s16, 1
    %p34 = por %p32, %p33
    %p35 = scmp.ne.s32.totalorder %s24, %s25
    %p36 = scmp.eq.s32.totalorder %s16, 0
    %p37 = por %p35, %p36
    %p38 = scmp.ne.s32.totalorder %s24, %s25
    %p39 = scmp.eq.s32.totalorder %s17, 1
    %p40 = por %p38, %p39
    %p42 = scmp.ne.s32.totalorder %s25, %s41
    %p43 = scmp.eq.s32.totalorder %s17, 0
    %p44 = por %p42, %p43
    %s46 = sadd.s32 %s45, 1
    %p49 = scmp.eq.s32.totalorder %s11, 1
    %p50 = scmp.ne.s32.totalorder %s45, %s47
    %p51 = scmp.eq.s32.totalorder %s11, 0
    %p52 = por %p50, %p51
    %p53 = scmp.ne.s32.totalorder %s45, %s47
    %p54 = scmp.eq.s32.totalorder %s16, 1
    %p55 = por %p53, %p54
    %p56 = scmp.ne.s32.totalorder %s47, %s48
    %p57 = scmp.eq.s32.totalorder %s16, 0
    %p58 = por %p56, %p57
    %p59 = scmp.ne.s32.totalorder %s47, %s48
    %p60 = scmp.eq.s32.totalorder %s17, 1
    %p61 = por %p59, %p60
    %p63 = scmp.ne.s32.totalorder %s48, %s62
    %p64 = scmp.eq.s32.totalorder %s17, 0
    %p65 = por %p63, %p64
    %s67 = sadd.s32 %s66, 1
    %p70 = scmp.eq.s32.totalorder %s11, 1
    %p71 = scmp.ne.s32.totalorder %s66, %s68
    %p72 = scmp.eq.s32.totalorder %s11, 0
    %p73 = por %p71, %p72
    %p74 = scmp.ne.s32.totalorder %s66, %s68
    %p75 = scmp.eq.s32.totalorder %s16, 1
    %p76 = por %p74, %p75
    %p77 = scmp.ne.s32.totalorder %s68, %s69
    %p78 = scmp.eq.s32.totalorder %s16, 0
    %p79 = por %p77, %p78
    %p80 = scmp.ne.s32.totalorder %s68, %s69
    %p81 = scmp.eq.s32.totalorder %s17, 1
    %p82 = por %p80, %p81
    %p84 = scmp.ne.s32.totalorder %s69, %s83
    %p85 = scmp.eq.s32.totalorder %s17, 0
    %p86 = por %p84, %p85
    %s88 = sadd.s32 %s87, 1
    %p91 = scmp.eq.s32.totalorder %s11, 1
    %p92 = scmp.ne.s32.totalorder %s87, %s89
    %p93 = scmp.eq.s32.totalorder %s11, 0
    %p94 = por %p92, %p93
    %p95 = scmp.ne.s32.totalorder %s87, %s89
    %p96 = scmp.eq.s32.totalorder %s16, 1
    %p97 = por %p95, %p96
    %p98 = scmp.ne.s32.totalorder %s89, %s90
    %p99 = scmp.eq.s32.totalorder %s16, 0
    %p100 = por %p98, %p99
    %p101 = scmp.ne.s32.totalorder %s89, %s90
    %p102 = scmp.eq.s32.totalorder %s17, 1
    %p103 = por %p101, %p102
    %p105 = scmp.ne.s32.totalorder %s90, %s104
    %p106 = scmp.eq.s32.totalorder %s17, 0
    %p107 = por %p105, %p106
    %s109 = sadd.s32 %s108, 1
    %p112 = scmp.eq.s32.totalorder %s11, 1
    %p113 = scmp.ne.s32.totalorder %s108, %s110
    %p114 = scmp.eq.s32.totalorder %s11, 0
    %p115 = por %p113, %p114
    %p116 = scmp.ne.s32.totalorder %s108, %s110
    %p117 = scmp.eq.s32.totalorder %s16, 1
    %p118 = por %p116, %p117
    %p119 = scmp.ne.s32.totalorder %s110, %s111
    %p120 = scmp.eq.s32.totalorder %s16, 0
    %p121 = por %p119, %p120
    %p122 = scmp.ne.s32.totalorder %s110, %s111
    %p123 = scmp.eq.s32.totalorder %s17, 1
    %p124 = por %p122, %p123
    %p126 = scmp.ne.s32.totalorder %s111, %s125
    %p127 = scmp.eq.s32.totalorder %s17, 0
    %p128 = por %p126, %p127
    %s129 = ssub.s32 %s11, %s18
    %p130 = scmp.eq.s32.totalorder %s129, 0
    %s132 = sadd.s32 %s131, 1
    %s133 = scalar_select %p130, %s131, %s132
    %p136 = pneg %p130
    %p137 = scmp.eq.s32.totalorder %s11, 1
    %p138 = por %p136, %p137
    %p139 = scmp.ne.s32.totalorder %s131, %s134
    %p140 = scmp.eq.s32.totalorder %s11, 0
    %p141 = por %p139, %p140
    %p142 = scmp.ne.s32.totalorder %s131, %s134
    %p143 = scmp.eq.s32.totalorder %s16, 1
    %p144 = por %p142, %p143
    %p145 = scmp.ne.s32.totalorder %s134, %s135
    %p146 = scmp.eq.s32.totalorder %s16, 0
    %p147 = por %p145, %p146
    %p148 = scmp.ne.s32.totalorder %s134, %s135
    %p149 = scmp.eq.s32.totalorder %s17, 1
    %p150 = por %p148, %p149
    %p152 = scmp.ne.s32.totalorder %s135, %s151
    %p153 = scmp.eq.s32.totalorder %s17, 0
    %p154 = por %p152, %p153
    %p155 = scmp.le.s32.totalorder 1, %s11
    %p156 = scmp.lt.s32.totalorder %s11, 3
    %p157 = pnand %p155, %p156
    %p158 = pneg %p157
    // Predicated region
    $region9: #{edic_forward.8} parent=5 // pred_check
      _
    $region10: #{edic_forward.8} parent=5 // pred_check_branch
      %160 = sbr.rel (%p157) target = $region12
    $region11: #{edic_forward.8} parent=5 // pred_region
      %s161 = ssub.s32 %s11, 1
      // Predicated region
      $region13: #{edic_forward.8} parent=11 // pred_check
        %p162 = pneg %p58
      $region14: #{edic_forward.8} parent=11 // pred_check_branch
        %164 = sbr.rel (%p162) target = $region16
      $region15: #{edic_forward.8} parent=11 // pred_region
        _
      $region16: #{edic_forward.8} parent=11 // pred_fallthru
        _
      // Predicated region
      $region17: #{edic_forward.8} parent=11 // pred_check
        %p165 = pneg %p79
      $region18: #{edic_forward.8} parent=11 // pred_check_branch
        %167 = sbr.rel (%p165) target = $region20
      $region19: #{edic_forward.8} parent=11 // pred_region
        _
      $region20: #{edic_forward.8} parent=11 // pred_fallthru
        _
      // Predicated region
      $region21: #{edic_forward.8} parent=11 // pred_check
        %p168 = pneg %p100
      $region22: #{edic_forward.8} parent=11 // pred_check_branch
        %170 = sbr.rel (%p168) target = $region24
      $region23: #{edic_forward.8} parent=11 // pred_region
        _
      $region24: #{edic_forward.8} parent=11 // pred_fallthru
        _
      // Predicated region
      $region25: #{edic_forward.8} parent=11 // pred_check
        %p171 = pneg %p121
      $region26: #{edic_forward.8} parent=11 // pred_check_branch
        %173 = sbr.rel (%p171) target = $region28
      $region27: #{edic_forward.8} parent=11 // pred_region
        _
      $region28: #{edic_forward.8} parent=11 // pred_fallthru
        _
    $region12: #{edic_forward.8} parent=5 // pred_fallthru
      _
    %p174 = scmp.lt.s32.totalorder %s11, 2
    // Predicated region
    $region29: #{edic_forward.8} parent=5 // pred_check
      %p175 = pneg %p174
    $region30: #{edic_forward.8} parent=5 // pred_check_branch
      %177 = sbr.rel (%p175) target = $region32
    $region31: #{edic_forward.8} parent=5 // pred_region
      // Predicated region
      $region33: #{edic_forward.8} parent=31 // pred_check
        %p178 = pneg %p31
      $region34: #{edic_forward.8} parent=31 // pred_check_branch
        %180 = sbr.rel (%p178) target = $region36
      $region35: #{edic_forward.8} parent=31 // pred_region
        %s181 = smul.u32 8, %s11
        %p182 = scmp.lt.s32.totalorder %s181, 15
        %s183 = scalar_select %p182, %s181, 15
        %s184 = smul.addr %s183, 4
        %s185 = scalar_lea.vmem %s0, %s184
        %s186 = smul.u32 8, %s11
      $region36: #{edic_forward.8} parent=31 // pred_fallthru
        _
    $region32: #{edic_forward.8} parent=5 // pred_fallthru
      _
    %p187 = scmp.le.s32.totalorder 1, %s11
    %p188 = scmp.lt.s32.totalorder %s11, 3
    %p189 = pnand %p187, %p188
    %p190 = pneg %p189
    // Predicated region
    $region37: #{edic_forward.8} parent=5 // pred_check
      _
    $region38: #{edic_forward.8} parent=5 // pred_check_branch
      %192 = sbr.rel (%p189) target = $region40
    $region39: #{edic_forward.8} parent=5 // pred_region
      %s193 = ssub.s32 %s11, 1
      %s194 = smul.u32 8, %s16
      %p195 = scmp.lt.s32.totalorder %s194, 15
      %s196 = scalar_select %p195, %s194, 15
      %s197 = smul.addr %s196, 4
      %s198 = scalar_lea.vmem %s0, %s197
      %p199 = pneg %p37
      %p200 = pneg %p34
      %p201 = pneg %p58
      %p202 = pneg %p55
      %p203 = pneg %p79
      %p204 = pneg %p76
      %p205 = pneg %p100
      %p206 = pneg %p97
      %p207 = pneg %p121
      %p208 = pneg %p118
      %p209 = pneg %p147
      %p210 = pneg %p144
      %s211 = smul.u32 8, %s16
      %p212 = scmp.lt.s32.totalorder %s211, 15
      %s213 = scalar_select %p212, %s211, 15
      %s214 = smul.addr %s213, 8
      %s215 = scalar_lea.vmem %s5, %s214
      %s216 = smul.u32 8, %s16
      %p217 = scmp.lt.s32.totalorder %s216, 15
      %s218 = scalar_select %p217, %s216, 15
      %s219 = smul.addr %s218, 4
      %s220 = scalar_lea.vmem %s0, %s219
      %s221 = smul.u32 8, %s16
      %s222 = smul.u32 8, %s16
      %p223 = scmp.lt.s32.totalorder %s222, 15
      %s224 = scalar_select %p223, %s222, 15
      %s225 = smul.addr %s224, 8
      %s226 = scalar_lea.vmem %s5, %s225
      %s227 = smul.u32 8, %s16
      %v229 = vld [vmem:[%s220] sm:$0xf]
      %v230 = vld [vmem:[%s220 + $0x4] sm:$0xf]
      %v231 = vld [vmem:[%s220 + $0x8] sm:$0xf]
      %v232 = vld [vmem:[%s220 + $0xc] sm:$0xf]
      %v233 = vld [vmem:[%s220 + $0x10] sm:$0xf]
      %v234 = vld [vmem:[%s220 + $0x14] sm:$0xf]
      %v235 = vld [vmem:[%s220 + $0x18] sm:$0xf]
      %v236 = vld [vmem:[%s220 + $0x1c] sm:$0xf]
      %v237 = vld [vmem:[%s1] sm:$0xf]
      %v238 = vld [vmem:[%s1 + $0x4] sm:$0xf]
      %v239 = vld [vmem:[%s1 + $0x8] sm:$0xf]
      %v240 = vld [vmem:[%s1 + $0xc] sm:$0xf]
      %v241 = vld [vmem:[%s1 + $0x10] sm:$0xf]
      %v242 = vld [vmem:[%s1 + $0x14] sm:$0xf]
      %v243 = vld [vmem:[%s1 + $0x18] sm:$0xf]
      %v244 = vld [vmem:[%s1 + $0x1c] sm:$0xf]
      %v245 = vld [vmem:[%s1 + $0x20] sm:$0xf]
      %v246 = vld [vmem:[%s1 + $0x24] sm:$0x3]
      %v247 = vld [vmem:[%s2] sm:$0x1]
      %v249 = vlaneseq
      %v250 = vshrl.u32 %v249, 7
      %v251 = vsub.s32 0, %v250
      %v252 = vrot.slane %v247, %v251
      %v262 = vunpack.c.l.b16 %v229
      %v263 = vunpack.c.l.b16 %v230
      %v264 = vunpack.c.l.b16 %v231
      %v265 = vunpack.c.l.b16 %v232
      %v266 = vunpack.c.l.b16 %v233
      %v267 = vunpack.c.l.b16 %v234
      %v268 = vunpack.c.l.b16 %v235
      %v269 = vunpack.c.l.b16 %v236
      %v270 = vpack.c.b16 %v263, %v262
      %v271 = vpack.c.b16 %v265, %v264
      %v272 = vpack.c.b16 %v267, %v266
      %v273 = vpack.c.b16 %v269, %v268
      %v284 = vunpack.c.l.b16 %v237
      %v285 = vunpack.c.l.b16 %v238
      %v286 = vunpack.c.l.b16 %v239
      %v287 = vunpack.c.l.b16 %v240
      %v288 = vunpack.c.l.b16 %v241
      %v289 = vunpack.c.l.b16 %v242
      %v290 = vunpack.c.l.b16 %v243
      %v291 = vunpack.c.l.b16 %v244
      %v292 = vunpack.c.l.b16 %v245
      %v293 = vunpack.c.l.b16 %v246
      %v294 = vpack.c.b16 %v285, %v284
      %v295 = vpack.c.b16 %v287, %v286
      %v296 = vpack.c.b16 %v289, %v288
      %v297 = vpack.c.b16 %v291, %v290
      %v298 = vpack.c.b16 %v293, %v292
      %vm303 = vcmask 613376
      %v305 = vsel %vm303, %v270, 0
      %v308 = vsel %vm303, %v271, 0
      %v311 = vsel %vm303, %v272, 0
      %v314 = vsel %vm303, %v273, 0
      %vm316 = vcmask 1044480
      %vm317 = vcmask 1045504
      %v318 = vsel %vm316, 4294967295, 65535
      %v319 = vsel %vm317, %v318, 0
      %v321 = vand.u32 %v298, %v319
      %323 = vmatprep.subr.bf16.mxu0 0
      %324 = vmatpush1.bf16.msra.mxu0 %v294
      %325 = vmatprep.subr.bf16.mxu0 0
      %326 = vmatpush1.bf16.msra.mxu0 %v295
      %327 = vmatprep.subr.bf16.mxu0 0
      %328 = vmatpush1.bf16.msra.mxu0 %v296
      %329 = vmatprep.subr.bf16.mxu0 0
      %330 = vmatpush1.bf16.msra.mxu0 %v297
      %331 = vmatprep.subr.bf16.mxu0 0
      %332 = vmatpush1.bf16.msra.mxu0 %v321
      %333 = vmatprep.subr.bf16.mxu0 0
      %334 = vmatpush1.bf16.msra.mxu0 0
      %335 = vmatprep.subr.bf16.mxu0 0
      %336 = vmatpush1.bf16.msra.mxu0 0
      %337 = vmatprep.subr.bf16.mxu0 0
      %338 = vmatpush1.bf16.msra.mxu0 0
      %339 = vmatprep.subr.bf16.mxu0 0
      %340 = vmatpush1.bf16.msra.mxu0 0
      %341 = vmatprep.subr.bf16.mxu0 0
      %342 = vmatpush1.bf16.msra.mxu0 0
      %343 = vmatprep.subr.bf16.mxu0 0
      %344 = vmatpush1.bf16.msra.mxu0 0
      %345 = vmatprep.subr.bf16.mxu0 0
      %346 = vmatpush1.bf16.msra.mxu0 0
      %347 = vmatprep.subr.bf16.mxu0 0
      %348 = vmatpush1.bf16.msra.mxu0 0
      %349 = vmatprep.subr.bf16.mxu0 0
      %350 = vmatpush1.bf16.msra.mxu0 0
      %351 = vmatprep.subr.bf16.mxu0 0
      %352 = vmatpush1.bf16.msra.mxu0 0
      %353 = vmatprep.subr.bf16.mxu0 0
      %354 = vmatpush1.bf16.msra.mxu0 0
      %355 = vmatprep.mubr.bf16.mxu0 0
      %356 = vmatmul.mubr.bf16.gmra.mrb[0].mxu0 %v305
      %v357 = vpop.f32.mrb[0].mxu0
      %v358 = vadd.f32 %v252, %v357
      %v359 = vpop.f32.mrb[0].mxu0
      %v360 = vpop.f32.mrb[0].mxu0
      %v361 = vadd.f32 %v252, %v360
      %v362 = vpop.f32.mrb[0].mxu0
      %363 = vmatprep.mubr.bf16.mxu0 0
      %364 = vmatmul.mubr.bf16.gmra.mrb[0].mxu0 %v308
      %v365 = vpop.f32.mrb[0].mxu0
      %v366 = vadd.f32 %v252, %v365
      %v367 = vpop.f32.mrb[0].mxu0
      %v368 = vpop.f32.mrb[0].mxu0
      %v369 = vadd.f32 %v252, %v368
      %v370 = vpop.f32.mrb[0].mxu0
      %371 = vmatprep.mubr.bf16.mxu0 0
      %372 = vmatmul.mubr.bf16.gmra.mrb[0].mxu0 %v311
      %v373 = vpop.f32.mrb[0].mxu0
      %v374 = vadd.f32 %v252, %v373
      %v375 = vpop.f32.mrb[0].mxu0
      %v376 = vpop.f32.mrb[0].mxu0
      %v377 = vadd.f32 %v252, %v376
      %v378 = vpop.f32.mrb[0].mxu0
      %379 = vmatprep.mubr.bf16.mxu0 0
      %380 = vmatmul.mubr.bf16.gmra.mrb[0].mxu0 %v314
      %v381 = vpop.f32.mrb[0].mxu0
      %v382 = vadd.f32 %v252, %v381
      %v383 = vpop.f32.mrb[0].mxu0
      %v384 = vpop.f32.mrb[0].mxu0
      %v385 = vadd.f32 %v252, %v384
      %v386 = vpop.f32.mrb[0].mxu0
      %387 = vdwg.mxu0
      %v388 = vmul.f32 %v358, %v358
      %v389 = vmul.f32 %v361, %v361
      %v390 = vmul.f32 %v366, %v366
      %v391 = vmul.f32 %v369, %v369
      %v392 = vmul.f32 %v374, %v374
      %v393 = vmul.f32 %v377, %v377
      %v394 = vmul.f32 %v382, %v382
      %v395 = vmul.f32 %v385, %v385
      %v396 = vld [vmem:[%s3] sm:$0xff]
      %v397 = vld [vmem:[%s3 + $0x8] sm:$0xff]
      %v398 = vld [vmem:[%s3 + $0x10] sm:$0xff]
      %v399 = vld [vmem:[%s3 + $0x18] sm:$0xff]
      %v400 = vld [vmem:[%s4] sm:$0x1]
      %v402 = vlaneseq
      %v403 = vshrl.u32 %v402, 7
      %v404 = vsub.s32 0, %v403
      %v405 = vrot.slane %v400, %v404
      %vm407 = vcmask 261120
      %v409 = vsel %vm407, %v388, 0
      %v412 = vsel %vm407, %v389, 0
      %v415 = vsel %vm407, %v390, 0
      %v418 = vsel %vm407, %v391, 0
      %v421 = vsel %vm407, %v392, 0
      %v424 = vsel %vm407, %v393, 0
      %v427 = vsel %vm407, %v394, 0
      %v430 = vsel %vm407, %v395, 0
      %432 = vmatprep.subr.mxu0 0.0
      %433 = vmatpush1.msra.mxu0 %v396
      %434 = vmatprep.subr.mxu0 0.0
      %435 = vmatpush1.msra.mxu0 %v397
      %436 = vmatprep.subr.mxu0 0.0
      %437 = vmatpush1.msra.mxu0 %v398
      %438 = vmatprep.subr.mxu0 0.0
      %439 = vmatpush1.msra.mxu0 %v399
      %440 = vmatprep.subr.mxu0 0.0
      %441 = vmatpush1.msra.mxu0 0.0
      %442 = vmatprep.subr.mxu0 0.0
      %443 = vmatpush1.msra.mxu0 0.0
      %444 = vmatprep.subr.mxu0 0.0
      %445 = vmatpush1.msra.mxu0 0.0
      %446 = vmatprep.subr.mxu0 0.0
      %447 = vmatpush1.msra.mxu0 0.0
      %448 = vmatprep.subr.mxu0 0.0
      %449 = vmatpush1.msra.mxu0 0.0
      %450 = vmatprep.subr.mxu0 0.0
      %451 = vmatpush1.msra.mxu0 0.0
      %452 = vmatprep.subr.mxu0 0.0
      %453 = vmatpush1.msra.mxu0 0.0
      %454 = vmatprep.subr.mxu0 0.0
      %455 = vmatpush1.msra.mxu0 0.0
      %456 = vmatprep.subr.mxu0 0.0
      %457 = vmatpush1.msra.mxu0 0.0
      %458 = vmatprep.subr.mxu0 0.0
      %459 = vmatpush1.msra.mxu0 0.0
      %460 = vmatprep.subr.mxu0 0.0
      %461 = vmatpush1.msra.mxu0 0.0
      %462 = vmatprep.subr.mxu0 0.0
      %463 = vmatpush1.msra.mxu0 0.0
      %464 = vmatprep.subr.mxu0 0.0
      %465 = vmatpush1.msra.mxu0 0.0
      %466 = vmatprep.subr.mxu0 0.0
      %467 = vmatpush1.msra.mxu0 0.0
      %468 = vmatprep.subr.mxu0 0.0
      %469 = vmatpush1.msra.mxu0 0.0
      %470 = vmatprep.subr.mxu0 0.0
      %471 = vmatpush1.msra.mxu0 0.0
      %472 = vmatprep.subr.mxu0 0.0
      %473 = vmatpush1.msra.mxu0 0.0
      %474 = vmatprep.subr.mxu0 0.0
      %475 = vmatpush1.msra.mxu0 0.0
      %476 = vmatprep.subr.mxu0 0.0
      %477 = vmatpush1.msra.mxu0 0.0
      %478 = vmatprep.subr.mxu0 0.0
      %479 = vmatpush1.msra.mxu0 0.0
      %480 = vmatprep.subr.mxu0 0.0
      %481 = vmatpush1.msra.mxu0 0.0
      %482 = vmatprep.subr.mxu0 0.0
      %483 = vmatpush1.msra.mxu0 0.0
      %484 = vmatprep.subr.mxu0 0.0
      %485 = vmatpush1.msra.mxu0 0.0
      %486 = vmatprep.subr.mxu0 0.0
      %487 = vmatpush1.msra.mxu0 0.0
      %488 = vmatprep.subr.mxu0 0.0
      %489 = vmatpush1.msra.mxu0 0.0
      %490 = vmatprep.subr.mxu0 0.0
      %491 = vmatpush1.msra.mxu0 0.0
      %492 = vmatprep.subr.mxu0 0.0
      %493 = vmatpush1.msra.mxu0 0.0
      %494 = vmatprep.subr.mxu0 0.0
      %495 = vmatpush1.msra.mxu0 0.0
      %496 = vmatprep.mubr.f32.mxu0 0.0
      %497 = vmatmul.mubr.f32.gmra.mrb[0].mxu0 %v409
      %v498 = vpop.f32.mrb[0].mxu0
      %v499 = vadd.f32 %v405, %v498
      %v500 = vpop.f32.mrb[0].mxu0
      %501 = vmatprep.mubr.f32.mxu0 0.0
      %502 = vmatmul.mubr.f32.gmra.mrb[0].mxu0 %v412
      %v503 = vpop.f32.mrb[0].mxu0
      %v504 = vadd.f32 %v405, %v503
      %v505 = vpop.f32.mrb[0].mxu0
      %506 = vmatprep.mubr.f32.mxu0 0.0
      %507 = vmatmul.mubr.f32.gmra.mrb[0].mxu0 %v415
      %v508 = vpop.f32.mrb[0].mxu0
      %v509 = vadd.f32 %v405, %v508
      %v510 = vpop.f32.mrb[0].mxu0
      %511 = vmatprep.mubr.f32.mxu0 0.0
      %512 = vmatmul.mubr.f32.gmra.mrb[0].mxu0 %v418
      %v513 = vpop.f32.mrb[0].mxu0
      %v514 = vadd.f32 %v405, %v513
      %v515 = vpop.f32.mrb[0].mxu0
      %516 = vmatprep.mubr.f32.mxu0 0.0
      %517 = vmatmul.mubr.f32.gmra.mrb[0].mxu0 %v421
      %v518 = vpop.f32.mrb[0].mxu0
      %v519 = vadd.f32 %v405, %v518
      %v520 = vpop.f32.mrb[0].mxu0
      %521 = vmatprep.mubr.f32.mxu0 0.0
      %522 = vmatmul.mubr.f32.gmra.mrb[0].mxu0 %v424
      %v523 = vpop.f32.mrb[0].mxu0
      %v524 = vadd.f32 %v405, %v523
      %v525 = vpop.f32.mrb[0].mxu0
      %526 = vmatprep.mubr.f32.mxu0 0.0
      %527 = vmatmul.mubr.f32.gmra.mrb[0].mxu0 %v427
      %v528 = vpop.f32.mrb[0].mxu0
      %v529 = vadd.f32 %v405, %v528
      %v530 = vpop.f32.mrb[0].mxu0
      %531 = vmatprep.mubr.f32.mxu0 0.0
      %532 = vmatmul.mubr.f32.gmra.mrb[0].mxu0 %v430
      %v533 = vpop.f32.mrb[0].mxu0
      %v534 = vadd.f32 %v405, %v533
      %v535 = vpop.f32.mrb[0].mxu0
      %536 = vdwg.mxu0
      %v537 = vrsqrt.pop %v499
      %v538 = vrsqrt.pop %v504
      %v539 = vrsqrt.pop %v509
      %v540 = vrsqrt.pop %v514
      %v541 = vrsqrt.pop %v519
      %v542 = vrsqrt.pop %v524
      %v543 = vrsqrt.pop %v529
      %v544 = vrsqrt.pop %v534
      %v545 = vmul.f32 %v358, %v537
      %v546 = vmul.f32 %v361, %v538
      %v547 = vmul.f32 %v366, %v539
      %v548 = vmul.f32 %v369, %v540
      %v549 = vmul.f32 %v374, %v541
      %v550 = vmul.f32 %v377, %v542
      %v551 = vmul.f32 %v382, %v543
      %v552 = vmul.f32 %v385, %v544
      %553 = vst.msk [vmem:[%s226] sm:$0xff] %vm407, %v545
      %554 = vst.msk [vmem:[%s226 + $0x8] sm:$0xff] %vm407, %v546
      %555 = vst.msk [vmem:[%s226 + $0x10] sm:$0xff] %vm407, %v547
      %556 = vst.msk [vmem:[%s226 + $0x18] sm:$0xff] %vm407, %v548
      %557 = vst.msk [vmem:[%s226 + $0x20] sm:$0xff] %vm407, %v549
      %558 = vst.msk [vmem:[%s226 + $0x28] sm:$0xff] %vm407, %v550
      %559 = vst.msk [vmem:[%s226 + $0x30] sm:$0xff] %vm407, %v551
      %560 = vst.msk [vmem:[%s226 + $0x38] sm:$0xff] %vm407, %v552
      %s561 = smul.u32 8, %s16
      %p562 = scmp.lt.s32.totalorder %s561, 15
      %s563 = scalar_select %p562, %s561, 15
      %s564 = smul.addr %s563, 8
      %s565 = scalar_lea.vmem %s5, %s564
      // Predicated region
      $region41: #{edic_forward.8} parent=39 // pred_check
        %p566 = pneg %p144
      $region42: #{edic_forward.8} parent=39 // pred_check_branch
        %568 = sbr.rel (%p566) target = $region44
      $region43: #{edic_forward.8} parent=39 // pred_region
        %s569 = smul.u32 8, %s16
      $region44: #{edic_forward.8} parent=39 // pred_fallthru
        _
    $region40: #{edic_forward.8} parent=5 // pred_fallthru
      _
    %p570 = scmp.le.s32.totalorder 2, %s11
    // Predicated region
    $region45: #{edic_forward.8} parent=5 // pred_check
      %p571 = pneg %p570
    $region46: #{edic_forward.8} parent=5 // pred_check_branch
      %573 = sbr.rel (%p571) target = $region48
    $region47: #{edic_forward.8} parent=5 // pred_region
      %s574 = ssub.s32 %s11, 2
      // Predicated region
      $region49: #{edic_forward.8} parent=47 // pred_check
        %p575 = pneg %p150
      $region50: #{edic_forward.8} parent=47 // pred_check_branch
        %577 = sbr.rel (%p575) target = $region52
      $region51: #{edic_forward.8} parent=47 // pred_region
        %s578 = smul.u32 8, %s17
        %p579 = scmp.lt.s32.totalorder %s578, 15
        %s580 = scalar_select %p579, %s578, 15
        %s581 = smul.addr %s580, 8
        %s582 = scalar_lea.vmem %s5, %s581
      $region52: #{edic_forward.8} parent=47 // pred_fallthru
        _
    $region48: #{edic_forward.8} parent=5 // pred_fallthru
      _
  $region6: #{edic_forward.8} parent=0 // loop_footer
    %s15 = sadd.s32 1, %s11
  $region7: #{edic_forward.8} parent=0 // loop_footer_branch
    %10 = sbr.rel target = $region3
  $region8: #{edic_forward.8} parent=0 // loop_exit
    _

// kernel: edic_forward.9
$region0: #{edic_forward.9}
  #allocation0 [shape = 'u32[]', space=smem, size = 0x4, offset = 0x4, fixed_abs, tag = 'smem constant byte address 0x4 - core index']
  #allocation1 [shape = 'u32[144,128]{1,0:T(1,128)}', space=vmem, size = 0x12000, scoped, tag = 'internal scratch']
  %s0 = inlined_call_operand.vmem [shape: bf16[32,800], index: 0, kind: input, shape index: {}]
  %s1 = inlined_call_operand.vmem [shape: bf16[800,32], index: 1, kind: input, shape index: {}]
  %s2 = inlined_call_operand.vmem [shape: f32[1,32], index: 2, kind: input, shape index: {}]
  %s3 = inlined_call_operand.vmem [shape: f32[32,32], index: 3, kind: input, shape index: {}]
  %s4 = inlined_call_operand.vmem [shape: f32[1,32], index: 4, kind: input, shape index: {}]
  %s5 = inlined_call_operand.vmem [shape: f32[32,32], index: 5, kind: output, shape index: {}]
  %s6 = sld [smem:[#allocation0]]
  $region53: #{edic_forward.9} parent=0
    _
  %s8 = ssub.s32 1, %s6
  %s9 = scalar_select 0, %s8, %s6
  loop: start=0, step=1, limit=4
  $region2: #{edic_forward.9} parent=0 // loop_pre_header
    _
  $region3: #{edic_forward.9} parent=0 // loop_header
    %s11 = sphi 0, %s15
    %p12 = scmp.ge.s32.totalorder %s11, 4
    %s21 = sphi 0, %s23
    %s24 = sphi 0, %s21
    %s25 = sphi 0, %s24
    %s41 = sphi 0, %s25
    %s45 = sphi 0, %s45
    %s47 = sphi 0, %s45
    %s48 = sphi 0, %s47
    %s62 = sphi 0, %s48
    %s66 = sphi 0, %s66
    %s68 = sphi 0, %s66
    %s69 = sphi 0, %s68
    %s83 = sphi 0, %s69
    %s87 = sphi 0, %s87
    %s89 = sphi 0, %s87
    %s90 = sphi 0, %s89
    %s104 = sphi 0, %s90
    %s108 = sphi 0, %s108
    %s110 = sphi 0, %s108
    %s111 = sphi 0, %s110
    %s125 = sphi 0, %s111
    %s131 = sphi 0, %s133
    %s134 = sphi 0, %s131
    %s135 = sphi 0, %s134
    %s151 = sphi 0, %s135
  $region4: #{edic_forward.9} parent=0 // loop_header_branch
    %14 = sbr.rel (%p12) target = $region8
  $region5: #{edic_forward.9} parent=0 // loop_body
    %s16 = ssub.s32 %s11, 1
    %s17 = ssub.s32 %s11, 2
    %s18 = sadd.s32 %s11, 1
    %s19 = ssub.s32 %s11, %s18
    %p20 = scmp.eq.s32.totalorder %s19, 0
    %s22 = sadd.s32 %s21, 1
    %s23 = scalar_select %p20, %s21, %s22
    %p26 = pneg %p20
    %p27 = scmp.eq.s32.totalorder %s11, 1
    %p28 = por %p26, %p27
    %p29 = scmp.ne.s32.totalorder %s21, %s24
    %p30 = scmp.eq.s32.totalorder %s11, 0
    %p31 = por %p29, %p30
    %p32 = scmp.ne.s32.totalorder %s21, %s24
    %p33 = scmp.eq.s32.totalorder %s16, 1
    %p34 = por %p32, %p33
    %p35 = scmp.ne.s32.totalorder %s24, %s25
    %p36 = scmp.eq.s32.totalorder %s16, 0
    %p37 = por %p35, %p36
    %p38 = scmp.ne.s32.totalorder %s24, %s25
    %p39 = scmp.eq.s32.totalorder %s17, 1
    %p40 = por %p38, %p39
    %p42 = scmp.ne.s32.totalorder %s25, %s41
    %p43 = scmp.eq.s32.totalorder %s17, 0
    %p44 = por %p42, %p43
    %s46 = sadd.s32 %s45, 1
    %p49 = scmp.eq.s32.totalorder %s11, 1
    %p50 = scmp.ne.s32.totalorder %s45, %s47
    %p51 = scmp.eq.s32.totalorder %s11, 0
    %p52 = por %p50, %p51
    %p53 = scmp.ne.s32.totalorder %s45, %s47
    %p54 = scmp.eq.s32.totalorder %s16, 1
    %p55 = por %p53, %p54
    %p56 = scmp.ne.s32.totalorder %s47, %s48
    %p57 = scmp.eq.s32.totalorder %s16, 0
    %p58 = por %p56, %p57
    %p59 = scmp.ne.s32.totalorder %s47, %s48
    %p60 = scmp.eq.s32.totalorder %s17, 1
    %p61 = por %p59, %p60
    %p63 = scmp.ne.s32.totalorder %s48, %s62
    %p64 = scmp.eq.s32.totalorder %s17, 0
    %p65 = por %p63, %p64
    %s67 = sadd.s32 %s66, 1
    %p70 = scmp.eq.s32.totalorder %s11, 1
    %p71 = scmp.ne.s32.totalorder %s66, %s68
    %p72 = scmp.eq.s32.totalorder %s11, 0
    %p73 = por %p71, %p72
    %p74 = scmp.ne.s32.totalorder %s66, %s68
    %p75 = scmp.eq.s32.totalorder %s16, 1
    %p76 = por %p74, %p75
    %p77 = scmp.ne.s32.totalorder %s68, %s69
    %p78 = scmp.eq.s32.totalorder %s16, 0
    %p79 = por %p77, %p78
    %p80 = scmp.ne.s32.totalorder %s68, %s69
    %p81 = scmp.eq.s32.totalorder %s17, 1
    %p82 = por %p80, %p81
    %p84 = scmp.ne.s32.totalorder %s69, %s83
    %p85 = scmp.eq.s32.totalorder %s17, 0
    %p86 = por %p84, %p85
    %s88 = sadd.s32 %s87, 1
    %p91 = scmp.eq.s32.totalorder %s11, 1
    %p92 = scmp.ne.s32.totalorder %s87, %s89
    %p93 = scmp.eq.s32.totalorder %s11, 0
    %p94 = por %p92, %p93
    %p95 = scmp.ne.s32.totalorder %s87, %s89
    %p96 = scmp.eq.s32.totalorder %s16, 1
    %p97 = por %p95, %p96
    %p98 = scmp.ne.s32.totalorder %s89, %s90
    %p99 = scmp.eq.s32.totalorder %s16, 0
    %p100 = por %p98, %p99
    %p101 = scmp.ne.s32.totalorder %s89, %s90
    %p102 = scmp.eq.s32.totalorder %s17, 1
    %p103 = por %p101, %p102
    %p105 = scmp.ne.s32.totalorder %s90, %s104
    %p106 = scmp.eq.s32.totalorder %s17, 0
    %p107 = por %p105, %p106
    %s109 = sadd.s32 %s108, 1
    %p112 = scmp.eq.s32.totalorder %s11, 1
    %p113 = scmp.ne.s32.totalorder %s108, %s110
    %p114 = scmp.eq.s32.totalorder %s11, 0
    %p115 = por %p113, %p114
    %p116 = scmp.ne.s32.totalorder %s108, %s110
    %p117 = scmp.eq.s32.totalorder %s16, 1
    %p118 = por %p116, %p117
    %p119 = scmp.ne.s32.totalorder %s110, %s111
    %p120 = scmp.eq.s32.totalorder %s16, 0
    %p121 = por %p119, %p120
    %p122 = scmp.ne.s32.totalorder %s110, %s111
    %p123 = scmp.eq.s32.totalorder %s17, 1
    %p124 = por %p122, %p123
    %p126 = scmp.ne.s32.totalorder %s111, %s125
    %p127 = scmp.eq.s32.totalorder %s17, 0
    %p128 = por %p126, %p127
    %s129 = ssub.s32 %s11, %s18
    %p130 = scmp.eq.s32.totalorder %s129, 0
    %s132 = sadd.s32 %s131, 1
    %s133 = scalar_select %p130, %s131, %s132
    %p136 = pneg %p130
    %p137 = scmp.eq.s32.totalorder %s11, 1
    %p138 = por %p136, %p137
    %p139 = scmp.ne.s32.totalorder %s131, %s134
    %p140 = scmp.eq.s32.totalorder %s11, 0
    %p141 = por %p139, %p140
    %p142 = scmp.ne.s32.totalorder %s131, %s134
    %p143 = scmp.eq.s32.totalorder %s16, 1
    %p144 = por %p142, %p143
    %p145 = scmp.ne.s32.totalorder %s134, %s135
    %p146 = scmp.eq.s32.totalorder %s16, 0
    %p147 = por %p145, %p146
    %p148 = scmp.ne.s32.totalorder %s134, %s135
    %p149 = scmp.eq.s32.totalorder %s17, 1
    %p150 = por %p148, %p149
    %p152 = scmp.ne.s32.totalorder %s135, %s151
    %p153 = scmp.eq.s32.totalorder %s17, 0
    %p154 = por %p152, %p153
    %p155 = scmp.le.s32.totalorder 1, %s11
    %p156 = scmp.lt.s32.totalorder %s11, 3
    %p157 = pnand %p155, %p156
    %p158 = pneg %p157
    // Predicated region
    $region9: #{edic_forward.9} parent=5 // pred_check
      _
    $region10: #{edic_forward.9} parent=5 // pred_check_branch
      %160 = sbr.rel (%p157) target = $region12
    $region11: #{edic_forward.9} parent=5 // pred_region
      %s161 = ssub.s32 %s11, 1
      // Predicated region
      $region13: #{edic_forward.9} parent=11 // pred_check
        %p162 = pneg %p58
      $region14: #{edic_forward.9} parent=11 // pred_check_branch
        %164 = sbr.rel (%p162) target = $region16
      $region15: #{edic_forward.9} parent=11 // pred_region
        _
      $region16: #{edic_forward.9} parent=11 // pred_fallthru
        _
      // Predicated region
      $region17: #{edic_forward.9} parent=11 // pred_check
        %p165 = pneg %p79
      $region18: #{edic_forward.9} parent=11 // pred_check_branch
        %167 = sbr.rel (%p165) target = $region20
      $region19: #{edic_forward.9} parent=11 // pred_region
        _
      $region20: #{edic_forward.9} parent=11 // pred_fallthru
        _
      // Predicated region
      $region21: #{edic_forward.9} parent=11 // pred_check
        %p168 = pneg %p100
      $region22: #{edic_forward.9} parent=11 // pred_check_branch
        %170 = sbr.rel (%p168) target = $region24
      $region23: #{edic_forward.9} parent=11 // pred_region
        _
      $region24: #{edic_forward.9} parent=11 // pred_fallthru
        _
      // Predicated region
      $region25: #{edic_forward.9} parent=11 // pred_check
        %p171 = pneg %p121
      $region26: #{edic_forward.9} parent=11 // pred_check_branch
        %173 = sbr.rel (%p171) target = $region28
      $region27: #{edic_forward.9} parent=11 // pred_region
        _
      $region28: #{edic_forward.9} parent=11 // pred_fallthru
        _
    $region12: #{edic_forward.9} parent=5 // pred_fallthru
      _
    %p174 = scmp.lt.s32.totalorder %s11, 2
    // Predicated region
    $region29: #{edic_forward.9} parent=5 // pred_check
      %p175 = pneg %p174
    $region30: #{edic_forward.9} parent=5 // pred_check_branch
      %177 = sbr.rel (%p175) target = $region32
    $region31: #{edic_forward.9} parent=5 // pred_region
      // Predicated region
      $region33: #{edic_forward.9} parent=31 // pred_check
        %p178 = pneg %p31
      $region34: #{edic_forward.9} parent=31 // pred_check_branch
        %180 = sbr.rel (%p178) target = $region36
      $region35: #{edic_forward.9} parent=31 // pred_region
        %s181 = smul.u32 2, %s11
        %p182 = scmp.lt.s32.totalorder %s181, 3
        %s183 = scalar_select %p182, %s181, 3
        %s184 = smul.addr %s183, 7
        %s185 = smul.addr %s184, 4
        %s186 = scalar_lea.vmem %s0, %s185
        %s187 = smul.u32 2, %s11
      $region36: #{edic_forward.9} parent=31 // pred_fallthru
        _
    $region32: #{edic_forward.9} parent=5 // pred_fallthru
      _
    %p188 = scmp.le.s32.totalorder 1, %s11
    %p189 = scmp.lt.s32.totalorder %s11, 3
    %p190 = pnand %p188, %p189
    %p191 = pneg %p190
    // Predicated region
    $region37: #{edic_forward.9} parent=5 // pred_check
      _
    $region38: #{edic_forward.9} parent=5 // pred_check_branch
      %193 = sbr.rel (%p190) target = $region40
    $region39: #{edic_forward.9} parent=5 // pred_region
      %s194 = ssub.s32 %s11, 1
      %s195 = smul.u32 2, %s16
      %p196 = scmp.lt.s32.totalorder %s195, 3
      %s197 = scalar_select %p196, %s195, 3
      %s198 = smul.addr %s197, 7
      %s199 = smul.addr %s198, 4
      %s200 = scalar_lea.vmem %s0, %s199
      %p201 = pneg %p37
      %p202 = pneg %p34
      %p203 = pneg %p58
      %p204 = pneg %p55
      %p205 = pneg %p79
      %p206 = pneg %p76
      %p207 = pneg %p100
      %p208 = pneg %p97
      %p209 = pneg %p121
      %p210 = pneg %p118
      %p211 = pneg %p147
      %p212 = pneg %p144
      %s213 = smul.u32 2, %s16
      %p214 = scmp.lt.s32.totalorder %s213, 3
      %s215 = scalar_select %p214, %s213, 3
      %s216 = smul.addr %s215, 8
      %s217 = scalar_lea.vmem %s5, %s216
      %s218 = smul.u32 2, %s16
      %p219 = scmp.lt.s32.totalorder %s218, 3
      %s220 = scalar_select %p219, %s218, 3
      %s221 = smul.addr %s220, 7
      %s222 = smul.addr %s221, 4
      %s223 = scalar_lea.vmem %s0, %s222
      %s224 = smul.u32 2, %s16
      %s225 = smul.u32 2, %s16
      %p226 = scmp.lt.s32.totalorder %s225, 3
      %s227 = scalar_select %p226, %s225, 3
      %s228 = smul.addr %s227, 8
      %s229 = scalar_lea.vmem %s5, %s228
      %s230 = smul.u32 2, %s16
      %v232 = vld [vmem:[%s223] sm:$0xff]
      %v233 = vld [vmem:[%s223 + $0x8] sm:$0xff]
      %v234 = vld [vmem:[%s223 + $0x10] sm:$0xff]
      %v235 = vld [vmem:[%s223 + $0x18] sm:$0xf]
      %v236 = vld [vmem:[%s223 + $0x1c] sm:$0xff]
      %v237 = vld [vmem:[%s223 + $0x24] sm:$0xff]
      %v238 = vld [vmem:[%s223 + $0x2c] sm:$0xff]
      %v239 = vld [vmem:[%s223 + $0x34] sm:$0xf]
      %v240 = vld [vmem:[%s1] sm:$0xf]
      %v241 = vld [vmem:[%s1 + $0x4] sm:$0xf]
      %v242 = vld [vmem:[%s1 + $0x8] sm:$0xf]
      %v243 = vld [vmem:[%s1 + $0xc] sm:$0xf]
      %v244 = vld [vmem:[%s1 + $0x10] sm:$0xf]
      %v245 = vld [vmem:[%s1 + $0x14] sm:$0xf]
      %v246 = vld [vmem:[%s1 + $0x18] sm:$0xf]
      %v247 = vld [vmem:[%s1 + $0x1c] sm:$0xf]
      %v248 = vld [vmem:[%s1 + $0x20] sm:$0xf]
      %v249 = vld [vmem:[%s1 + $0x24] sm:$0xf]
      %v250 = vld [vmem:[%s1 + $0x28] sm:$0xf]
      %v251 = vld [vmem:[%s1 + $0x2c] sm:$0xf]
      %v252 = vld [vmem:[%s1 + $0x30] sm:$0xf]
      %v253 = vld [vmem:[%s1 + $0x34] sm:$0xf]
      %v254 = vld [vmem:[%s1 + $0x38] sm:$0xf]
      %v255 = vld [vmem:[%s1 + $0x3c] sm:$0xf]
      %v256 = vld [vmem:[%s1 + $0x40] sm:$0xf]
      %v257 = vld [vmem:[%s1 + $0x44] sm:$0xf]
      %v258 = vld [vmem:[%s1 + $0x48] sm:$0xf]
      %v259 = vld [vmem:[%s1 + $0x4c] sm:$0xf]
      %v260 = vld [vmem:[%s1 + $0x50] sm:$0xf]
      %v261 = vld [vmem:[%s1 + $0x54] sm:$0xf]
      %v262 = vld [vmem:[%s1 + $0x58] sm:$0xf]
      %v263 = vld [vmem:[%s1 + $0x5c] sm:$0xf]
      %v264 = vld [vmem:[%s1 + $0x60] sm:$0xf]
      %v265 = vld [vmem:[%s1 + $0x64] sm:$0xf]
      %v266 = vld [vmem:[%s1 + $0x68] sm:$0xf]
      %v267 = vld [vmem:[%s1 + $0x6c] sm:$0xf]
      %v268 = vld [vmem:[%s1 + $0x70] sm:$0xf]
      %v269 = vld [vmem:[%s1 + $0x74] sm:$0xf]
      %v270 = vld [vmem:[%s1 + $0x78] sm:$0xf]
      %v271 = vld [vmem:[%s1 + $0x7c] sm:$0xf]
      %v272 = vld [vmem:[%s1 + $0x80] sm:$0xf]
      %v273 = vld [vmem:[%s1 + $0x84] sm:$0xf]
      %v274 = vld [vmem:[%s1 + $0x88] sm:$0xf]
      %v275 = vld [vmem:[%s1 + $0x8c] sm:$0xf]
      %v276 = vld [vmem:[%s1 + $0x90] sm:$0xf]
      %v277 = vld [vmem:[%s1 + $0x94] sm:$0xf]
      %v278 = vld [vmem:[%s1 + $0x98] sm:$0xf]
      %v279 = vld [vmem:[%s1 + $0x9c] sm:$0xf]
      %v280 = vld [vmem:[%s1 + $0xa0] sm:$0xf]
      %v281 = vld [vmem:[%s1 + $0xa4] sm:$0xf]
      %v282 = vld [vmem:[%s1 + $0xa8] sm:$0xf]
      %v283 = vld [vmem:[%s1 + $0xac] sm:$0xf]
      %v284 = vld [vmem:[%s1 + $0xb0] sm:$0xf]
      %v285 = vld [vmem:[%s1 + $0xb4] sm:$0xf]
      %v286 = vld [vmem:[%s1 + $0xb8] sm:$0xf]
      %v287 = vld [vmem:[%s1 + $0xbc] sm:$0xf]
      %v288 = vld [vmem:[%s1 + $0xc0] sm:$0xf]
      %v289 = vld [vmem:[%s1 + $0xc4] sm:$0xf]
      %v290 = vld [vmem:[%s1 + $0xc8] sm:$0xf]
      %v291 = vld [vmem:[%s1 + $0xcc] sm:$0xf]
      %v292 = vld [vmem:[%s1 + $0xd0] sm:$0xf]
      %v293 = vld [vmem:[%s1 + $0xd4] sm:$0xf]
      %v294 = vld [vmem:[%s1 + $0xd8] sm:$0xf]
      %v295 = vld [vmem:[%s1 + $0xdc] sm:$0xf]
      %v296 = vld [vmem:[%s1 + $0xe0] sm:$0xf]
      %v297 = vld [vmem:[%s1 + $0xe4] sm:$0xf]
      %v298 = vld [vmem:[%s1 + $0xe8] sm:$0xf]
      %v299 = vld [vmem:[%s1 + $0xec] sm:$0xf]
      %v300 = vld [vmem:[%s1 + $0xf0] sm:$0xf]
      %v301 = vld [vmem:[%s1 + $0xf4] sm:$0xf]
      %v302 = vld [vmem:[%s1 + $0xf8] sm:$0xf]
      %v303 = vld [vmem:[%s1 + $0xfc] sm:$0xf]
      %v304 = vld [vmem:[%s1 + $0x100] sm:$0xf]
      %v305 = vld [vmem:[%s1 + $0x104] sm:$0xf]
      %v306 = vld [vmem:[%s1 + $0x108] sm:$0xf]
      %v307 = vld [vmem:[%s1 + $0x10c] sm:$0xf]
      %v308 = vld [vmem:[%s1 + $0x110] sm:$0xf]
      %v309 = vld [vmem:[%s1 + $0x114] sm:$0xf]
      %v310 = vld [vmem:[%s1 + $0x118] sm:$0xf]
      %v311 = vld [vmem:[%s1 + $0x11c] sm:$0xf]
      %v312 = vld [vmem:[%s1 + $0x120] sm:$0xf]
      %v313 = vld [vmem:[%s1 + $0x124] sm:$0xf]
      %v314 = vld [vmem:[%s1 + $0x128] sm:$0xf]
      %v315 = vld [vmem:[%s1 + $0x12c] sm:$0xf]
      %v316 = vld [vmem:[%s1 + $0x130] sm:$0xf]
      %v317 = vld [vmem:[%s1 + $0x134] sm:$0xf]
      %v318 = vld [vmem:[%s1 + $0x138] sm:$0xf]
      %v319 = vld [vmem:[%s1 + $0x13c] sm:$0xf]
      %v320 = vld [vmem:[%s1 + $0x140] sm:$0xf]
      %v321 = vld [vmem:[%s1 + $0x144] sm:$0xf]
      %v322 = vld [vmem:[%s1 + $0x148] sm:$0xf]
      %v323 = vld [vmem:[%s1 + $0x14c] sm:$0xf]
      %v324 = vld [vmem:[%s1 + $0x150] sm:$0xf]
      %v325 = vld [vmem:[%s1 + $0x154] sm:$0xf]
      %v326 = vld [vmem:[%s1 + $0x158] sm:$0xf]
      %v327 = vld [vmem:[%s1 + $0x15c] sm:$0xf]
      %v328 = vld [vmem:[%s1 + $0x160] sm:$0xf]
      %v329 = vld [vmem:[%s1 + $0x164] sm:$0xf]
      %v330 = vld [vmem:[%s1 + $0x168] sm:$0xf]
      %v331 = vld [vmem:[%s1 + $0x16c] sm:$0xf]
      %v332 = vld [vmem:[%s1 + $0x170] sm:$0xf]
      %v333 = vld [vmem:[%s1 + $0x174] sm:$0xf]
      %v334 = vld [vmem:[%s1 + $0x178] sm:$0xf]
      %v335 = vld [vmem:[%s1 + $0x17c] sm:$0xf]
      %v336 = vld [vmem:[%s1 + $0x180] sm:$0xf]
      %v337 = vld [vmem:[%s1 + $0x184] sm:$0xf]
      %v338 = vld [vmem:[%s1 + $0x188] sm:$0xf]
      %v339 = vld [vmem:[%s1 + $0x18c] sm:$0xf]
      %v340 = vld [vmem:[%s2] sm:$0x1]
      %v342 = vlaneseq
      %v343 = vshrl.u32 %v342, 7
      %v344 = vsub.s32 0, %v343
      %v345 = vrot.slane %v340, %v344
      %v355 = vunpack.c.l.b16 %v232
      %v356 = vunpack.c.h.b16 %v232
      %v357 = vunpack.c.l.b16 %v233
      %v358 = vunpack.c.h.b16 %v233
      %v359 = vunpack.c.l.b16 %v234
      %v360 = vunpack.c.h.b16 %v234
      %v361 = vunpack.c.l.b16 %v235
      %v362 = vunpack.c.l.b16 %v236
      %v363 = vunpack.c.h.b16 %v236
      %v364 = vunpack.c.l.b16 %v237
      %v365 = vunpack.c.h.b16 %v237
      %v366 = vunpack.c.l.b16 %v238
      %v367 = vunpack.c.h.b16 %v238
      %v368 = vunpack.c.l.b16 %v239
      %v369 = vpack.c.b16 %v362, %v355
      %v370 = vpack.c.b16 %v363, %v356
      %v371 = vpack.c.b16 %v364, %v357
      %v372 = vpack.c.b16 %v365, %v358
      %v373 = vpack.c.b16 %v366, %v359
      %v374 = vpack.c.b16 %v367, %v360
      %v375 = vpack.c.b16 %v368, %v361
      %v482 = vunpack.c.l.b16 %v240
      %v483 = vunpack.c.l.b16 %v241
      %v484 = vunpack.c.l.b16 %v242
      %v485 = vunpack.c.l.b16 %v243
      %v486 = vunpack.c.l.b16 %v244
      %v487 = vunpack.c.l.b16 %v245
      %v488 = vunpack.c.l.b16 %v246
      %v489 = vunpack.c.l.b16 %v247
      %v490 = vunpack.c.l.b16 %v248
      %v491 = vunpack.c.l.b16 %v249
      %v492 = vunpack.c.l.b16 %v250
      %v493 = vunpack.c.l.b16 %v251
      %v494 = vunpack.c.l.b16 %v252
      %v495 = vunpack.c.l.b16 %v253
      %v496 = vunpack.c.l.b16 %v254
      %v497 = vunpack.c.l.b16 %v255
      %v498 = vunpack.c.l.b16 %v256
      %v499 = vunpack.c.l.b16 %v257
      %v500 = vunpack.c.l.b16 %v258
      %v501 = vunpack.c.l.b16 %v259
      %v502 = vunpack.c.l.b16 %v260
      %v503 = vunpack.c.l.b16 %v261
      %v504 = vunpack.c.l.b16 %v262
      %v505 = vunpack.c.l.b16 %v263
      %v506 = vunpack.c.l.b16 %v264
      %v507 = vunpack.c.l.b16 %v265
      %v508 = vunpack.c.l.b16 %v266
      %v509 = vunpack.c.l.b16 %v267
      %v510 = vunpack.c.l.b16 %v268
      %v511 = vunpack.c.l.b16 %v269
      %v512 = vunpack.c.l.b16 %v270
      %v513 = vunpack.c.l.b16 %v271
      %v514 = vunpack.c.l.b16 %v272
      %v515 = vunpack.c.l.b16 %v273
      %v516 = vunpack.c.l.b16 %v274
      %v517 = vunpack.c.l.b16 %v275
      %v518 = vunpack.c.l.b16 %v276
      %v519 = vunpack.c.l.b16 %v277
      %v520 = vunpack.c.l.b16 %v278
      %v521 = vunpack.c.l.b16 %v279
      %v522 = vunpack.c.l.b16 %v280
      %v523 = vunpack.c.l.b16 %v281
      %v524 = vunpack.c.l.b16 %v282
      %v525 = vunpack.c.l.b16 %v283
      %v526 = vunpack.c.l.b16 %v284
      %v527 = vunpack.c.l.b16 %v285
      %v528 = vunpack.c.l.b16 %v286
      %v529 = vunpack.c.l.b16 %v287
      %v530 = vunpack.c.l.b16 %v288
      %v531 = vunpack.c.l.b16 %v289
      %v532 = vunpack.c.l.b16 %v290
      %v533 = vunpack.c.l.b16 %v291
      %v534 = vunpack.c.l.b16 %v292
      %v535 = vunpack.c.l.b16 %v293
      %v536 = vunpack.c.l.b16 %v294
      %v537 = vunpack.c.l.b16 %v295
      %v538 = vunpack.c.l.b16 %v296
      %v539 = vunpack.c.l.b16 %v297
      %v540 = vunpack.c.l.b16 %v298
      %v541 = vunpack.c.l.b16 %v299
      %v542 = vunpack.c.l.b16 %v300
      %v543 = vunpack.c.l.b16 %v301
      %v544 = vunpack.c.l.b16 %v302
      %v545 = vunpack.c.l.b16 %v303
      %v546 = vunpack.c.l.b16 %v304
      %v547 = vunpack.c.l.b16 %v305
      %v548 = vunpack.c.l.b16 %v306
      %v549 = vunpack.c.l.b16 %v307
      %v550 = vunpack.c.l.b16 %v308
      %v551 = vunpack.c.l.b16 %v309
      %v552 = vunpack.c.l.b16 %v310
      %v553 = vunpack.c.l.b16 %v311
      %v554 = vunpack.c.l.b16 %v312
      %v555 = vunpack.c.l.b16 %v313
      %v556 = vunpack.c.l.b16 %v314
      %v557 = vunpack.c.l.b16 %v315
      %v558 = vunpack.c.l.b16 %v316
      %v559 = vunpack.c.l.b16 %v317
      %v560 = vunpack.c.l.b16 %v318
      %v561 = vunpack.c.l.b16 %v319
      %v562 = vunpack.c.l.b16 %v320
      %v563 = vunpack.c.l.b16 %v321
      %v564 = vunpack.c.l.b16 %v322
      %v565 = vunpack.c.l.b16 %v323
      %v566 = vunpack.c.l.b16 %v324
      %v567 = vunpack.c.l.b16 %v325
      %v568 = vunpack.c.l.b16 %v326
      %v569 = vunpack.c.l.b16 %v327
      %v570 = vunpack.c.l.b16 %v328
      %v571 = vunpack.c.l.b16 %v329
      %v572 = vunpack.c.l.b16 %v330
      %v573 = vunpack.c.l.b16 %v331
      %v574 = vunpack.c.l.b16 %v332
      %v575 = vunpack.c.l.b16 %v333
      %v576 = vunpack.c.l.b16 %v334
      %v577 = vunpack.c.l.b16 %v335
      %v578 = vunpack.c.l.b16 %v336
      %v579 = vunpack.c.l.b16 %v337
      %v580 = vunpack.c.l.b16 %v338
      %v581 = vunpack.c.l.b16 %v339
      %v582 = vpack.c.b16 %v483, %v482
      %v583 = vpack.c.b16 %v485, %v484
      %v584 = vpack.c.b16 %v487, %v486
      %v585 = vpack.c.b16 %v489, %v488
      %v586 = vpack.c.b16 %v491, %v490
      %v587 = vpack.c.b16 %v493, %v492
      %v588 = vpack.c.b16 %v495, %v494
      %v589 = vpack.c.b16 %v497, %v496
      %v590 = vpack.c.b16 %v499, %v498
      %v591 = vpack.c.b16 %v501, %v500
      %v592 = vpack.c.b16 %v503, %v502
      %v593 = vpack.c.b16 %v505, %v504
      %v594 = vpack.c.b16 %v507, %v506
      %v595 = vpack.c.b16 %v509, %v508
      %v596 = vpack.c.b16 %v511, %v510
      %v597 = vpack.c.b16 %v513, %v512
      %v598 = vpack.c.b16 %v515, %v514
      %v599 = vpack.c.b16 %v517, %v516
      %v600 = vpack.c.b16 %v519, %v518
      %v601 = vpack.c.b16 %v521, %v520
      %v602 = vpack.c.b16 %v523, %v522
      %v603 = vpack.c.b16 %v525, %v524
      %v604 = vpack.c.b16 %v527, %v526
      %v605 = vpack.c.b16 %v529, %v528
      %v606 = vpack.c.b16 %v531, %v530
      %v607 = vpack.c.b16 %v533, %v532
      %v608 = vpack.c.b16 %v535, %v534
      %v609 = vpack.c.b16 %v537, %v536
      %v610 = vpack.c.b16 %v539, %v538
      %v611 = vpack.c.b16 %v541, %v540
      %v612 = vpack.c.b16 %v543, %v542
      %v613 = vpack.c.b16 %v545, %v544
      %v614 = vpack.c.b16 %v547, %v546
      %v615 = vpack.c.b16 %v549, %v548
      %v616 = vpack.c.b16 %v551, %v550
      %v617 = vpack.c.b16 %v553, %v552
      %v618 = vpack.c.b16 %v555, %v554
      %v619 = vpack.c.b16 %v557, %v556
      %v620 = vpack.c.b16 %v559, %v558
      %v621 = vpack.c.b16 %v561, %v560
      %v622 = vpack.c.b16 %v563, %v562
      %v623 = vpack.c.b16 %v565, %v564
      %v624 = vpack.c.b16 %v567, %v566
      %v625 = vpack.c.b16 %v569, %v568
      %v626 = vpack.c.b16 %v571, %v570
      %v627 = vpack.c.b16 %v573, %v572
      %v628 = vpack.c.b16 %v575, %v574
      %v629 = vpack.c.b16 %v577, %v576
      %v630 = vpack.c.b16 %v579, %v578
      %v631 = vpack.c.b16 %v581, %v580
      %vm682 = vcmask 261120
      %v684 = vsel %vm682, %v375, 0
      %686 = vmatprep.subr.bf16.mxu0 0
      %687 = vmatpush1.bf16.msra.mxu0 %v582
      %688 = vmatprep.subr.bf16.mxu0 0
      %689 = vmatpush1.bf16.msra.mxu0 %v583
      %690 = vmatprep.subr.bf16.mxu0 0
      %691 = vmatpush1.bf16.msra.mxu0 %v584
      %692 = vmatprep.subr.bf16.mxu0 0
      %693 = vmatpush1.bf16.msra.mxu0 %v585
      %694 = vmatprep.subr.bf16.mxu0 0
      %695 = vmatpush1.bf16.msra.mxu0 %v586
      %696 = vmatprep.subr.bf16.mxu0 0
      %697 = vmatpush1.bf16.msra.mxu0 %v587
      %698 = vmatprep.subr.bf16.mxu0 0
      %699 = vmatpush1.bf16.msra.mxu0 %v588
      %700 = vmatprep.subr.bf16.mxu0 0
      %701 = vmatpush1.bf16.msra.mxu0 %v589
      %702 = vmatprep.subr.bf16.mxu0 0
      %703 = vmatpush1.bf16.msra.mxu0 %v590
      %704 = vmatprep.subr.bf16.mxu0 0
      %705 = vmatpush1.bf16.msra.mxu0 %v591
      %706 = vmatprep.subr.bf16.mxu0 0
      %707 = vmatpush1.bf16.msra.mxu0 %v592
      %708 = vmatprep.subr.bf16.mxu0 0
      %709 = vmatpush1.bf16.msra.mxu0 %v593
      %710 = vmatprep.subr.bf16.mxu0 0
      %711 = vmatpush1.bf16.msra.mxu0 %v594
      %712 = vmatprep.subr.bf16.mxu0 0
      %713 = vmatpush1.bf16.msra.mxu0 %v595
      %714 = vmatprep.subr.bf16.mxu0 0
      %715 = vmatpush1.bf16.msra.mxu0 %v596
      %716 = vmatprep.subr.bf16.mxu0 0
      %717 = vmatpush1.bf16.msra.mxu0 %v597
      %718 = vmatprep.mubr.bf16.mxu0 %v370
      %719 = vmatmul.mubr.bf16.gmra.mrb[0].mxu0 %v369
      %v720 = vpop.f32.mrb[0].mxu0
      %v721 = vadd.f32 %v345, %v720
      %v722 = vpop.f32.mrb[0].mxu0
      %v723 = vpop.f32.mrb[0].mxu0
      %v724 = vadd.f32 %v345, %v723
      %v725 = vpop.f32.mrb[0].mxu0
      %726 = vdwg.mxu0
      %727 = vmatprep.subr.bf16.mxu0 0
      %728 = vmatpush1.bf16.msra.mxu0 %v598
      %729 = vmatprep.subr.bf16.mxu0 0
      %730 = vmatpush1.bf16.msra.mxu0 %v599
      %731 = vmatprep.subr.bf16.mxu0 0
      %732 = vmatpush1.bf16.msra.mxu0 %v600
      %733 = vmatprep.subr.bf16.mxu0 0
      %734 = vmatpush1.bf16.msra.mxu0 %v601
      %735 = vmatprep.subr.bf16.mxu0 0
      %736 = vmatpush1.bf16.msra.mxu0 %v602
      %737 = vmatprep.subr.bf16.mxu0 0
      %738 = vmatpush1.bf16.msra.mxu0 %v603
      %739 = vmatprep.subr.bf16.mxu0 0
      %740 = vmatpush1.bf16.msra.mxu0 %v604
      %741 = vmatprep.subr.bf16.mxu0 0
      %742 = vmatpush1.bf16.msra.mxu0 %v605
      %743 = vmatprep.subr.bf16.mxu0 0
      %744 = vmatpush1.bf16.msra.mxu0 %v606
      %745 = vmatprep.subr.bf16.mxu0 0
      %746 = vmatpush1.bf16.msra.mxu0 %v607
      %747 = vmatprep.subr.bf16.mxu0 0
      %748 = vmatpush1.bf16.msra.mxu0 %v608
      %749 = vmatprep.subr.bf16.mxu0 0
      %750 = vmatpush1.bf16.msra.mxu0 %v609
      %751 = vmatprep.subr.bf16.mxu0 0
      %752 = vmatpush1.bf16.msra.mxu0 %v610
      %753 = vmatprep.subr.bf16.mxu0 0
      %754 = vmatpush1.bf16.msra.mxu0 %v611
      %755 = vmatprep.subr.bf16.mxu0 0
      %756 = vmatpush1.bf16.msra.mxu0 %v612
      %757 = vmatprep.subr.bf16.mxu0 0
      %758 = vmatpush1.bf16.msra.mxu0 %v613
      %759 = vmatprep.mubr.bf16.mxu0 %v372
      %760 = vmatmul.mubr.bf16.gmra.mrb[0].mxu0 %v371
      %v761 = vpop.f32.mrb[0].mxu0
      %v762 = vadd.f32 %v721, %v761
      %v763 = vpop.f32.mrb[0].mxu0
      %v764 = vpop.f32.mrb[0].mxu0
      %v765 = vadd.f32 %v724, %v764
      %v766 = vpop.f32.mrb[0].mxu0
      %767 = vdwg.mxu0
      %768 = vmatprep.subr.bf16.mxu0 0
      %769 = vmatpush1.bf16.msra.mxu0 %v614
      %770 = vmatprep.subr.bf16.mxu0 0
      %771 = vmatpush1.bf16.msra.mxu0 %v615
      %772 = vmatprep.subr.bf16.mxu0 0
      %773 = vmatpush1.bf16.msra.mxu0 %v616
      %774 = vmatprep.subr.bf16.mxu0 0
      %775 = vmatpush1.bf16.msra.mxu0 %v617
      %776 = vmatprep.subr.bf16.mxu0 0
      %777 = vmatpush1.bf16.msra.mxu0 %v618
      %778 = vmatprep.subr.bf16.mxu0 0
      %779 = vmatpush1.bf16.msra.mxu0 %v619
      %780 = vmatprep.subr.bf16.mxu0 0
      %781 = vmatpush1.bf16.msra.mxu0 %v620
      %782 = vmatprep.subr.bf16.mxu0 0
      %783 = vmatpush1.bf16.msra.mxu0 %v621
      %784 = vmatprep.subr.bf16.mxu0 0
      %785 = vmatpush1.bf16.msra.mxu0 %v622
      %786 = vmatprep.subr.bf16.mxu0 0
      %787 = vmatpush1.bf16.msra.mxu0 %v623
      %788 = vmatprep.subr.bf16.mxu0 0
      %789 = vmatpush1.bf16.msra.mxu0 %v624
      %790 = vmatprep.subr.bf16.mxu0 0
      %791 = vmatpush1.bf16.msra.mxu0 %v625
      %792 = vmatprep.subr.bf16.mxu0 0
      %793 = vmatpush1.bf16.msra.mxu0 %v626
      %794 = vmatprep.subr.bf16.mxu0 0
      %795 = vmatpush1.bf16.msra.mxu0 %v627
      %796 = vmatprep.subr.bf16.mxu0 0
      %797 = vmatpush1.bf16.msra.mxu0 %v628
      %798 = vmatprep.subr.bf16.mxu0 0
      %799 = vmatpush1.bf16.msra.mxu0 %v629
      %800 = vmatprep.mubr.bf16.mxu0 %v374
      %801 = vmatmul.mubr.bf16.gmra.mrb[0].mxu0 %v373
      %v802 = vpop.f32.mrb[0].mxu0
      %v803 = vadd.f32 %v762, %v802
      %v804 = vpop.f32.mrb[0].mxu0
      %v805 = vpop.f32.mrb[0].mxu0
      %v806 = vadd.f32 %v765, %v805
      %v807 = vpop.f32.mrb[0].mxu0
      %808 = vdwg.mxu0
      %809 = vmatprep.subr.bf16.mxu0 0
      %810 = vmatpush1.bf16.msra.mxu0 %v630
      %811 = vmatprep.subr.bf16.mxu0 0
      %812 = vmatpush1.bf16.msra.mxu0 %v631
      %813 = vmatprep.subr.bf16.mxu0 0
      %814 = vmatpush1.bf16.msra.mxu0 0
      %815 = vmatprep.subr.bf16.mxu0 0
      %816 = vmatpush1.bf16.msra.mxu0 0
      %817 = vmatprep.subr.bf16.mxu0 0
      %818 = vmatpush1.bf16.msra.mxu0 0
      %819 = vmatprep.subr.bf16.mxu0 0
      %820 = vmatpush1.bf16.msra.mxu0 0
      %821 = vmatprep.subr.bf16.mxu0 0
      %822 = vmatpush1.bf16.msra.mxu0 0
      %823 = vmatprep.subr.bf16.mxu0 0
      %824 = vmatpush1.bf16.msra.mxu0 0
      %825 = vmatprep.subr.bf16.mxu0 0
      %826 = vmatpush1.bf16.msra.mxu0 0
      %827 = vmatprep.subr.bf16.mxu0 0
      %828 = vmatpush1.bf16.msra.mxu0 0
      %829 = vmatprep.subr.bf16.mxu0 0
      %830 = vmatpush1.bf16.msra.mxu0 0
      %831 = vmatprep.subr.bf16.mxu0 0
      %832 = vmatpush1.bf16.msra.mxu0 0
      %833 = vmatprep.subr.bf16.mxu0 0
      %834 = vmatpush1.bf16.msra.mxu0 0
      %835 = vmatprep.subr.bf16.mxu0 0
      %836 = vmatpush1.bf16.msra.mxu0 0
      %837 = vmatprep.subr.bf16.mxu0 0
      %838 = vmatpush1.bf16.msra.mxu0 0
      %839 = vmatprep.subr.bf16.mxu0 0
      %840 = vmatpush1.bf16.msra.mxu0 0
      %841 = vmatprep.mubr.bf16.mxu0 0
      %842 = vmatmul.mubr.bf16.gmra.mrb[0].mxu0 %v684
      %v843 = vpop.f32.mrb[0].mxu0
      %v844 = vadd.f32 %v803, %v843
      %v845 = vpop.f32.mrb[0].mxu0
      %v846 = vpop.f32.mrb[0].mxu0
      %v847 = vadd.f32 %v806, %v846
      %v848 = vpop.f32.mrb[0].mxu0
      %849 = vdwg.mxu0
      %v850 = vmul.f32 %v844, %v844
      %v851 = vmul.f32 %v847, %v847
      %v852 = vld [vmem:[%s3] sm:$0xff]
      %v853 = vld [vmem:[%s3 + $0x8] sm:$0xff]
      %v854 = vld [vmem:[%s3 + $0x10] sm:$0xff]
      %v855 = vld [vmem:[%s3 + $0x18] sm:$0xff]
      %v856 = vld [vmem:[%s4] sm:$0x1]
      %v858 = vlaneseq
      %v859 = vshrl.u32 %v858, 7
      %v860 = vsub.s32 0, %v859
      %v861 = vrot.slane %v856, %v860
      %v864 = vsel %vm682, %v850, 0
      %v867 = vsel %vm682, %v851, 0
      %869 = vmatprep.subr.mxu0 0.0
      %870 = vmatpush1.msra.mxu0 %v852
      %871 = vmatprep.subr.mxu0 0.0
      %872 = vmatpush1.msra.mxu0 %v853
      %873 = vmatprep.subr.mxu0 0.0
      %874 = vmatpush1.msra.mxu0 %v854
      %875 = vmatprep.subr.mxu0 0.0
      %876 = vmatpush1.msra.mxu0 %v855
      %877 = vmatprep.subr.mxu0 0.0
      %878 = vmatpush1.msra.mxu0 0.0
      %879 = vmatprep.subr.mxu0 0.0
      %880 = vmatpush1.msra.mxu0 0.0
      %881 = vmatprep.subr.mxu0 0.0
      %882 = vmatpush1.msra.mxu0 0.0
      %883 = vmatprep.subr.mxu0 0.0
      %884 = vmatpush1.msra.mxu0 0.0
      %885 = vmatprep.subr.mxu0 0.0
      %886 = vmatpush1.msra.mxu0 0.0
      %887 = vmatprep.subr.mxu0 0.0
      %888 = vmatpush1.msra.mxu0 0.0
      %889 = vmatprep.subr.mxu0 0.0
      %890 = vmatpush1.msra.mxu0 0.0
      %891 = vmatprep.subr.mxu0 0.0
      %892 = vmatpush1.msra.mxu0 0.0
      %893 = vmatprep.subr.mxu0 0.0
      %894 = vmatpush1.msra.mxu0 0.0
      %895 = vmatprep.subr.mxu0 0.0
      %896 = vmatpush1.msra.mxu0 0.0
      %897 = vmatprep.subr.mxu0 0.0
      %898 = vmatpush1.msra.mxu0 0.0
      %899 = vmatprep.subr.mxu0 0.0
      %900 = vmatpush1.msra.mxu0 0.0
      %901 = vmatprep.subr.mxu0 0.0
      %902 = vmatpush1.msra.mxu0 0.0
      %903 = vmatprep.subr.mxu0 0.0
      %904 = vmatpush1.msra.mxu0 0.0
      %905 = vmatprep.subr.mxu0 0.0
      %906 = vmatpush1.msra.mxu0 0.0
      %907 = vmatprep.subr.mxu0 0.0
      %908 = vmatpush1.msra.mxu0 0.0
      %909 = vmatprep.subr.mxu0 0.0
      %910 = vmatpush1.msra.mxu0 0.0
      %911 = vmatprep.subr.mxu0 0.0
      %912 = vmatpush1.msra.mxu0 0.0
      %913 = vmatprep.subr.mxu0 0.0
      %914 = vmatpush1.msra.mxu0 0.0
      %915 = vmatprep.subr.mxu0 0.0
      %916 = vmatpush1.msra.mxu0 0.0
      %917 = vmatprep.subr.mxu0 0.0
      %918 = vmatpush1.msra.mxu0 0.0
      %919 = vmatprep.subr.mxu0 0.0
      %920 = vmatpush1.msra.mxu0 0.0
      %921 = vmatprep.subr.mxu0 0.0
      %922 = vmatpush1.msra.mxu0 0.0
      %923 = vmatprep.subr.mxu0 0.0
      %924 = vmatpush1.msra.mxu0 0.0
      %925 = vmatprep.subr.mxu0 0.0
      %926 = vmatpush1.msra.mxu0 0.0
      %927 = vmatprep.subr.mxu0 0.0
      %928 = vmatpush1.msra.mxu0 0.0
      %929 = vmatprep.subr.mxu0 0.0
      %930 = vmatpush1.msra.mxu0 0.0
      %931 = vmatprep.subr.mxu0 0.0
      %932 = vmatpush1.msra.mxu0 0.0
      %933 = vmatprep.mubr.f32.mxu0 0.0
      %934 = vmatmul.mubr.f32.gmra.mrb[0].mxu0 %v864
      %v935 = vpop.f32.mrb[0].mxu0
      %v936 = vadd.f32 %v861, %v935
      %v937 = vpop.f32.mrb[0].mxu0
      %938 = vmatprep.mubr.f32.mxu0 0.0
      %939 = vmatmul.mubr.f32.gmra.mrb[0].mxu0 %v867
      %v940 = vpop.f32.mrb[0].mxu0
      %v941 = vadd.f32 %v861, %v940
      %v942 = vpop.f32.mrb[0].mxu0
      %943 = vdwg.mxu0
      %v944 = vrsqrt.pop %v936
      %v945 = vrsqrt.pop %v941
      %v946 = vmul.f32 %v844, %v944
      %v947 = vmul.f32 %v847, %v945
      %948 = vst.msk [vmem:[%s229] sm:$0xff] %vm682, %v946
      %949 = vst.msk [vmem:[%s229 + $0x8] sm:$0xff] %vm682, %v947
      %s950 = smul.u32 2, %s16
      %p951 = scmp.lt.s32.totalorder %s950, 3
      %s952 = scalar_select %p951, %s950, 3
      %s953 = smul.addr %s952, 8
      %s954 = scalar_lea.vmem %s5, %s953
      // Predicated region
      $region41: #{edic_forward.9} parent=39 // pred_check
        %p955 = pneg %p144
      $region42: #{edic_forward.9} parent=39 // pred_check_branch
        %957 = sbr.rel (%p955) target = $region44
      $region43: #{edic_forward.9} parent=39 // pred_region
        %s958 = smul.u32 2, %s16
      $region44: #{edic_forward.9} parent=39 // pred_fallthru
        _
    $region40: #{edic_forward.9} parent=5 // pred_fallthru
      _
    %p959 = scmp.le.s32.totalorder 2, %s11
    // Predicated region
    $region45: #{edic_forward.9} parent=5 // pred_check
      %p960 = pneg %p959
    $region46: #{edic_forward.9} parent=5 // pred_check_branch
      %962 = sbr.rel (%p960) target = $region48
    $region47: #{edic_forward.9} parent=5 // pred_region
      %s963 = ssub.s32 %s11, 2
      // Predicated region
      $region49: #{edic_forward.9} parent=47 // pred_check
        %p964 = pneg %p150
      $region50: #{edic_forward.9} parent=47 // pred_check_branch
        %966 = sbr.rel (%p964) target = $region52
      $region51: #{edic_forward.9} parent=47 // pred_region
        %s967 = smul.u32 2, %s17
        %p968 = scmp.lt.s32.totalorder %s967, 3
        %s969 = scalar_select %p968, %s967, 3
        %s970 = smul.addr %s969, 8
        %s971 = scalar_lea.vmem %s5, %s970
      $region52: #{edic_forward.9} parent=47 // pred_fallthru
        _
    $region48: #{edic_forward.9} parent=5 // pred_fallthru
      _
  $region6: #{edic_forward.9} parent=0 // loop_footer
    %s15 = sadd.s32 1, %s11
  $region7: #{edic_forward.9} parent=0 // loop_footer_branch
    %10 = sbr.rel target = $region3
  $region8: #{edic_forward.9} parent=0 // loop_exit
    _

// kernel: edic_forward.10
$region0: #{edic_forward.10}
  #allocation0 [shape = 'u32[]', space=smem, size = 0x4, offset = 0x4, fixed_abs, tag = 'smem constant byte address 0x4 - core index']
  #allocation1 [shape = 'u32[144,128]{1,0:T(1,128)}', space=vmem, size = 0x12000, scoped, tag = 'internal scratch']
  %s0 = inlined_call_operand.vmem [shape: bf16[8,800], index: 0, kind: input, shape index: {}]
  %s1 = inlined_call_operand.vmem [shape: bf16[800,32], index: 1, kind: input, shape index: {}]
  %s2 = inlined_call_operand.vmem [shape: f32[1,32], index: 2, kind: input, shape index: {}]
  %s3 = inlined_call_operand.vmem [shape: f32[32,32], index: 3, kind: input, shape index: {}]
  %s4 = inlined_call_operand.vmem [shape: f32[1,32], index: 4, kind: input, shape index: {}]
  %s5 = inlined_call_operand.vmem [shape: f32[8,32], index: 5, kind: output, shape index: {}]
  %s6 = sld [smem:[#allocation0]]
  $region30: #{edic_forward.10} parent=0
    _
  %s8 = ssub.s32 1, %s6
  %s9 = scalar_select 0, %s8, %s6
  // Predicated region
  $region2: #{edic_forward.10} parent=0 // pred_check
    _
  $region3: #{edic_forward.10} parent=0 // pred_check_branch
    %11 = sbr.rel (0) target = $region5
  $region4: #{edic_forward.10} parent=0 // pred_region
    _
  $region5: #{edic_forward.10} parent=0 // pred_fallthru
    _
  // Predicated region
  $region6: #{edic_forward.10} parent=0 // pred_check
    _
  $region7: #{edic_forward.10} parent=0 // pred_check_branch
    %13 = sbr.rel (0) target = $region9
  $region8: #{edic_forward.10} parent=0 // pred_region
    _
  $region9: #{edic_forward.10} parent=0 // pred_fallthru
    _
  // Predicated region
  $region10: #{edic_forward.10} parent=0 // pred_check
    _
  $region11: #{edic_forward.10} parent=0 // pred_check_branch
    %15 = sbr.rel (0) target = $region13
  $region12: #{edic_forward.10} parent=0 // pred_region
    _
  $region13: #{edic_forward.10} parent=0 // pred_fallthru
    _
  // Predicated region
  $region14: #{edic_forward.10} parent=0 // pred_check
    _
  $region15: #{edic_forward.10} parent=0 // pred_check_branch
    %17 = sbr.rel (0) target = $region17
  $region16: #{edic_forward.10} parent=0 // pred_region
    _
  $region17: #{edic_forward.10} parent=0 // pred_fallthru
    _
  // Predicated region
  $region18: #{edic_forward.10} parent=0 // pred_check
    _
  $region19: #{edic_forward.10} parent=0 // pred_check_branch
    %19 = sbr.rel (0) target = $region21
  $region20: #{edic_forward.10} parent=0 // pred_region
    _
  $region21: #{edic_forward.10} parent=0 // pred_fallthru
    _
  %v21 = vld [vmem:[%s0] sm:$0xff]
  %v22 = vld [vmem:[%s0 + $0x8] sm:$0xff]
  %v23 = vld [vmem:[%s0 + $0x10] sm:$0xff]
  %v24 = vld [vmem:[%s0 + $0x18] sm:$0xf]
  %v25 = vld [vmem:[%s1] sm:$0xf]
  %v26 = vld [vmem:[%s1 + $0x4] sm:$0xf]
  %v27 = vld [vmem:[%s1 + $0x8] sm:$0xf]
  %v28 = vld [vmem:[%s1 + $0xc] sm:$0xf]
  %v29 = vld [vmem:[%s1 + $0x10] sm:$0xf]
  %v30 = vld [vmem:[%s1 + $0x14] sm:$0xf]
  %v31 = vld [vmem:[%s1 + $0x18] sm:$0xf]
  %v32 = vld [vmem:[%s1 + $0x1c] sm:$0xf]
  %v33 = vld [vmem:[%s1 + $0x20] sm:$0xf]
  %v34 = vld [vmem:[%s1 + $0x24] sm:$0xf]
  %v35 = vld [vmem:[%s1 + $0x28] sm:$0xf]
  %v36 = vld [vmem:[%s1 + $0x2c] sm:$0xf]
  %v37 = vld [vmem:[%s1 + $0x30] sm:$0xf]
  %v38 = vld [vmem:[%s1 + $0x34] sm:$0xf]
  %v39 = vld [vmem:[%s1 + $0x38] sm:$0xf]
  %v40 = vld [vmem:[%s1 + $0x3c] sm:$0xf]
  %v41 = vld [vmem:[%s1 + $0x40] sm:$0xf]
  %v42 = vld [vmem:[%s1 + $0x44] sm:$0xf]
  %v43 = vld [vmem:[%s1 + $0x48] sm:$0xf]
  %v44 = vld [vmem:[%s1 + $0x4c] sm:$0xf]
  %v45 = vld [vmem:[%s1 + $0x50] sm:$0xf]
  %v46 = vld [vmem:[%s1 + $0x54] sm:$0xf]
  %v47 = vld [vmem:[%s1 + $0x58] sm:$0xf]
  %v48 = vld [vmem:[%s1 + $0x5c] sm:$0xf]
  %v49 = vld [vmem:[%s1 + $0x60] sm:$0xf]
  %v50 = vld [vmem:[%s1 + $0x64] sm:$0xf]
  %v51 = vld [vmem:[%s1 + $0x68] sm:$0xf]
  %v52 = vld [vmem:[%s1 + $0x6c] sm:$0xf]
  %v53 = vld [vmem:[%s1 + $0x70] sm:$0xf]
  %v54 = vld [vmem:[%s1 + $0x74] sm:$0xf]
  %v55 = vld [vmem:[%s1 + $0x78] sm:$0xf]
  %v56 = vld [vmem:[%s1 + $0x7c] sm:$0xf]
  %v57 = vld [vmem:[%s1 + $0x80] sm:$0xf]
  %v58 = vld [vmem:[%s1 + $0x84] sm:$0xf]
  %v59 = vld [vmem:[%s1 + $0x88] sm:$0xf]
  %v60 = vld [vmem:[%s1 + $0x8c] sm:$0xf]
  %v61 = vld [vmem:[%s1 + $0x90] sm:$0xf]
  %v62 = vld [vmem:[%s1 + $0x94] sm:$0xf]
  %v63 = vld [vmem:[%s1 + $0x98] sm:$0xf]
  %v64 = vld [vmem:[%s1 + $0x9c] sm:$0xf]
  %v65 = vld [vmem:[%s1 + $0xa0] sm:$0xf]
  %v66 = vld [vmem:[%s1 + $0xa4] sm:$0xf]
  %v67 = vld [vmem:[%s1 + $0xa8] sm:$0xf]
  %v68 = vld [vmem:[%s1 + $0xac] sm:$0xf]
  %v69 = vld [vmem:[%s1 + $0xb0] sm:$0xf]
  %v70 = vld [vmem:[%s1 + $0xb4] sm:$0xf]
  %v71 = vld [vmem:[%s1 + $0xb8] sm:$0xf]
  %v72 = vld [vmem:[%s1 + $0xbc] sm:$0xf]
  %v73 = vld [vmem:[%s1 + $0xc0] sm:$0xf]
  %v74 = vld [vmem:[%s1 + $0xc4] sm:$0xf]
  %v75 = vld [vmem:[%s1 + $0xc8] sm:$0xf]
  %v76 = vld [vmem:[%s1 + $0xcc] sm:$0xf]
  %v77 = vld [vmem:[%s1 + $0xd0] sm:$0xf]
  %v78 = vld [vmem:[%s1 + $0xd4] sm:$0xf]
  %v79 = vld [vmem:[%s1 + $0xd8] sm:$0xf]
  %v80 = vld [vmem:[%s1 + $0xdc] sm:$0xf]
  %v81 = vld [vmem:[%s1 + $0xe0] sm:$0xf]
  %v82 = vld [vmem:[%s1 + $0xe4] sm:$0xf]
  %v83 = vld [vmem:[%s1 + $0xe8] sm:$0xf]
  %v84 = vld [vmem:[%s1 + $0xec] sm:$0xf]
  %v85 = vld [vmem:[%s1 + $0xf0] sm:$0xf]
  %v86 = vld [vmem:[%s1 + $0xf4] sm:$0xf]
  %v87 = vld [vmem:[%s1 + $0xf8] sm:$0xf]
  %v88 = vld [vmem:[%s1 + $0xfc] sm:$0xf]
  %v89 = vld [vmem:[%s1 + $0x100] sm:$0xf]
  %v90 = vld [vmem:[%s1 + $0x104] sm:$0xf]
  %v91 = vld [vmem:[%s1 + $0x108] sm:$0xf]
  %v92 = vld [vmem:[%s1 + $0x10c] sm:$0xf]
  %v93 = vld [vmem:[%s1 + $0x110] sm:$0xf]
  %v94 = vld [vmem:[%s1 + $0x114] sm:$0xf]
  %v95 = vld [vmem:[%s1 + $0x118] sm:$0xf]
  %v96 = vld [vmem:[%s1 + $0x11c] sm:$0xf]
  %v97 = vld [vmem:[%s1 + $0x120] sm:$0xf]
  %v98 = vld [vmem:[%s1 + $0x124] sm:$0xf]
  %v99 = vld [vmem:[%s1 + $0x128] sm:$0xf]
  %v100 = vld [vmem:[%s1 + $0x12c] sm:$0xf]
  %v101 = vld [vmem:[%s1 + $0x130] sm:$0xf]
  %v102 = vld [vmem:[%s1 + $0x134] sm:$0xf]
  %v103 = vld [vmem:[%s1 + $0x138] sm:$0xf]
  %v104 = vld [vmem:[%s1 + $0x13c] sm:$0xf]
  %v105 = vld [vmem:[%s1 + $0x140] sm:$0xf]
  %v106 = vld [vmem:[%s1 + $0x144] sm:$0xf]
  %v107 = vld [vmem:[%s1 + $0x148] sm:$0xf]
  %v108 = vld [vmem:[%s1 + $0x14c] sm:$0xf]
  %v109 = vld [vmem:[%s1 + $0x150] sm:$0xf]
  %v110 = vld [vmem:[%s1 + $0x154] sm:$0xf]
  %v111 = vld [vmem:[%s1 + $0x158] sm:$0xf]
  %v112 = vld [vmem:[%s1 + $0x15c] sm:$0xf]
  %v113 = vld [vmem:[%s1 + $0x160] sm:$0xf]
  %v114 = vld [vmem:[%s1 + $0x164] sm:$0xf]
  %v115 = vld [vmem:[%s1 + $0x168] sm:$0xf]
  %v116 = vld [vmem:[%s1 + $0x16c] sm:$0xf]
  %v117 = vld [vmem:[%s1 + $0x170] sm:$0xf]
  %v118 = vld [vmem:[%s1 + $0x174] sm:$0xf]
  %v119 = vld [vmem:[%s1 + $0x178] sm:$0xf]
  %v120 = vld [vmem:[%s1 + $0x17c] sm:$0xf]
  %v121 = vld [vmem:[%s1 + $0x180] sm:$0xf]
  %v122 = vld [vmem:[%s1 + $0x184] sm:$0xf]
  %v123 = vld [vmem:[%s1 + $0x188] sm:$0xf]
  %v124 = vld [vmem:[%s1 + $0x18c] sm:$0xf]
  %v125 = vld [vmem:[%s2] sm:$0x1]
  %v127 = vlaneseq
  %v128 = vshrl.u32 %v127, 7
  %v129 = vsub.s32 0, %v128
  %v130 = vrot.slane %v125, %v129
  %v136 = vunpack.c.l.b16 %v21
  %v137 = vunpack.c.h.b16 %v21
  %v138 = vunpack.c.l.b16 %v22
  %v139 = vunpack.c.h.b16 %v22
  %v140 = vunpack.c.l.b16 %v23
  %v141 = vunpack.c.h.b16 %v23
  %v142 = vunpack.c.l.b16 %v24
  %v143 = vpack.c.b16 %v136, %v136
  %v144 = vpack.c.b16 %v137, %v137
  %v145 = vpack.c.b16 %v138, %v138
  %v146 = vpack.c.b16 %v139, %v139
  %v147 = vpack.c.b16 %v140, %v140
  %v148 = vpack.c.b16 %v141, %v141
  %v149 = vpack.c.b16 %v142, %v142
  %v256 = vunpack.c.l.b16 %v25
  %v257 = vunpack.c.l.b16 %v26
  %v258 = vunpack.c.l.b16 %v27
  %v259 = vunpack.c.l.b16 %v28
  %v260 = vunpack.c.l.b16 %v29
  %v261 = vunpack.c.l.b16 %v30
  %v262 = vunpack.c.l.b16 %v31
  %v263 = vunpack.c.l.b16 %v32
  %v264 = vunpack.c.l.b16 %v33
  %v265 = vunpack.c.l.b16 %v34
  %v266 = vunpack.c.l.b16 %v35
  %v267 = vunpack.c.l.b16 %v36
  %v268 = vunpack.c.l.b16 %v37
  %v269 = vunpack.c.l.b16 %v38
  %v270 = vunpack.c.l.b16 %v39
  %v271 = vunpack.c.l.b16 %v40
  %v272 = vunpack.c.l.b16 %v41
  %v273 = vunpack.c.l.b16 %v42
  %v274 = vunpack.c.l.b16 %v43
  %v275 = vunpack.c.l.b16 %v44
  %v276 = vunpack.c.l.b16 %v45
  %v277 = vunpack.c.l.b16 %v46
  %v278 = vunpack.c.l.b16 %v47
  %v279 = vunpack.c.l.b16 %v48
  %v280 = vunpack.c.l.b16 %v49
  %v281 = vunpack.c.l.b16 %v50
  %v282 = vunpack.c.l.b16 %v51
  %v283 = vunpack.c.l.b16 %v52
  %v284 = vunpack.c.l.b16 %v53
  %v285 = vunpack.c.l.b16 %v54
  %v286 = vunpack.c.l.b16 %v55
  %v287 = vunpack.c.l.b16 %v56
  %v288 = vunpack.c.l.b16 %v57
  %v289 = vunpack.c.l.b16 %v58
  %v290 = vunpack.c.l.b16 %v59
  %v291 = vunpack.c.l.b16 %v60
  %v292 = vunpack.c.l.b16 %v61
  %v293 = vunpack.c.l.b16 %v62
  %v294 = vunpack.c.l.b16 %v63
  %v295 = vunpack.c.l.b16 %v64
  %v296 = vunpack.c.l.b16 %v65
  %v297 = vunpack.c.l.b16 %v66
  %v298 = vunpack.c.l.b16 %v67
  %v299 = vunpack.c.l.b16 %v68
  %v300 = vunpack.c.l.b16 %v69
  %v301 = vunpack.c.l.b16 %v70
  %v302 = vunpack.c.l.b16 %v71
  %v303 = vunpack.c.l.b16 %v72
  %v304 = vunpack.c.l.b16 %v73
  %v305 = vunpack.c.l.b16 %v74
  %v306 = vunpack.c.l.b16 %v75
  %v307 = vunpack.c.l.b16 %v76
  %v308 = vunpack.c.l.b16 %v77
  %v309 = vunpack.c.l.b16 %v78
  %v310 = vunpack.c.l.b16 %v79
  %v311 = vunpack.c.l.b16 %v80
  %v312 = vunpack.c.l.b16 %v81
  %v313 = vunpack.c.l.b16 %v82
  %v314 = vunpack.c.l.b16 %v83
  %v315 = vunpack.c.l.b16 %v84
  %v316 = vunpack.c.l.b16 %v85
  %v317 = vunpack.c.l.b16 %v86
  %v318 = vunpack.c.l.b16 %v87
  %v319 = vunpack.c.l.b16 %v88
  %v320 = vunpack.c.l.b16 %v89
  %v321 = vunpack.c.l.b16 %v90
  %v322 = vunpack.c.l.b16 %v91
  %v323 = vunpack.c.l.b16 %v92
  %v324 = vunpack.c.l.b16 %v93
  %v325 = vunpack.c.l.b16 %v94
  %v326 = vunpack.c.l.b16 %v95
  %v327 = vunpack.c.l.b16 %v96
  %v328 = vunpack.c.l.b16 %v97
  %v329 = vunpack.c.l.b16 %v98
  %v330 = vunpack.c.l.b16 %v99
  %v331 = vunpack.c.l.b16 %v100
  %v332 = vunpack.c.l.b16 %v101
  %v333 = vunpack.c.l.b16 %v102
  %v334 = vunpack.c.l.b16 %v103
  %v335 = vunpack.c.l.b16 %v104
  %v336 = vunpack.c.l.b16 %v105
  %v337 = vunpack.c.l.b16 %v106
  %v338 = vunpack.c.l.b16 %v107
  %v339 = vunpack.c.l.b16 %v108
  %v340 = vunpack.c.l.b16 %v109
  %v341 = vunpack.c.l.b16 %v110
  %v342 = vunpack.c.l.b16 %v111
  %v343 = vunpack.c.l.b16 %v112
  %v344 = vunpack.c.l.b16 %v113
  %v345 = vunpack.c.l.b16 %v114
  %v346 = vunpack.c.l.b16 %v115
  %v347 = vunpack.c.l.b16 %v116
  %v348 = vunpack.c.l.b16 %v117
  %v349 = vunpack.c.l.b16 %v118
  %v350 = vunpack.c.l.b16 %v119
  %v351 = vunpack.c.l.b16 %v120
  %v352 = vunpack.c.l.b16 %v121
  %v353 = vunpack.c.l.b16 %v122
  %v354 = vunpack.c.l.b16 %v123
  %v355 = vunpack.c.l.b16 %v124
  %v356 = vpack.c.b16 %v257, %v256
  %v357 = vpack.c.b16 %v259, %v258
  %v358 = vpack.c.b16 %v261, %v260
  %v359 = vpack.c.b16 %v263, %v262
  %v360 = vpack.c.b16 %v265, %v264
  %v361 = vpack.c.b16 %v267, %v266
  %v362 = vpack.c.b16 %v269, %v268
  %v363 = vpack.c.b16 %v271, %v270
  %v364 = vpack.c.b16 %v273, %v272
  %v365 = vpack.c.b16 %v275, %v274
  %v366 = vpack.c.b16 %v277, %v276
  %v367 = vpack.c.b16 %v279, %v278
  %v368 = vpack.c.b16 %v281, %v280
  %v369 = vpack.c.b16 %v283, %v282
  %v370 = vpack.c.b16 %v285, %v284
  %v371 = vpack.c.b16 %v287, %v286
  %v372 = vpack.c.b16 %v289, %v288
  %v373 = vpack.c.b16 %v291, %v290
  %v374 = vpack.c.b16 %v293, %v292
  %v375 = vpack.c.b16 %v295, %v294
  %v376 = vpack.c.b16 %v297, %v296
  %v377 = vpack.c.b16 %v299, %v298
  %v378 = vpack.c.b16 %v301, %v300
  %v379 = vpack.c.b16 %v303, %v302
  %v380 = vpack.c.b16 %v305, %v304
  %v381 = vpack.c.b16 %v307, %v306
  %v382 = vpack.c.b16 %v309, %v308
  %v383 = vpack.c.b16 %v311, %v310
  %v384 = vpack.c.b16 %v313, %v312
  %v385 = vpack.c.b16 %v315, %v314
  %v386 = vpack.c.b16 %v317, %v316
  %v387 = vpack.c.b16 %v319, %v318
  %v388 = vpack.c.b16 %v321, %v320
  %v389 = vpack.c.b16 %v323, %v322
  %v390 = vpack.c.b16 %v325, %v324
  %v391 = vpack.c.b16 %v327, %v326
  %v392 = vpack.c.b16 %v329, %v328
  %v393 = vpack.c.b16 %v331, %v330
  %v394 = vpack.c.b16 %v333, %v332
  %v395 = vpack.c.b16 %v335, %v334
  %v396 = vpack.c.b16 %v337, %v336
  %v397 = vpack.c.b16 %v339, %v338
  %v398 = vpack.c.b16 %v341, %v340
  %v399 = vpack.c.b16 %v343, %v342
  %v400 = vpack.c.b16 %v345, %v344
  %v401 = vpack.c.b16 %v347, %v346
  %v402 = vpack.c.b16 %v349, %v348
  %v403 = vpack.c.b16 %v351, %v350
  %v404 = vpack.c.b16 %v353, %v352
  %v405 = vpack.c.b16 %v355, %v354
  %vm456 = vcmask 261120
  %v458 = vsel %vm456, %v149, 0
  %460 = vmatprep.subr.bf16.mxu0 0
  %461 = vmatpush1.bf16.msra.mxu0 %v356
  %462 = vmatprep.subr.bf16.mxu0 0
  %463 = vmatpush1.bf16.msra.mxu0 %v357
  %464 = vmatprep.subr.bf16.mxu0 0
  %465 = vmatpush1.bf16.msra.mxu0 %v358
  %466 = vmatprep.subr.bf16.mxu0 0
  %467 = vmatpush1.bf16.msra.mxu0 %v359
  %468 = vmatprep.subr.bf16.mxu0 0
  %469 = vmatpush1.bf16.msra.mxu0 %v360
  %470 = vmatprep.subr.bf16.mxu0 0
  %471 = vmatpush1.bf16.msra.mxu0 %v361
  %472 = vmatprep.subr.bf16.mxu0 0
  %473 = vmatpush1.bf16.msra.mxu0 %v362
  %474 = vmatprep.subr.bf16.mxu0 0
  %475 = vmatpush1.bf16.msra.mxu0 %v363
  %476 = vmatprep.subr.bf16.mxu0 0
  %477 = vmatpush1.bf16.msra.mxu0 %v364
  %478 = vmatprep.subr.bf16.mxu0 0
  %479 = vmatpush1.bf16.msra.mxu0 %v365
  %480 = vmatprep.subr.bf16.mxu0 0
  %481 = vmatpush1.bf16.msra.mxu0 %v366
  %482 = vmatprep.subr.bf16.mxu0 0
  %483 = vmatpush1.bf16.msra.mxu0 %v367
  %484 = vmatprep.subr.bf16.mxu0 0
  %485 = vmatpush1.bf16.msra.mxu0 %v368
  %486 = vmatprep.subr.bf16.mxu0 0
  %487 = vmatpush1.bf16.msra.mxu0 %v369
  %488 = vmatprep.subr.bf16.mxu0 0
  %489 = vmatpush1.bf16.msra.mxu0 %v370
  %490 = vmatprep.subr.bf16.mxu0 0
  %491 = vmatpush1.bf16.msra.mxu0 %v371
  %492 = vmatprep.mubr.bf16.mxu0 %v144
  %493 = vmatmul.mubr.bf16.gmra.mrb[0].mxu0 %v143
  %v494 = vpop.f32.mrb[0].mxu0
  %v495 = vadd.f32 %v130, %v494
  %v496 = vpop.f32.mrb[0].mxu0
  %v497 = vpop.f32.mrb[0].mxu0
  %v498 = vpop.f32.mrb[0].mxu0
  %499 = vdwg.mxu0
  %500 = vmatprep.subr.bf16.mxu0 0
  %501 = vmatpush1.bf16.msra.mxu0 %v372
  %502 = vmatprep.subr.bf16.mxu0 0
  %503 = vmatpush1.bf16.msra.mxu0 %v373
  %504 = vmatprep.subr.bf16.mxu0 0
  %505 = vmatpush1.bf16.msra.mxu0 %v374
  %506 = vmatprep.subr.bf16.mxu0 0
  %507 = vmatpush1.bf16.msra.mxu0 %v375
  %508 = vmatprep.subr.bf16.mxu0 0
  %509 = vmatpush1.bf16.msra.mxu0 %v376
  %510 = vmatprep.subr.bf16.mxu0 0
  %511 = vmatpush1.bf16.msra.mxu0 %v377
  %512 = vmatprep.subr.bf16.mxu0 0
  %513 = vmatpush1.bf16.msra.mxu0 %v378
  %514 = vmatprep.subr.bf16.mxu0 0
  %515 = vmatpush1.bf16.msra.mxu0 %v379
  %516 = vmatprep.subr.bf16.mxu0 0
  %517 = vmatpush1.bf16.msra.mxu0 %v380
  %518 = vmatprep.subr.bf16.mxu0 0
  %519 = vmatpush1.bf16.msra.mxu0 %v381
  %520 = vmatprep.subr.bf16.mxu0 0
  %521 = vmatpush1.bf16.msra.mxu0 %v382
  %522 = vmatprep.subr.bf16.mxu0 0
  %523 = vmatpush1.bf16.msra.mxu0 %v383
  %524 = vmatprep.subr.bf16.mxu0 0
  %525 = vmatpush1.bf16.msra.mxu0 %v384
  %526 = vmatprep.subr.bf16.mxu0 0
  %527 = vmatpush1.bf16.msra.mxu0 %v385
  %528 = vmatprep.subr.bf16.mxu0 0
  %529 = vmatpush1.bf16.msra.mxu0 %v386
  %530 = vmatprep.subr.bf16.mxu0 0
  %531 = vmatpush1.bf16.msra.mxu0 %v387
  %532 = vmatprep.mubr.bf16.mxu0 %v146
  %533 = vmatmul.mubr.bf16.gmra.mrb[0].mxu0 %v145
  %v534 = vpop.f32.mrb[0].mxu0
  %v535 = vadd.f32 %v495, %v534
  %v536 = vpop.f32.mrb[0].mxu0
  %v537 = vpop.f32.mrb[0].mxu0
  %v538 = vpop.f32.mrb[0].mxu0
  %539 = vdwg.mxu0
  %540 = vmatprep.subr.bf16.mxu0 0
  %541 = vmatpush1.bf16.msra.mxu0 %v388
  %542 = vmatprep.subr.bf16.mxu0 0
  %543 = vmatpush1.bf16.msra.mxu0 %v389
  %544 = vmatprep.subr.bf16.mxu0 0
  %545 = vmatpush1.bf16.msra.mxu0 %v390
  %546 = vmatprep.subr.bf16.mxu0 0
  %547 = vmatpush1.bf16.msra.mxu0 %v391
  %548 = vmatprep.subr.bf16.mxu0 0
  %549 = vmatpush1.bf16.msra.mxu0 %v392
  %550 = vmatprep.subr.bf16.mxu0 0
  %551 = vmatpush1.bf16.msra.mxu0 %v393
  %552 = vmatprep.subr.bf16.mxu0 0
  %553 = vmatpush1.bf16.msra.mxu0 %v394
  %554 = vmatprep.subr.bf16.mxu0 0
  %555 = vmatpush1.bf16.msra.mxu0 %v395
  %556 = vmatprep.subr.bf16.mxu0 0
  %557 = vmatpush1.bf16.msra.mxu0 %v396
  %558 = vmatprep.subr.bf16.mxu0 0
  %559 = vmatpush1.bf16.msra.mxu0 %v397
  %560 = vmatprep.subr.bf16.mxu0 0
  %561 = vmatpush1.bf16.msra.mxu0 %v398
  %562 = vmatprep.subr.bf16.mxu0 0
  %563 = vmatpush1.bf16.msra.mxu0 %v399
  %564 = vmatprep.subr.bf16.mxu0 0
  %565 = vmatpush1.bf16.msra.mxu0 %v400
  %566 = vmatprep.subr.bf16.mxu0 0
  %567 = vmatpush1.bf16.msra.mxu0 %v401
  %568 = vmatprep.subr.bf16.mxu0 0
  %569 = vmatpush1.bf16.msra.mxu0 %v402
  %570 = vmatprep.subr.bf16.mxu0 0
  %571 = vmatpush1.bf16.msra.mxu0 %v403
  %572 = vmatprep.mubr.bf16.mxu0 %v148
  %573 = vmatmul.mubr.bf16.gmra.mrb[0].mxu0 %v147
  %v574 = vpop.f32.mrb[0].mxu0
  %v575 = vadd.f32 %v535, %v574
  %v576 = vpop.f32.mrb[0].mxu0
  %v577 = vpop.f32.mrb[0].mxu0
  %v578 = vpop.f32.mrb[0].mxu0
  %579 = vdwg.mxu0
  %580 = vmatprep.subr.bf16.mxu0 0
  %581 = vmatpush1.bf16.msra.mxu0 %v404
  %582 = vmatprep.subr.bf16.mxu0 0
  %583 = vmatpush1.bf16.msra.mxu0 %v405
  %584 = vmatprep.subr.bf16.mxu0 0
  %585 = vmatpush1.bf16.msra.mxu0 0
  %586 = vmatprep.subr.bf16.mxu0 0
  %587 = vmatpush1.bf16.msra.mxu0 0
  %588 = vmatprep.subr.bf16.mxu0 0
  %589 = vmatpush1.bf16.msra.mxu0 0
  %590 = vmatprep.subr.bf16.mxu0 0
  %591 = vmatpush1.bf16.msra.mxu0 0
  %592 = vmatprep.subr.bf16.mxu0 0
  %593 = vmatpush1.bf16.msra.mxu0 0
  %594 = vmatprep.subr.bf16.mxu0 0
  %595 = vmatpush1.bf16.msra.mxu0 0
  %596 = vmatprep.subr.bf16.mxu0 0
  %597 = vmatpush1.bf16.msra.mxu0 0
  %598 = vmatprep.subr.bf16.mxu0 0
  %599 = vmatpush1.bf16.msra.mxu0 0
  %600 = vmatprep.subr.bf16.mxu0 0
  %601 = vmatpush1.bf16.msra.mxu0 0
  %602 = vmatprep.subr.bf16.mxu0 0
  %603 = vmatpush1.bf16.msra.mxu0 0
  %604 = vmatprep.subr.bf16.mxu0 0
  %605 = vmatpush1.bf16.msra.mxu0 0
  %606 = vmatprep.subr.bf16.mxu0 0
  %607 = vmatpush1.bf16.msra.mxu0 0
  %608 = vmatprep.subr.bf16.mxu0 0
  %609 = vmatpush1.bf16.msra.mxu0 0
  %610 = vmatprep.subr.bf16.mxu0 0
  %611 = vmatpush1.bf16.msra.mxu0 0
  %612 = vmatprep.mubr.bf16.mxu0 0
  %613 = vmatmul.mubr.bf16.gmra.mrb[0].mxu0 %v458
  %v614 = vpop.f32.mrb[0].mxu0
  %v615 = vadd.f32 %v575, %v614
  %v616 = vpop.f32.mrb[0].mxu0
  %v617 = vpop.f32.mrb[0].mxu0
  %v618 = vpop.f32.mrb[0].mxu0
  %619 = vdwg.mxu0
  %v620 = vmul.f32 %v615, %v615
  %v621 = vld [vmem:[%s3] sm:$0xff]
  %v622 = vld [vmem:[%s3 + $0x8] sm:$0xff]
  %v623 = vld [vmem:[%s3 + $0x10] sm:$0xff]
  %v624 = vld [vmem:[%s3 + $0x18] sm:$0xff]
  %v625 = vld [vmem:[%s4] sm:$0x1]
  %v627 = vlaneseq
  %v628 = vshrl.u32 %v627, 7
  %v629 = vsub.s32 0, %v628
  %v630 = vrot.slane %v625, %v629
  %v633 = vsel %vm456, %v620, 0
  %635 = vmatprep.subr.mxu0 0.0
  %636 = vmatpush1.msra.mxu0 %v621
  %637 = vmatprep.subr.mxu0 0.0
  %638 = vmatpush1.msra.mxu0 %v622
  %639 = vmatprep.subr.mxu0 0.0
  %640 = vmatpush1.msra.mxu0 %v623
  %641 = vmatprep.subr.mxu0 0.0
  %642 = vmatpush1.msra.mxu0 %v624
  %643 = vmatprep.subr.mxu0 0.0
  %644 = vmatpush1.msra.mxu0 0.0
  %645 = vmatprep.subr.mxu0 0.0
  %646 = vmatpush1.msra.mxu0 0.0
  %647 = vmatprep.subr.mxu0 0.0
  %648 = vmatpush1.msra.mxu0 0.0
  %649 = vmatprep.subr.mxu0 0.0
  %650 = vmatpush1.msra.mxu0 0.0
  %651 = vmatprep.subr.mxu0 0.0
  %652 = vmatpush1.msra.mxu0 0.0
  %653 = vmatprep.subr.mxu0 0.0
  %654 = vmatpush1.msra.mxu0 0.0
  %655 = vmatprep.subr.mxu0 0.0
  %656 = vmatpush1.msra.mxu0 0.0
  %657 = vmatprep.subr.mxu0 0.0
  %658 = vmatpush1.msra.mxu0 0.0
  %659 = vmatprep.subr.mxu0 0.0
  %660 = vmatpush1.msra.mxu0 0.0
  %661 = vmatprep.subr.mxu0 0.0
  %662 = vmatpush1.msra.mxu0 0.0
  %663 = vmatprep.subr.mxu0 0.0
  %664 = vmatpush1.msra.mxu0 0.0
  %665 = vmatprep.subr.mxu0 0.0
  %666 = vmatpush1.msra.mxu0 0.0
  %667 = vmatprep.subr.mxu0 0.0
  %668 = vmatpush1.msra.mxu0 0.0
  %669 = vmatprep.subr.mxu0 0.0
  %670 = vmatpush1.msra.mxu0 0.0
  %671 = vmatprep.subr.mxu0 0.0
  %672 = vmatpush1.msra.mxu0 0.0
  %673 = vmatprep.subr.mxu0 0.0
  %674 = vmatpush1.msra.mxu0 0.0
  %675 = vmatprep.subr.mxu0 0.0
  %676 = vmatpush1.msra.mxu0 0.0
  %677 = vmatprep.subr.mxu0 0.0
  %678 = vmatpush1.msra.mxu0 0.0
  %679 = vmatprep.subr.mxu0 0.0
  %680 = vmatpush1.msra.mxu0 0.0
  %681 = vmatprep.subr.mxu0 0.0
  %682 = vmatpush1.msra.mxu0 0.0
  %683 = vmatprep.subr.mxu0 0.0
  %684 = vmatpush1.msra.mxu0 0.0
  %685 = vmatprep.subr.mxu0 0.0
  %686 = vmatpush1.msra.mxu0 0.0
  %687 = vmatprep.subr.mxu0 0.0
  %688 = vmatpush1.msra.mxu0 0.0
  %689 = vmatprep.subr.mxu0 0.0
  %690 = vmatpush1.msra.mxu0 0.0
  %691 = vmatprep.subr.mxu0 0.0
  %692 = vmatpush1.msra.mxu0 0.0
  %693 = vmatprep.subr.mxu0 0.0
  %694 = vmatpush1.msra.mxu0 0.0
  %695 = vmatprep.subr.mxu0 0.0
  %696 = vmatpush1.msra.mxu0 0.0
  %697 = vmatprep.subr.mxu0 0.0
  %698 = vmatpush1.msra.mxu0 0.0
  %699 = vmatprep.mubr.f32.mxu0 0.0
  %700 = vmatmul.mubr.f32.gmra.mrb[0].mxu0 %v633
  %v701 = vpop.f32.mrb[0].mxu0
  %v702 = vadd.f32 %v630, %v701
  %v703 = vpop.f32.mrb[0].mxu0
  %704 = vdwg.mxu0
  %v705 = vrsqrt.pop %v702
  %v706 = vmul.f32 %v615, %v705
  %707 = vst.msk [vmem:[%s5] sm:$0xff] %vm456, %v706
  // Predicated region
  $region22: #{edic_forward.10} parent=0 // pred_check
    _
  $region23: #{edic_forward.10} parent=0 // pred_check_branch
    %709 = sbr.rel (0) target = $region25
  $region24: #{edic_forward.10} parent=0 // pred_region
    _
  $region25: #{edic_forward.10} parent=0 // pred_fallthru
    _
  // Predicated region
  $region26: #{edic_forward.10} parent=0 // pred_check
    _
  $region27: #{edic_forward.10} parent=0 // pred_check_branch
    %711 = sbr.rel (0) target = $region29
  $region28: #{edic_forward.10} parent=0 // pred_region
    _
  $region29: #{edic_forward.10} parent=0 // pred_fallthru
    _

// kernel: edic_forward.11
$region0: #{edic_forward.11}
  #allocation0 [shape = 'u32[]', space=smem, size = 0x4, offset = 0x4, fixed_abs, tag = 'smem constant byte address 0x4 - core index']
  #allocation1 [shape = 'u32[144,128]{1,0:T(1,128)}', space=vmem, size = 0x12000, scoped, tag = 'internal scratch']
  %s0 = inlined_call_operand.vmem [shape: bf16[8,800], index: 0, kind: input, shape index: {}]
  %s1 = inlined_call_operand.vmem [shape: bf16[800,48], index: 1, kind: input, shape index: {}]
  %s2 = inlined_call_operand.vmem [shape: f32[1,48], index: 2, kind: input, shape index: {}]
  %s3 = inlined_call_operand.vmem [shape: f32[8,48], index: 3, kind: output, shape index: {}]
  %s4 = sld [smem:[#allocation0]]
  $region22: #{edic_forward.11} parent=0
    _
  %s6 = ssub.s32 1, %s4
  %s7 = scalar_select 0, %s6, %s4
  // Predicated region
  $region2: #{edic_forward.11} parent=0 // pred_check
    _
  $region3: #{edic_forward.11} parent=0 // pred_check_branch
    %9 = sbr.rel (0) target = $region5
  $region4: #{edic_forward.11} parent=0 // pred_region
    _
  $region5: #{edic_forward.11} parent=0 // pred_fallthru
    _
  // Predicated region
  $region6: #{edic_forward.11} parent=0 // pred_check
    _
  $region7: #{edic_forward.11} parent=0 // pred_check_branch
    %11 = sbr.rel (0) target = $region9
  $region8: #{edic_forward.11} parent=0 // pred_region
    _
  $region9: #{edic_forward.11} parent=0 // pred_fallthru
    _
  // Predicated region
  $region10: #{edic_forward.11} parent=0 // pred_check
    _
  $region11: #{edic_forward.11} parent=0 // pred_check_branch
    %13 = sbr.rel (0) target = $region13
  $region12: #{edic_forward.11} parent=0 // pred_region
    _
  $region13: #{edic_forward.11} parent=0 // pred_fallthru
    _
  %v15 = vld [vmem:[%s0] sm:$0xff]
  %v16 = vld [vmem:[%s0 + $0x8] sm:$0xff]
  %v17 = vld [vmem:[%s0 + $0x10] sm:$0xff]
  %v18 = vld [vmem:[%s0 + $0x18] sm:$0xf]
  %v19 = vld [vmem:[%s1] sm:$0xf]
  %v20 = vld [vmem:[%s1 + $0x4] sm:$0xf]
  %v21 = vld [vmem:[%s1 + $0x8] sm:$0xf]
  %v22 = vld [vmem:[%s1 + $0xc] sm:$0xf]
  %v23 = vld [vmem:[%s1 + $0x10] sm:$0xf]
  %v24 = vld [vmem:[%s1 + $0x14] sm:$0xf]
  %v25 = vld [vmem:[%s1 + $0x18] sm:$0xf]
  %v26 = vld [vmem:[%s1 + $0x1c] sm:$0xf]
  %v27 = vld [vmem:[%s1 + $0x20] sm:$0xf]
  %v28 = vld [vmem:[%s1 + $0x24] sm:$0xf]
  %v29 = vld [vmem:[%s1 + $0x28] sm:$0xf]
  %v30 = vld [vmem:[%s1 + $0x2c] sm:$0xf]
  %v31 = vld [vmem:[%s1 + $0x30] sm:$0xf]
  %v32 = vld [vmem:[%s1 + $0x34] sm:$0xf]
  %v33 = vld [vmem:[%s1 + $0x38] sm:$0xf]
  %v34 = vld [vmem:[%s1 + $0x3c] sm:$0xf]
  %v35 = vld [vmem:[%s1 + $0x40] sm:$0xf]
  %v36 = vld [vmem:[%s1 + $0x44] sm:$0xf]
  %v37 = vld [vmem:[%s1 + $0x48] sm:$0xf]
  %v38 = vld [vmem:[%s1 + $0x4c] sm:$0xf]
  %v39 = vld [vmem:[%s1 + $0x50] sm:$0xf]
  %v40 = vld [vmem:[%s1 + $0x54] sm:$0xf]
  %v41 = vld [vmem:[%s1 + $0x58] sm:$0xf]
  %v42 = vld [vmem:[%s1 + $0x5c] sm:$0xf]
  %v43 = vld [vmem:[%s1 + $0x60] sm:$0xf]
  %v44 = vld [vmem:[%s1 + $0x64] sm:$0xf]
  %v45 = vld [vmem:[%s1 + $0x68] sm:$0xf]
  %v46 = vld [vmem:[%s1 + $0x6c] sm:$0xf]
  %v47 = vld [vmem:[%s1 + $0x70] sm:$0xf]
  %v48 = vld [vmem:[%s1 + $0x74] sm:$0xf]
  %v49 = vld [vmem:[%s1 + $0x78] sm:$0xf]
  %v50 = vld [vmem:[%s1 + $0x7c] sm:$0xf]
  %v51 = vld [vmem:[%s1 + $0x80] sm:$0xf]
  %v52 = vld [vmem:[%s1 + $0x84] sm:$0xf]
  %v53 = vld [vmem:[%s1 + $0x88] sm:$0xf]
  %v54 = vld [vmem:[%s1 + $0x8c] sm:$0xf]
  %v55 = vld [vmem:[%s1 + $0x90] sm:$0xf]
  %v56 = vld [vmem:[%s1 + $0x94] sm:$0xf]
  %v57 = vld [vmem:[%s1 + $0x98] sm:$0xf]
  %v58 = vld [vmem:[%s1 + $0x9c] sm:$0xf]
  %v59 = vld [vmem:[%s1 + $0xa0] sm:$0xf]
  %v60 = vld [vmem:[%s1 + $0xa4] sm:$0xf]
  %v61 = vld [vmem:[%s1 + $0xa8] sm:$0xf]
  %v62 = vld [vmem:[%s1 + $0xac] sm:$0xf]
  %v63 = vld [vmem:[%s1 + $0xb0] sm:$0xf]
  %v64 = vld [vmem:[%s1 + $0xb4] sm:$0xf]
  %v65 = vld [vmem:[%s1 + $0xb8] sm:$0xf]
  %v66 = vld [vmem:[%s1 + $0xbc] sm:$0xf]
  %v67 = vld [vmem:[%s1 + $0xc0] sm:$0xf]
  %v68 = vld [vmem:[%s1 + $0xc4] sm:$0xf]
  %v69 = vld [vmem:[%s1 + $0xc8] sm:$0xf]
  %v70 = vld [vmem:[%s1 + $0xcc] sm:$0xf]
  %v71 = vld [vmem:[%s1 + $0xd0] sm:$0xf]
  %v72 = vld [vmem:[%s1 + $0xd4] sm:$0xf]
  %v73 = vld [vmem:[%s1 + $0xd8] sm:$0xf]
  %v74 = vld [vmem:[%s1 + $0xdc] sm:$0xf]
  %v75 = vld [vmem:[%s1 + $0xe0] sm:$0xf]
  %v76 = vld [vmem:[%s1 + $0xe4] sm:$0xf]
  %v77 = vld [vmem:[%s1 + $0xe8] sm:$0xf]
  %v78 = vld [vmem:[%s1 + $0xec] sm:$0xf]
  %v79 = vld [vmem:[%s1 + $0xf0] sm:$0xf]
  %v80 = vld [vmem:[%s1 + $0xf4] sm:$0xf]
  %v81 = vld [vmem:[%s1 + $0xf8] sm:$0xf]
  %v82 = vld [vmem:[%s1 + $0xfc] sm:$0xf]
  %v83 = vld [vmem:[%s1 + $0x100] sm:$0xf]
  %v84 = vld [vmem:[%s1 + $0x104] sm:$0xf]
  %v85 = vld [vmem:[%s1 + $0x108] sm:$0xf]
  %v86 = vld [vmem:[%s1 + $0x10c] sm:$0xf]
  %v87 = vld [vmem:[%s1 + $0x110] sm:$0xf]
  %v88 = vld [vmem:[%s1 + $0x114] sm:$0xf]
  %v89 = vld [vmem:[%s1 + $0x118] sm:$0xf]
  %v90 = vld [vmem:[%s1 + $0x11c] sm:$0xf]
  %v91 = vld [vmem:[%s1 + $0x120] sm:$0xf]
  %v92 = vld [vmem:[%s1 + $0x124] sm:$0xf]
  %v93 = vld [vmem:[%s1 + $0x128] sm:$0xf]
  %v94 = vld [vmem:[%s1 + $0x12c] sm:$0xf]
  %v95 = vld [vmem:[%s1 + $0x130] sm:$0xf]
  %v96 = vld [vmem:[%s1 + $0x134] sm:$0xf]
  %v97 = vld [vmem:[%s1 + $0x138] sm:$0xf]
  %v98 = vld [vmem:[%s1 + $0x13c] sm:$0xf]
  %v99 = vld [vmem:[%s1 + $0x140] sm:$0xf]
  %v100 = vld [vmem:[%s1 + $0x144] sm:$0xf]
  %v101 = vld [vmem:[%s1 + $0x148] sm:$0xf]
  %v102 = vld [vmem:[%s1 + $0x14c] sm:$0xf]
  %v103 = vld [vmem:[%s1 + $0x150] sm:$0xf]
  %v104 = vld [vmem:[%s1 + $0x154] sm:$0xf]
  %v105 = vld [vmem:[%s1 + $0x158] sm:$0xf]
  %v106 = vld [vmem:[%s1 + $0x15c] sm:$0xf]
  %v107 = vld [vmem:[%s1 + $0x160] sm:$0xf]
  %v108 = vld [vmem:[%s1 + $0x164] sm:$0xf]
  %v109 = vld [vmem:[%s1 + $0x168] sm:$0xf]
  %v110 = vld [vmem:[%s1 + $0x16c] sm:$0xf]
  %v111 = vld [vmem:[%s1 + $0x170] sm:$0xf]
  %v112 = vld [vmem:[%s1 + $0x174] sm:$0xf]
  %v113 = vld [vmem:[%s1 + $0x178] sm:$0xf]
  %v114 = vld [vmem:[%s1 + $0x17c] sm:$0xf]
  %v115 = vld [vmem:[%s1 + $0x180] sm:$0xf]
  %v116 = vld [vmem:[%s1 + $0x184] sm:$0xf]
  %v117 = vld [vmem:[%s1 + $0x188] sm:$0xf]
  %v118 = vld [vmem:[%s1 + $0x18c] sm:$0xf]
  %v119 = vld [vmem:[%s2] sm:$0x1]
  %v121 = vlaneseq
  %v122 = vshrl.u32 %v121, 7
  %v123 = vsub.s32 0, %v122
  %v124 = vrot.slane %v119, %v123
  %v130 = vunpack.c.l.b16 %v15
  %v131 = vunpack.c.h.b16 %v15
  %v132 = vunpack.c.l.b16 %v16
  %v133 = vunpack.c.h.b16 %v16
  %v134 = vunpack.c.l.b16 %v17
  %v135 = vunpack.c.h.b16 %v17
  %v136 = vunpack.c.l.b16 %v18
  %v137 = vpack.c.b16 %v130, %v130
  %v138 = vpack.c.b16 %v131, %v131
  %v139 = vpack.c.b16 %v132, %v132
  %v140 = vpack.c.b16 %v133, %v133
  %v141 = vpack.c.b16 %v134, %v134
  %v142 = vpack.c.b16 %v135, %v135
  %v143 = vpack.c.b16 %v136, %v136
  %v250 = vunpack.c.l.b16 %v19
  %v251 = vunpack.c.l.b16 %v20
  %v252 = vunpack.c.l.b16 %v21
  %v253 = vunpack.c.l.b16 %v22
  %v254 = vunpack.c.l.b16 %v23
  %v255 = vunpack.c.l.b16 %v24
  %v256 = vunpack.c.l.b16 %v25
  %v257 = vunpack.c.l.b16 %v26
  %v258 = vunpack.c.l.b16 %v27
  %v259 = vunpack.c.l.b16 %v28
  %v260 = vunpack.c.l.b16 %v29
  %v261 = vunpack.c.l.b16 %v30
  %v262 = vunpack.c.l.b16 %v31
  %v263 = vunpack.c.l.b16 %v32
  %v264 = vunpack.c.l.b16 %v33
  %v265 = vunpack.c.l.b16 %v34
  %v266 = vunpack.c.l.b16 %v35
  %v267 = vunpack.c.l.b16 %v36
  %v268 = vunpack.c.l.b16 %v37
  %v269 = vunpack.c.l.b16 %v38
  %v270 = vunpack.c.l.b16 %v39
  %v271 = vunpack.c.l.b16 %v40
  %v272 = vunpack.c.l.b16 %v41
  %v273 = vunpack.c.l.b16 %v42
  %v274 = vunpack.c.l.b16 %v43
  %v275 = vunpack.c.l.b16 %v44
  %v276 = vunpack.c.l.b16 %v45
  %v277 = vunpack.c.l.b16 %v46
  %v278 = vunpack.c.l.b16 %v47
  %v279 = vunpack.c.l.b16 %v48
  %v280 = vunpack.c.l.b16 %v49
  %v281 = vunpack.c.l.b16 %v50
  %v282 = vunpack.c.l.b16 %v51
  %v283 = vunpack.c.l.b16 %v52
  %v284 = vunpack.c.l.b16 %v53
  %v285 = vunpack.c.l.b16 %v54
  %v286 = vunpack.c.l.b16 %v55
  %v287 = vunpack.c.l.b16 %v56
  %v288 = vunpack.c.l.b16 %v57
  %v289 = vunpack.c.l.b16 %v58
  %v290 = vunpack.c.l.b16 %v59
  %v291 = vunpack.c.l.b16 %v60
  %v292 = vunpack.c.l.b16 %v61
  %v293 = vunpack.c.l.b16 %v62
  %v294 = vunpack.c.l.b16 %v63
  %v295 = vunpack.c.l.b16 %v64
  %v296 = vunpack.c.l.b16 %v65
  %v297 = vunpack.c.l.b16 %v66
  %v298 = vunpack.c.l.b16 %v67
  %v299 = vunpack.c.l.b16 %v68
  %v300 = vunpack.c.l.b16 %v69
  %v301 = vunpack.c.l.b16 %v70
  %v302 = vunpack.c.l.b16 %v71
  %v303 = vunpack.c.l.b16 %v72
  %v304 = vunpack.c.l.b16 %v73
  %v305 = vunpack.c.l.b16 %v74
  %v306 = vunpack.c.l.b16 %v75
  %v307 = vunpack.c.l.b16 %v76
  %v308 = vunpack.c.l.b16 %v77
  %v309 = vunpack.c.l.b16 %v78
  %v310 = vunpack.c.l.b16 %v79
  %v311 = vunpack.c.l.b16 %v80
  %v312 = vunpack.c.l.b16 %v81
  %v313 = vunpack.c.l.b16 %v82
  %v314 = vunpack.c.l.b16 %v83
  %v315 = vunpack.c.l.b16 %v84
  %v316 = vunpack.c.l.b16 %v85
  %v317 = vunpack.c.l.b16 %v86
  %v318 = vunpack.c.l.b16 %v87
  %v319 = vunpack.c.l.b16 %v88
  %v320 = vunpack.c.l.b16 %v89
  %v321 = vunpack.c.l.b16 %v90
  %v322 = vunpack.c.l.b16 %v91
  %v323 = vunpack.c.l.b16 %v92
  %v324 = vunpack.c.l.b16 %v93
  %v325 = vunpack.c.l.b16 %v94
  %v326 = vunpack.c.l.b16 %v95
  %v327 = vunpack.c.l.b16 %v96
  %v328 = vunpack.c.l.b16 %v97
  %v329 = vunpack.c.l.b16 %v98
  %v330 = vunpack.c.l.b16 %v99
  %v331 = vunpack.c.l.b16 %v100
  %v332 = vunpack.c.l.b16 %v101
  %v333 = vunpack.c.l.b16 %v102
  %v334 = vunpack.c.l.b16 %v103
  %v335 = vunpack.c.l.b16 %v104
  %v336 = vunpack.c.l.b16 %v105
  %v337 = vunpack.c.l.b16 %v106
  %v338 = vunpack.c.l.b16 %v107
  %v339 = vunpack.c.l.b16 %v108
  %v340 = vunpack.c.l.b16 %v109
  %v341 = vunpack.c.l.b16 %v110
  %v342 = vunpack.c.l.b16 %v111
  %v343 = vunpack.c.l.b16 %v112
  %v344 = vunpack.c.l.b16 %v113
  %v345 = vunpack.c.l.b16 %v114
  %v346 = vunpack.c.l.b16 %v115
  %v347 = vunpack.c.l.b16 %v116
  %v348 = vunpack.c.l.b16 %v117
  %v349 = vunpack.c.l.b16 %v118
  %v350 = vpack.c.b16 %v251, %v250
  %v351 = vpack.c.b16 %v253, %v252
  %v352 = vpack.c.b16 %v255, %v254
  %v353 = vpack.c.b16 %v257, %v256
  %v354 = vpack.c.b16 %v259, %v258
  %v355 = vpack.c.b16 %v261, %v260
  %v356 = vpack.c.b16 %v263, %v262
  %v357 = vpack.c.b16 %v265, %v264
  %v358 = vpack.c.b16 %v267, %v266
  %v359 = vpack.c.b16 %v269, %v268
  %v360 = vpack.c.b16 %v271, %v270
  %v361 = vpack.c.b16 %v273, %v272
  %v362 = vpack.c.b16 %v275, %v274
  %v363 = vpack.c.b16 %v277, %v276
  %v364 = vpack.c.b16 %v279, %v278
  %v365 = vpack.c.b16 %v281, %v280
  %v366 = vpack.c.b16 %v283, %v282
  %v367 = vpack.c.b16 %v285, %v284
  %v368 = vpack.c.b16 %v287, %v286
  %v369 = vpack.c.b16 %v289, %v288
  %v370 = vpack.c.b16 %v291, %v290
  %v371 = vpack.c.b16 %v293, %v292
  %v372 = vpack.c.b16 %v295, %v294
  %v373 = vpack.c.b16 %v297, %v296
  %v374 = vpack.c.b16 %v299, %v298
  %v375 = vpack.c.b16 %v301, %v300
  %v376 = vpack.c.b16 %v303, %v302
  %v377 = vpack.c.b16 %v305, %v304
  %v378 = vpack.c.b16 %v307, %v306
  %v379 = vpack.c.b16 %v309, %v308
  %v380 = vpack.c.b16 %v311, %v310
  %v381 = vpack.c.b16 %v313, %v312
  %v382 = vpack.c.b16 %v315, %v314
  %v383 = vpack.c.b16 %v317, %v316
  %v384 = vpack.c.b16 %v319, %v318
  %v385 = vpack.c.b16 %v321, %v320
  %v386 = vpack.c.b16 %v323, %v322
  %v387 = vpack.c.b16 %v325, %v324
  %v388 = vpack.c.b16 %v327, %v326
  %v389 = vpack.c.b16 %v329, %v328
  %v390 = vpack.c.b16 %v331, %v330
  %v391 = vpack.c.b16 %v333, %v332
  %v392 = vpack.c.b16 %v335, %v334
  %v393 = vpack.c.b16 %v337, %v336
  %v394 = vpack.c.b16 %v339, %v338
  %v395 = vpack.c.b16 %v341, %v340
  %v396 = vpack.c.b16 %v343, %v342
  %v397 = vpack.c.b16 %v345, %v344
  %v398 = vpack.c.b16 %v347, %v346
  %v399 = vpack.c.b16 %v349, %v348
  %vm450 = vcmask 261120
  %v452 = vsel %vm450, %v143, 0
  %454 = vmatprep.subr.bf16.mxu0 0
  %455 = vmatpush1.bf16.msra.mxu0 %v350
  %456 = vmatprep.subr.bf16.mxu0 0
  %457 = vmatpush1.bf16.msra.mxu0 %v351
  %458 = vmatprep.subr.bf16.mxu0 0
  %459 = vmatpush1.bf16.msra.mxu0 %v352
  %460 = vmatprep.subr.bf16.mxu0 0
  %461 = vmatpush1.bf16.msra.mxu0 %v353
  %462 = vmatprep.subr.bf16.mxu0 0
  %463 = vmatpush1.bf16.msra.mxu0 %v354
  %464 = vmatprep.subr.bf16.mxu0 0
  %465 = vmatpush1.bf16.msra.mxu0 %v355
  %466 = vmatprep.subr.bf16.mxu0 0
  %467 = vmatpush1.bf16.msra.mxu0 %v356
  %468 = vmatprep.subr.bf16.mxu0 0
  %469 = vmatpush1.bf16.msra.mxu0 %v357
  %470 = vmatprep.subr.bf16.mxu0 0
  %471 = vmatpush1.bf16.msra.mxu0 %v358
  %472 = vmatprep.subr.bf16.mxu0 0
  %473 = vmatpush1.bf16.msra.mxu0 %v359
  %474 = vmatprep.subr.bf16.mxu0 0
  %475 = vmatpush1.bf16.msra.mxu0 %v360
  %476 = vmatprep.subr.bf16.mxu0 0
  %477 = vmatpush1.bf16.msra.mxu0 %v361
  %478 = vmatprep.subr.bf16.mxu0 0
  %479 = vmatpush1.bf16.msra.mxu0 %v362
  %480 = vmatprep.subr.bf16.mxu0 0
  %481 = vmatpush1.bf16.msra.mxu0 %v363
  %482 = vmatprep.subr.bf16.mxu0 0
  %483 = vmatpush1.bf16.msra.mxu0 %v364
  %484 = vmatprep.subr.bf16.mxu0 0
  %485 = vmatpush1.bf16.msra.mxu0 %v365
  %486 = vmatprep.mubr.bf16.mxu0 %v138
  %487 = vmatmul.mubr.bf16.gmra.mrb[0].mxu0 %v137
  %v488 = vpop.f32.mrb[0].mxu0
  %v489 = vadd.f32 %v124, %v488
  %v490 = vpop.f32.mrb[0].mxu0
  %v491 = vpop.f32.mrb[0].mxu0
  %v492 = vpop.f32.mrb[0].mxu0
  %493 = vdwg.mxu0
  %494 = vmatprep.subr.bf16.mxu0 0
  %495 = vmatpush1.bf16.msra.mxu0 %v366
  %496 = vmatprep.subr.bf16.mxu0 0
  %497 = vmatpush1.bf16.msra.mxu0 %v367
  %498 = vmatprep.subr.bf16.mxu0 0
  %499 = vmatpush1.bf16.msra.mxu0 %v368
  %500 = vmatprep.subr.bf16.mxu0 0
  %501 = vmatpush1.bf16.msra.mxu0 %v369
  %502 = vmatprep.subr.bf16.mxu0 0
  %503 = vmatpush1.bf16.msra.mxu0 %v370
  %504 = vmatprep.subr.bf16.mxu0 0
  %505 = vmatpush1.bf16.msra.mxu0 %v371
  %506 = vmatprep.subr.bf16.mxu0 0
  %507 = vmatpush1.bf16.msra.mxu0 %v372
  %508 = vmatprep.subr.bf16.mxu0 0
  %509 = vmatpush1.bf16.msra.mxu0 %v373
  %510 = vmatprep.subr.bf16.mxu0 0
  %511 = vmatpush1.bf16.msra.mxu0 %v374
  %512 = vmatprep.subr.bf16.mxu0 0
  %513 = vmatpush1.bf16.msra.mxu0 %v375
  %514 = vmatprep.subr.bf16.mxu0 0
  %515 = vmatpush1.bf16.msra.mxu0 %v376
  %516 = vmatprep.subr.bf16.mxu0 0
  %517 = vmatpush1.bf16.msra.mxu0 %v377
  %518 = vmatprep.subr.bf16.mxu0 0
  %519 = vmatpush1.bf16.msra.mxu0 %v378
  %520 = vmatprep.subr.bf16.mxu0 0
  %521 = vmatpush1.bf16.msra.mxu0 %v379
  %522 = vmatprep.subr.bf16.mxu0 0
  %523 = vmatpush1.bf16.msra.mxu0 %v380
  %524 = vmatprep.subr.bf16.mxu0 0
  %525 = vmatpush1.bf16.msra.mxu0 %v381
  %526 = vmatprep.mubr.bf16.mxu0 %v140
  %527 = vmatmul.mubr.bf16.gmra.mrb[0].mxu0 %v139
  %v528 = vpop.f32.mrb[0].mxu0
  %v529 = vadd.f32 %v489, %v528
  %v530 = vpop.f32.mrb[0].mxu0
  %v531 = vpop.f32.mrb[0].mxu0
  %v532 = vpop.f32.mrb[0].mxu0
  %533 = vdwg.mxu0
  %534 = vmatprep.subr.bf16.mxu0 0
  %535 = vmatpush1.bf16.msra.mxu0 %v382
  %536 = vmatprep.subr.bf16.mxu0 0
  %537 = vmatpush1.bf16.msra.mxu0 %v383
  %538 = vmatprep.subr.bf16.mxu0 0
  %539 = vmatpush1.bf16.msra.mxu0 %v384
  %540 = vmatprep.subr.bf16.mxu0 0
  %541 = vmatpush1.bf16.msra.mxu0 %v385
  %542 = vmatprep.subr.bf16.mxu0 0
  %543 = vmatpush1.bf16.msra.mxu0 %v386
  %544 = vmatprep.subr.bf16.mxu0 0
  %545 = vmatpush1.bf16.msra.mxu0 %v387
  %546 = vmatprep.subr.bf16.mxu0 0
  %547 = vmatpush1.bf16.msra.mxu0 %v388
  %548 = vmatprep.subr.bf16.mxu0 0
  %549 = vmatpush1.bf16.msra.mxu0 %v389
  %550 = vmatprep.subr.bf16.mxu0 0
  %551 = vmatpush1.bf16.msra.mxu0 %v390
  %552 = vmatprep.subr.bf16.mxu0 0
  %553 = vmatpush1.bf16.msra.mxu0 %v391
  %554 = vmatprep.subr.bf16.mxu0 0
  %555 = vmatpush1.bf16.msra.mxu0 %v392
  %556 = vmatprep.subr.bf16.mxu0 0
  %557 = vmatpush1.bf16.msra.mxu0 %v393
  %558 = vmatprep.subr.bf16.mxu0 0
  %559 = vmatpush1.bf16.msra.mxu0 %v394
  %560 = vmatprep.subr.bf16.mxu0 0
  %561 = vmatpush1.bf16.msra.mxu0 %v395
  %562 = vmatprep.subr.bf16.mxu0 0
  %563 = vmatpush1.bf16.msra.mxu0 %v396
  %564 = vmatprep.subr.bf16.mxu0 0
  %565 = vmatpush1.bf16.msra.mxu0 %v397
  %566 = vmatprep.mubr.bf16.mxu0 %v142
  %567 = vmatmul.mubr.bf16.gmra.mrb[0].mxu0 %v141
  %v568 = vpop.f32.mrb[0].mxu0
  %v569 = vadd.f32 %v529, %v568
  %v570 = vpop.f32.mrb[0].mxu0
  %v571 = vpop.f32.mrb[0].mxu0
  %v572 = vpop.f32.mrb[0].mxu0
  %573 = vdwg.mxu0
  %574 = vmatprep.subr.bf16.mxu0 0
  %575 = vmatpush1.bf16.msra.mxu0 %v398
  %576 = vmatprep.subr.bf16.mxu0 0
  %577 = vmatpush1.bf16.msra.mxu0 %v399
  %578 = vmatprep.subr.bf16.mxu0 0
  %579 = vmatpush1.bf16.msra.mxu0 0
  %580 = vmatprep.subr.bf16.mxu0 0
  %581 = vmatpush1.bf16.msra.mxu0 0
  %582 = vmatprep.subr.bf16.mxu0 0
  %583 = vmatpush1.bf16.msra.mxu0 0
  %584 = vmatprep.subr.bf16.mxu0 0
  %585 = vmatpush1.bf16.msra.mxu0 0
  %586 = vmatprep.subr.bf16.mxu0 0
  %587 = vmatpush1.bf16.msra.mxu0 0
  %588 = vmatprep.subr.bf16.mxu0 0
  %589 = vmatpush1.bf16.msra.mxu0 0
  %590 = vmatprep.subr.bf16.mxu0 0
  %591 = vmatpush1.bf16.msra.mxu0 0
  %592 = vmatprep.subr.bf16.mxu0 0
  %593 = vmatpush1.bf16.msra.mxu0 0
  %594 = vmatprep.subr.bf16.mxu0 0
  %595 = vmatpush1.bf16.msra.mxu0 0
  %596 = vmatprep.subr.bf16.mxu0 0
  %597 = vmatpush1.bf16.msra.mxu0 0
  %598 = vmatprep.subr.bf16.mxu0 0
  %599 = vmatpush1.bf16.msra.mxu0 0
  %600 = vmatprep.subr.bf16.mxu0 0
  %601 = vmatpush1.bf16.msra.mxu0 0
  %602 = vmatprep.subr.bf16.mxu0 0
  %603 = vmatpush1.bf16.msra.mxu0 0
  %604 = vmatprep.subr.bf16.mxu0 0
  %605 = vmatpush1.bf16.msra.mxu0 0
  %606 = vmatprep.mubr.bf16.mxu0 0
  %607 = vmatmul.mubr.bf16.gmra.mrb[0].mxu0 %v452
  %v608 = vpop.f32.mrb[0].mxu0
  %v609 = vadd.f32 %v569, %v608
  %v610 = vpop.f32.mrb[0].mxu0
  %v611 = vpop.f32.mrb[0].mxu0
  %v612 = vpop.f32.mrb[0].mxu0
  %613 = vdwg.mxu0
  %vm614 = vcmask 392192
  %615 = vst.msk [vmem:[%s3] sm:$0xff] %vm614, %v609
  // Predicated region
  $region14: #{edic_forward.11} parent=0 // pred_check
    _
  $region15: #{edic_forward.11} parent=0 // pred_check_branch
    %617 = sbr.rel (0) target = $region17
  $region16: #{edic_forward.11} parent=0 // pred_region
    _
  $region17: #{edic_forward.11} parent=0 // pred_fallthru
    _
  // Predicated region
  $region18: #{edic_forward.11} parent=0 // pred_check
    _
  $region19: #{edic_forward.11} parent=0 // pred_check_branch
    %619 = sbr.rel (0) target = $region21
  $region20: #{edic_forward.11} parent=0 // pred_region
    _
  $region21: #{edic_forward.11} parent=0 // pred_fallthru
    _

// kernel: tile.38
$region0: #{tile.38}
  #allocation0 [shape = 's32[1]{0}', space=sflag, size = 0x4, scoped, tag = 'scoped memory for tile.38']
  %s0 = inlined_call_operand.vmem [shape: f32[32], index: 0, kind: input, shape index: {}]
  %s1 = inlined_call_operand.vmem [shape: f32[4,32], index: 1, kind: output, shape index: {}]
  // Predicated region
  $region2: #{tile.38} parent=0 // pred_check
    _
  $region3: #{tile.38} parent=0 // pred_check_branch
    %3 = sbr.rel (0) target = $region5
  $region4: #{tile.38} parent=0 // pred_region
    _
  $region5: #{tile.38} parent=0 // pred_fallthru
    _
  %v4 = vld [vmem:[%s0] ss:$0 sm:$0xff]
  %5 = vst [vmem:[%s1] sm:$0xf] %v4

// kernel: tile.43
$region0: #{tile.43}
  %s0 = inlined_call_operand.vmem [shape: f32[4,32], index: 0, kind: input, shape index: {}]
  %s1 = inlined_call_operand.vmem [shape: f32[1,128], index: 1, kind: output, shape index: {}]
  $region1: #{tile.43} parent=0
    #allocation0 [shape = 'u8[4096]{0}', space=vmem, size = 0x1000, scoped, tag = 'scoped mem for output reshape']
    #allocation1 [shape = 'u8[4096]{0}', space=vmem, size = 0x1000, scoped, tag = 'scoped mem for input reshape']
    %s3 = sshllo.u32 0, 4
    %v4 = vld [vmem:[%s0] sm:%s3]
    %5 = vst [vmem:[#allocation1] sm:%s3] %v4
    %v6 = vld [vmem:[#allocation1] sm:$0x1]
    %vm7 = vcmask 261120
    %8 = vst.msk [vmem:[#allocation0] sm:$0x1] %vm7, %v6
    %s9 = scalar_lea.vmem [#allocation1], 3
    %v10 = vld [vmem:[%s9] sm:$0x1]
    %11 = vrot.lane.b32.xlu0 %v10, 96
    %v12 = vpop.permute.xlu0 %11
    %vm13 = vcmask 1048320
    %14 = vst.msk [vmem:[#allocation0] sm:$0x1] %vm13, %v12
    %s15 = scalar_lea.vmem [#allocation1], 2
    %v16 = vld [vmem:[%s15] sm:$0x1]
    %17 = vrot.lane.b32.xlu0 %v16, 64
    %v18 = vpop.permute.xlu0 %17
    %vm19 = vcmask 785920
    %20 = vst.msk [vmem:[#allocation0] sm:$0x1] %vm19, %v18
    %s21 = scalar_lea.vmem [#allocation1], 1
    %v22 = vld [vmem:[%s21] sm:$0x1]
    %23 = vrot.lane.b32.xlu0 %v22, 32
    %v24 = vpop.permute.xlu0 %23
    %vm25 = vcmask 523520
    %26 = vst.msk [vmem:[#allocation0] sm:$0x1] %vm25, %v24
    %s28 = sshllo.u32 0, 1
    %v30 = vld [vmem:[#allocation0] sm:%s28]
    %s31 = sshllo.u32 0, 1
    %32 = vst [vmem:[%s1] sm:%s31] %v30

// kernel: edic_forward.12
$region0: #{edic_forward.12}
  #allocation0 [shape = 'u32[]', space=smem, size = 0x4, offset = 0x4, fixed_abs, tag = 'smem constant byte address 0x4 - core index']
  #allocation1 [shape = 'u32[144,128]{1,0:T(1,128)}', space=vmem, size = 0x12000, scoped, tag = 'internal scratch']
  %s0 = inlined_call_operand.vmem [shape: bf16[8,432], index: 0, kind: input, shape index: {}]
  %s1 = inlined_call_operand.vmem [shape: bf16[432,128], index: 1, kind: input, shape index: {}]
  %s2 = inlined_call_operand.vmem [shape: f32[1,128], index: 2, kind: input, shape index: {}]
  %s3 = inlined_call_operand.vmem [shape: f32[128,128], index: 3, kind: input, shape index: {}]
  %s4 = inlined_call_operand.vmem [shape: f32[1,128], index: 4, kind: input, shape index: {}]
  %s5 = inlined_call_operand.vmem [shape: f32[8,128], index: 5, kind: output, shape index: {}]
  %s6 = sld [smem:[#allocation0]]
  $region30: #{edic_forward.12} parent=0
    _
  %s8 = ssub.s32 1, %s6
  %s9 = scalar_select 0, %s8, %s6
  // Predicated region
  $region2: #{edic_forward.12} parent=0 // pred_check
    _
  $region3: #{edic_forward.12} parent=0 // pred_check_branch
    %11 = sbr.rel (0) target = $region5
  $region4: #{edic_forward.12} parent=0 // pred_region
    _
  $region5: #{edic_forward.12} parent=0 // pred_fallthru
    _
  // Predicated region
  $region6: #{edic_forward.12} parent=0 // pred_check
    _
  $region7: #{edic_forward.12} parent=0 // pred_check_branch
    %13 = sbr.rel (0) target = $region9
  $region8: #{edic_forward.12} parent=0 // pred_region
    _
  $region9: #{edic_forward.12} parent=0 // pred_fallthru
    _
  // Predicated region
  $region10: #{edic_forward.12} parent=0 // pred_check
    _
  $region11: #{edic_forward.12} parent=0 // pred_check_branch
    %15 = sbr.rel (0) target = $region13
  $region12: #{edic_forward.12} parent=0 // pred_region
    _
  $region13: #{edic_forward.12} parent=0 // pred_fallthru
    _
  // Predicated region
  $region14: #{edic_forward.12} parent=0 // pred_check
    _
  $region15: #{edic_forward.12} parent=0 // pred_check_branch
    %17 = sbr.rel (0) target = $region17
  $region16: #{edic_forward.12} parent=0 // pred_region
    _
  $region17: #{edic_forward.12} parent=0 // pred_fallthru
    _
  // Predicated region
  $region18: #{edic_forward.12} parent=0 // pred_check
    _
  $region19: #{edic_forward.12} parent=0 // pred_check_branch
    %19 = sbr.rel (0) target = $region21
  $region20: #{edic_forward.12} parent=0 // pred_region
    _
  $region21: #{edic_forward.12} parent=0 // pred_fallthru
    _
  %v21 = vld [vmem:[%s0] sm:$0xff]
  %v22 = vld [vmem:[%s0 + $0x8] sm:$0xff]
  %v23 = vld [vmem:[%s1] sm:$0xf]
  %v24 = vld [vmem:[%s1 + $0x4] sm:$0xf]
  %v25 = vld [vmem:[%s1 + $0x8] sm:$0xf]
  %v26 = vld [vmem:[%s1 + $0xc] sm:$0xf]
  %v27 = vld [vmem:[%s1 + $0x10] sm:$0xf]
  %v28 = vld [vmem:[%s1 + $0x14] sm:$0xf]
  %v29 = vld [vmem:[%s1 + $0x18] sm:$0xf]
  %v30 = vld [vmem:[%s1 + $0x1c] sm:$0xf]
  %v31 = vld [vmem:[%s1 + $0x20] sm:$0xf]
  %v32 = vld [vmem:[%s1 + $0x24] sm:$0xf]
  %v33 = vld [vmem:[%s1 + $0x28] sm:$0xf]
  %v34 = vld [vmem:[%s1 + $0x2c] sm:$0xf]
  %v35 = vld [vmem:[%s1 + $0x30] sm:$0xf]
  %v36 = vld [vmem:[%s1 + $0x34] sm:$0xf]
  %v37 = vld [vmem:[%s1 + $0x38] sm:$0xf]
  %v38 = vld [vmem:[%s1 + $0x3c] sm:$0xf]
  %v39 = vld [vmem:[%s1 + $0x40] sm:$0xf]
  %v40 = vld [vmem:[%s1 + $0x44] sm:$0xf]
  %v41 = vld [vmem:[%s1 + $0x48] sm:$0xf]
  %v42 = vld [vmem:[%s1 + $0x4c] sm:$0xf]
  %v43 = vld [vmem:[%s1 + $0x50] sm:$0xf]
  %v44 = vld [vmem:[%s1 + $0x54] sm:$0xf]
  %v45 = vld [vmem:[%s1 + $0x58] sm:$0xf]
  %v46 = vld [vmem:[%s1 + $0x5c] sm:$0xf]
  %v47 = vld [vmem:[%s1 + $0x60] sm:$0xf]
  %v48 = vld [vmem:[%s1 + $0x64] sm:$0xf]
  %v49 = vld [vmem:[%s1 + $0x68] sm:$0xf]
  %v50 = vld [vmem:[%s1 + $0x6c] sm:$0xf]
  %v51 = vld [vmem:[%s1 + $0x70] sm:$0xf]
  %v52 = vld [vmem:[%s1 + $0x74] sm:$0xf]
  %v53 = vld [vmem:[%s1 + $0x78] sm:$0xf]
  %v54 = vld [vmem:[%s1 + $0x7c] sm:$0xf]
  %v55 = vld [vmem:[%s1 + $0x80] sm:$0xf]
  %v56 = vld [vmem:[%s1 + $0x84] sm:$0xf]
  %v57 = vld [vmem:[%s1 + $0x88] sm:$0xf]
  %v58 = vld [vmem:[%s1 + $0x8c] sm:$0xf]
  %v59 = vld [vmem:[%s1 + $0x90] sm:$0xf]
  %v60 = vld [vmem:[%s1 + $0x94] sm:$0xf]
  %v61 = vld [vmem:[%s1 + $0x98] sm:$0xf]
  %v62 = vld [vmem:[%s1 + $0x9c] sm:$0xf]
  %v63 = vld [vmem:[%s1 + $0xa0] sm:$0xf]
  %v64 = vld [vmem:[%s1 + $0xa4] sm:$0xf]
  %v65 = vld [vmem:[%s1 + $0xa8] sm:$0xf]
  %v66 = vld [vmem:[%s1 + $0xac] sm:$0xf]
  %v67 = vld [vmem:[%s1 + $0xb0] sm:$0xf]
  %v68 = vld [vmem:[%s1 + $0xb4] sm:$0xf]
  %v69 = vld [vmem:[%s1 + $0xb8] sm:$0xf]
  %v70 = vld [vmem:[%s1 + $0xbc] sm:$0xf]
  %v71 = vld [vmem:[%s1 + $0xc0] sm:$0xf]
  %v72 = vld [vmem:[%s1 + $0xc4] sm:$0xf]
  %v73 = vld [vmem:[%s1 + $0xc8] sm:$0xf]
  %v74 = vld [vmem:[%s1 + $0xcc] sm:$0xf]
  %v75 = vld [vmem:[%s1 + $0xd0] sm:$0xf]
  %v76 = vld [vmem:[%s1 + $0xd4] sm:$0xf]
  %v77 = vld [vmem:[%s2] sm:$0x1]
  %v79 = vlaneseq
  %v80 = vshrl.u32 %v79, 7
  %v81 = vsub.s32 0, %v80
  %v82 = vrot.slane %v77, %v81
  %v86 = vunpack.c.l.b16 %v21
  %v87 = vunpack.c.h.b16 %v21
  %v88 = vunpack.c.l.b16 %v22
  %v89 = vunpack.c.h.b16 %v22
  %v90 = vpack.c.b16 %v86, %v86
  %v91 = vpack.c.b16 %v87, %v87
  %v92 = vpack.c.b16 %v88, %v88
  %v93 = vpack.c.b16 %v89, %v89
  %v151 = vunpack.c.l.b16 %v23
  %v152 = vunpack.c.l.b16 %v24
  %v153 = vunpack.c.l.b16 %v25
  %v154 = vunpack.c.l.b16 %v26
  %v155 = vunpack.c.l.b16 %v27
  %v156 = vunpack.c.l.b16 %v28
  %v157 = vunpack.c.l.b16 %v29
  %v158 = vunpack.c.l.b16 %v30
  %v159 = vunpack.c.l.b16 %v31
  %v160 = vunpack.c.l.b16 %v32
  %v161 = vunpack.c.l.b16 %v33
  %v162 = vunpack.c.l.b16 %v34
  %v163 = vunpack.c.l.b16 %v35
  %v164 = vunpack.c.l.b16 %v36
  %v165 = vunpack.c.l.b16 %v37
  %v166 = vunpack.c.l.b16 %v38
  %v167 = vunpack.c.l.b16 %v39
  %v168 = vunpack.c.l.b16 %v40
  %v169 = vunpack.c.l.b16 %v41
  %v170 = vunpack.c.l.b16 %v42
  %v171 = vunpack.c.l.b16 %v43
  %v172 = vunpack.c.l.b16 %v44
  %v173 = vunpack.c.l.b16 %v45
  %v174 = vunpack.c.l.b16 %v46
  %v175 = vunpack.c.l.b16 %v47
  %v176 = vunpack.c.l.b16 %v48
  %v177 = vunpack.c.l.b16 %v49
  %v178 = vunpack.c.l.b16 %v50
  %v179 = vunpack.c.l.b16 %v51
  %v180 = vunpack.c.l.b16 %v52
  %v181 = vunpack.c.l.b16 %v53
  %v182 = vunpack.c.l.b16 %v54
  %v183 = vunpack.c.l.b16 %v55
  %v184 = vunpack.c.l.b16 %v56
  %v185 = vunpack.c.l.b16 %v57
  %v186 = vunpack.c.l.b16 %v58
  %v187 = vunpack.c.l.b16 %v59
  %v188 = vunpack.c.l.b16 %v60
  %v189 = vunpack.c.l.b16 %v61
  %v190 = vunpack.c.l.b16 %v62
  %v191 = vunpack.c.l.b16 %v63
  %v192 = vunpack.c.l.b16 %v64
  %v193 = vunpack.c.l.b16 %v65
  %v194 = vunpack.c.l.b16 %v66
  %v195 = vunpack.c.l.b16 %v67
  %v196 = vunpack.c.l.b16 %v68
  %v197 = vunpack.c.l.b16 %v69
  %v198 = vunpack.c.l.b16 %v70
  %v199 = vunpack.c.l.b16 %v71
  %v200 = vunpack.c.l.b16 %v72
  %v201 = vunpack.c.l.b16 %v73
  %v202 = vunpack.c.l.b16 %v74
  %v203 = vunpack.c.l.b16 %v75
  %v204 = vunpack.c.l.b16 %v76
  %v205 = vpack.c.b16 %v152, %v151
  %v206 = vpack.c.b16 %v154, %v153
  %v207 = vpack.c.b16 %v156, %v155
  %v208 = vpack.c.b16 %v158, %v157
  %v209 = vpack.c.b16 %v160, %v159
  %v210 = vpack.c.b16 %v162, %v161
  %v211 = vpack.c.b16 %v164, %v163
  %v212 = vpack.c.b16 %v166, %v165
  %v213 = vpack.c.b16 %v168, %v167
  %v214 = vpack.c.b16 %v170, %v169
  %v215 = vpack.c.b16 %v172, %v171
  %v216 = vpack.c.b16 %v174, %v173
  %v217 = vpack.c.b16 %v176, %v175
  %v218 = vpack.c.b16 %v178, %v177
  %v219 = vpack.c.b16 %v180, %v179
  %v220 = vpack.c.b16 %v182, %v181
  %v221 = vpack.c.b16 %v184, %v183
  %v222 = vpack.c.b16 %v186, %v185
  %v223 = vpack.c.b16 %v188, %v187
  %v224 = vpack.c.b16 %v190, %v189
  %v225 = vpack.c.b16 %v192, %v191
  %v226 = vpack.c.b16 %v194, %v193
  %v227 = vpack.c.b16 %v196, %v195
  %v228 = vpack.c.b16 %v198, %v197
  %v229 = vpack.c.b16 %v200, %v199
  %v230 = vpack.c.b16 %v202, %v201
  %v231 = vpack.c.b16 %v204, %v203
  %vm259 = vcmask 392192
  %v261 = vsel %vm259, %v93, 0
  %263 = vmatprep.subr.bf16.mxu0 0
  %264 = vmatpush1.bf16.msra.mxu0 %v205
  %265 = vmatprep.subr.bf16.mxu0 0
  %266 = vmatpush1.bf16.msra.mxu0 %v206
  %267 = vmatprep.subr.bf16.mxu0 0
  %268 = vmatpush1.bf16.msra.mxu0 %v207
  %269 = vmatprep.subr.bf16.mxu0 0
  %270 = vmatpush1.bf16.msra.mxu0 %v208
  %271 = vmatprep.subr.bf16.mxu0 0
  %272 = vmatpush1.bf16.msra.mxu0 %v209
  %273 = vmatprep.subr.bf16.mxu0 0
  %274 = vmatpush1.bf16.msra.mxu0 %v210
  %275 = vmatprep.subr.bf16.mxu0 0
  %276 = vmatpush1.bf16.msra.mxu0 %v211
  %277 = vmatprep.subr.bf16.mxu0 0
  %278 = vmatpush1.bf16.msra.mxu0 %v212
  %279 = vmatprep.subr.bf16.mxu0 0
  %280 = vmatpush1.bf16.msra.mxu0 %v213
  %281 = vmatprep.subr.bf16.mxu0 0
  %282 = vmatpush1.bf16.msra.mxu0 %v214
  %283 = vmatprep.subr.bf16.mxu0 0
  %284 = vmatpush1.bf16.msra.mxu0 %v215
  %285 = vmatprep.subr.bf16.mxu0 0
  %286 = vmatpush1.bf16.msra.mxu0 %v216
  %287 = vmatprep.subr.bf16.mxu0 0
  %288 = vmatpush1.bf16.msra.mxu0 %v217
  %289 = vmatprep.subr.bf16.mxu0 0
  %290 = vmatpush1.bf16.msra.mxu0 %v218
  %291 = vmatprep.subr.bf16.mxu0 0
  %292 = vmatpush1.bf16.msra.mxu0 %v219
  %293 = vmatprep.subr.bf16.mxu0 0
  %294 = vmatpush1.bf16.msra.mxu0 %v220
  %295 = vmatprep.mubr.bf16.mxu0 %v91
  %296 = vmatmul.mubr.bf16.gmra.mrb[0].mxu0 %v90
  %v297 = vpop.f32.mrb[0].mxu0
  %v298 = vadd.f32 %v82, %v297
  %v299 = vpop.f32.mrb[0].mxu0
  %v300 = vpop.f32.mrb[0].mxu0
  %v301 = vpop.f32.mrb[0].mxu0
  %302 = vdwg.mxu0
  %303 = vmatprep.subr.bf16.mxu0 0
  %304 = vmatpush1.bf16.msra.mxu0 %v221
  %305 = vmatprep.subr.bf16.mxu0 0
  %306 = vmatpush1.bf16.msra.mxu0 %v222
  %307 = vmatprep.subr.bf16.mxu0 0
  %308 = vmatpush1.bf16.msra.mxu0 %v223
  %309 = vmatprep.subr.bf16.mxu0 0
  %310 = vmatpush1.bf16.msra.mxu0 %v224
  %311 = vmatprep.subr.bf16.mxu0 0
  %312 = vmatpush1.bf16.msra.mxu0 %v225
  %313 = vmatprep.subr.bf16.mxu0 0
  %314 = vmatpush1.bf16.msra.mxu0 %v226
  %315 = vmatprep.subr.bf16.mxu0 0
  %316 = vmatpush1.bf16.msra.mxu0 %v227
  %317 = vmatprep.subr.bf16.mxu0 0
  %318 = vmatpush1.bf16.msra.mxu0 %v228
  %319 = vmatprep.subr.bf16.mxu0 0
  %320 = vmatpush1.bf16.msra.mxu0 %v229
  %321 = vmatprep.subr.bf16.mxu0 0
  %322 = vmatpush1.bf16.msra.mxu0 %v230
  %323 = vmatprep.subr.bf16.mxu0 0
  %324 = vmatpush1.bf16.msra.mxu0 %v231
  %325 = vmatprep.subr.bf16.mxu0 0
  %326 = vmatpush1.bf16.msra.mxu0 0
  %327 = vmatprep.subr.bf16.mxu0 0
  %328 = vmatpush1.bf16.msra.mxu0 0
  %329 = vmatprep.subr.bf16.mxu0 0
  %330 = vmatpush1.bf16.msra.mxu0 0
  %331 = vmatprep.subr.bf16.mxu0 0
  %332 = vmatpush1.bf16.msra.mxu0 0
  %333 = vmatprep.subr.bf16.mxu0 0
  %334 = vmatpush1.bf16.msra.mxu0 0
  %335 = vmatprep.mubr.bf16.mxu0 %v261
  %336 = vmatmul.mubr.bf16.gmra.mrb[0].mxu0 %v92
  %v337 = vpop.f32.mrb[0].mxu0
  %v338 = vadd.f32 %v298, %v337
  %v339 = vpop.f32.mrb[0].mxu0
  %v340 = vpop.f32.mrb[0].mxu0
  %v341 = vpop.f32.mrb[0].mxu0
  %342 = vdwg.mxu0
  %v343 = vmul.f32 %v338, %v338
  %v344 = vld [vmem:[%s3] sm:$0xff]
  %v345 = vld [vmem:[%s3 + $0x8] sm:$0xff]
  %v346 = vld [vmem:[%s3 + $0x10] sm:$0xff]
  %v347 = vld [vmem:[%s3 + $0x18] sm:$0xff]
  %v348 = vld [vmem:[%s3 + $0x20] sm:$0xff]
  %v349 = vld [vmem:[%s3 + $0x28] sm:$0xff]
  %v350 = vld [vmem:[%s3 + $0x30] sm:$0xff]
  %v351 = vld [vmem:[%s3 + $0x38] sm:$0xff]
  %v352 = vld [vmem:[%s3 + $0x40] sm:$0xff]
  %v353 = vld [vmem:[%s3 + $0x48] sm:$0xff]
  %v354 = vld [vmem:[%s3 + $0x50] sm:$0xff]
  %v355 = vld [vmem:[%s3 + $0x58] sm:$0xff]
  %v356 = vld [vmem:[%s3 + $0x60] sm:$0xff]
  %v357 = vld [vmem:[%s3 + $0x68] sm:$0xff]
  %v358 = vld [vmem:[%s3 + $0x70] sm:$0xff]
  %v359 = vld [vmem:[%s3 + $0x78] sm:$0xff]
  %v360 = vld [vmem:[%s4] sm:$0x1]
  %v362 = vlaneseq
  %v363 = vshrl.u32 %v362, 7
  %v364 = vsub.s32 0, %v363
  %v365 = vrot.slane %v360, %v364
  %367 = vmatprep.subr.mxu0 0.0
  %368 = vmatpush1.msra.mxu0 %v344
  %369 = vmatprep.subr.mxu0 0.0
  %370 = vmatpush1.msra.mxu0 %v345
  %371 = vmatprep.subr.mxu0 0.0
  %372 = vmatpush1.msra.mxu0 %v346
  %373 = vmatprep.subr.mxu0 0.0
  %374 = vmatpush1.msra.mxu0 %v347
  %375 = vmatprep.subr.mxu0 0.0
  %376 = vmatpush1.msra.mxu0 %v348
  %377 = vmatprep.subr.mxu0 0.0
  %378 = vmatpush1.msra.mxu0 %v349
  %379 = vmatprep.subr.mxu0 0.0
  %380 = vmatpush1.msra.mxu0 %v350
  %381 = vmatprep.subr.mxu0 0.0
  %382 = vmatpush1.msra.mxu0 %v351
  %383 = vmatprep.subr.mxu0 0.0
  %384 = vmatpush1.msra.mxu0 %v352
  %385 = vmatprep.subr.mxu0 0.0
  %386 = vmatpush1.msra.mxu0 %v353
  %387 = vmatprep.subr.mxu0 0.0
  %388 = vmatpush1.msra.mxu0 %v354
  %389 = vmatprep.subr.mxu0 0.0
  %390 = vmatpush1.msra.mxu0 %v355
  %391 = vmatprep.subr.mxu0 0.0
  %392 = vmatpush1.msra.mxu0 %v356
  %393 = vmatprep.subr.mxu0 0.0
  %394 = vmatpush1.msra.mxu0 %v357
  %395 = vmatprep.subr.mxu0 0.0
  %396 = vmatpush1.msra.mxu0 %v358
  %397 = vmatprep.subr.mxu0 0.0
  %398 = vmatpush1.msra.mxu0 %v359
  %399 = vmatprep.subr.mxu0 0.0
  %400 = vmatpush1.msra.mxu0 0.0
  %401 = vmatprep.subr.mxu0 0.0
  %402 = vmatpush1.msra.mxu0 0.0
  %403 = vmatprep.subr.mxu0 0.0
  %404 = vmatpush1.msra.mxu0 0.0
  %405 = vmatprep.subr.mxu0 0.0
  %406 = vmatpush1.msra.mxu0 0.0
  %407 = vmatprep.subr.mxu0 0.0
  %408 = vmatpush1.msra.mxu0 0.0
  %409 = vmatprep.subr.mxu0 0.0
  %410 = vmatpush1.msra.mxu0 0.0
  %411 = vmatprep.subr.mxu0 0.0
  %412 = vmatpush1.msra.mxu0 0.0
  %413 = vmatprep.subr.mxu0 0.0
  %414 = vmatpush1.msra.mxu0 0.0
  %415 = vmatprep.subr.mxu0 0.0
  %416 = vmatpush1.msra.mxu0 0.0
  %417 = vmatprep.subr.mxu0 0.0
  %418 = vmatpush1.msra.mxu0 0.0
  %419 = vmatprep.subr.mxu0 0.0
  %420 = vmatpush1.msra.mxu0 0.0
  %421 = vmatprep.subr.mxu0 0.0
  %422 = vmatpush1.msra.mxu0 0.0
  %423 = vmatprep.subr.mxu0 0.0
  %424 = vmatpush1.msra.mxu0 0.0
  %425 = vmatprep.subr.mxu0 0.0
  %426 = vmatpush1.msra.mxu0 0.0
  %427 = vmatprep.subr.mxu0 0.0
  %428 = vmatpush1.msra.mxu0 0.0
  %429 = vmatprep.subr.mxu0 0.0
  %430 = vmatpush1.msra.mxu0 0.0
  %431 = vmatprep.mubr.f32.mxu0 0.0
  %432 = vmatmul.mubr.f32.gmra.mrb[0].mxu0 %v343
  %v433 = vpop.f32.mrb[0].mxu0
  %v434 = vadd.f32 %v365, %v433
  %v435 = vpop.f32.mrb[0].mxu0
  %436 = vdwg.mxu0
  %v437 = vrsqrt.pop %v434
  %v438 = vmul.f32 %v434, %v437
  %vm439 = vcmp.eq.f32.partialorder %v434, inf
  %v440 = vsel %vm439, %v434, %v438
  %vm441 = vcmp.eq.f32.partialorder %v434, 0.0
  %v442 = vand.u32 %v434, 2147483648
  %v443 = vsel %vm441, %v442, %v440
  %v444 = vmul.f32 %v338, %v443
  %445 = vst [vmem:[%s5] sm:$0xff] %v444
  // Predicated region
  $region22: #{edic_forward.12} parent=0 // pred_check
    _
  $region23: #{edic_forward.12} parent=0 // pred_check_branch
    %447 = sbr.rel (0) target = $region25
  $region24: #{edic_forward.12} parent=0 // pred_region
    _
  $region25: #{edic_forward.12} parent=0 // pred_fallthru
    _
  // Predicated region
  $region26: #{edic_forward.12} parent=0 // pred_check
    _
  $region27: #{edic_forward.12} parent=0 // pred_check_branch
    %449 = sbr.rel (0) target = $region29
  $region28: #{edic_forward.12} parent=0 // pred_region
    _
  $region29: #{edic_forward.12} parent=0 // pred_fallthru
    _

// kernel: edic_forward.13
$region0: #{edic_forward.13}
  #allocation0 [shape = 'u32[]', space=smem, size = 0x4, offset = 0x4, fixed_abs, tag = 'smem constant byte address 0x4 - core index']
  #allocation1 [shape = 'u32[144,128]{1,0:T(1,128)}', space=vmem, size = 0x12000, scoped, tag = 'internal scratch']
  %s0 = inlined_call_operand.vmem [shape: bf16[8,288], index: 0, kind: input, shape index: {}]
  %s1 = inlined_call_operand.vmem [shape: bf16[288,128], index: 1, kind: input, shape index: {}]
  %s2 = inlined_call_operand.vmem [shape: f32[1,128], index: 2, kind: input, shape index: {}]
  %s3 = inlined_call_operand.vmem [shape: f32[128,128], index: 3, kind: input, shape index: {}]
  %s4 = inlined_call_operand.vmem [shape: f32[1,128], index: 4, kind: input, shape index: {}]
  %s5 = inlined_call_operand.vmem [shape: f32[8,128], index: 5, kind: output, shape index: {}]
  %s6 = sld [smem:[#allocation0]]
  $region30: #{edic_forward.13} parent=0
    _
  %s8 = ssub.s32 1, %s6
  %s9 = scalar_select 0, %s8, %s6
  // Predicated region
  $region2: #{edic_forward.13} parent=0 // pred_check
    _
  $region3: #{edic_forward.13} parent=0 // pred_check_branch
    %11 = sbr.rel (0) target = $region5
  $region4: #{edic_forward.13} parent=0 // pred_region
    _
  $region5: #{edic_forward.13} parent=0 // pred_fallthru
    _
  // Predicated region
  $region6: #{edic_forward.13} parent=0 // pred_check
    _
  $region7: #{edic_forward.13} parent=0 // pred_check_branch
    %13 = sbr.rel (0) target = $region9
  $region8: #{edic_forward.13} parent=0 // pred_region
    _
  $region9: #{edic_forward.13} parent=0 // pred_fallthru
    _
  // Predicated region
  $region10: #{edic_forward.13} parent=0 // pred_check
    _
  $region11: #{edic_forward.13} parent=0 // pred_check_branch
    %15 = sbr.rel (0) target = $region13
  $region12: #{edic_forward.13} parent=0 // pred_region
    _
  $region13: #{edic_forward.13} parent=0 // pred_fallthru
    _
  // Predicated region
  $region14: #{edic_forward.13} parent=0 // pred_check
    _
  $region15: #{edic_forward.13} parent=0 // pred_check_branch
    %17 = sbr.rel (0) target = $region17
  $region16: #{edic_forward.13} parent=0 // pred_region
    _
  $region17: #{edic_forward.13} parent=0 // pred_fallthru
    _
  // Predicated region
  $region18: #{edic_forward.13} parent=0 // pred_check
    _
  $region19: #{edic_forward.13} parent=0 // pred_check_branch
    %19 = sbr.rel (0) target = $region21
  $region20: #{edic_forward.13} parent=0 // pred_region
    _
  $region21: #{edic_forward.13} parent=0 // pred_fallthru
    _
  %v21 = vld [vmem:[%s0] sm:$0xff]
  %v22 = vld [vmem:[%s0 + $0x8] sm:$0xf]
  %v23 = vld [vmem:[%s1] sm:$0xf]
  %v24 = vld [vmem:[%s1 + $0x4] sm:$0xf]
  %v25 = vld [vmem:[%s1 + $0x8] sm:$0xf]
  %v26 = vld [vmem:[%s1 + $0xc] sm:$0xf]
  %v27 = vld [vmem:[%s1 + $0x10] sm:$0xf]
  %v28 = vld [vmem:[%s1 + $0x14] sm:$0xf]
  %v29 = vld [vmem:[%s1 + $0x18] sm:$0xf]
  %v30 = vld [vmem:[%s1 + $0x1c] sm:$0xf]
  %v31 = vld [vmem:[%s1 + $0x20] sm:$0xf]
  %v32 = vld [vmem:[%s1 + $0x24] sm:$0xf]
  %v33 = vld [vmem:[%s1 + $0x28] sm:$0xf]
  %v34 = vld [vmem:[%s1 + $0x2c] sm:$0xf]
  %v35 = vld [vmem:[%s1 + $0x30] sm:$0xf]
  %v36 = vld [vmem:[%s1 + $0x34] sm:$0xf]
  %v37 = vld [vmem:[%s1 + $0x38] sm:$0xf]
  %v38 = vld [vmem:[%s1 + $0x3c] sm:$0xf]
  %v39 = vld [vmem:[%s1 + $0x40] sm:$0xf]
  %v40 = vld [vmem:[%s1 + $0x44] sm:$0xf]
  %v41 = vld [vmem:[%s1 + $0x48] sm:$0xf]
  %v42 = vld [vmem:[%s1 + $0x4c] sm:$0xf]
  %v43 = vld [vmem:[%s1 + $0x50] sm:$0xf]
  %v44 = vld [vmem:[%s1 + $0x54] sm:$0xf]
  %v45 = vld [vmem:[%s1 + $0x58] sm:$0xf]
  %v46 = vld [vmem:[%s1 + $0x5c] sm:$0xf]
  %v47 = vld [vmem:[%s1 + $0x60] sm:$0xf]
  %v48 = vld [vmem:[%s1 + $0x64] sm:$0xf]
  %v49 = vld [vmem:[%s1 + $0x68] sm:$0xf]
  %v50 = vld [vmem:[%s1 + $0x6c] sm:$0xf]
  %v51 = vld [vmem:[%s1 + $0x70] sm:$0xf]
  %v52 = vld [vmem:[%s1 + $0x74] sm:$0xf]
  %v53 = vld [vmem:[%s1 + $0x78] sm:$0xf]
  %v54 = vld [vmem:[%s1 + $0x7c] sm:$0xf]
  %v55 = vld [vmem:[%s1 + $0x80] sm:$0xf]
  %v56 = vld [vmem:[%s1 + $0x84] sm:$0xf]
  %v57 = vld [vmem:[%s1 + $0x88] sm:$0xf]
  %v58 = vld [vmem:[%s1 + $0x8c] sm:$0xf]
  %v59 = vld [vmem:[%s2] sm:$0x1]
  %v61 = vlaneseq
  %v62 = vshrl.u32 %v61, 7
  %v63 = vsub.s32 0, %v62
  %v64 = vrot.slane %v59, %v63
  %v68 = vunpack.c.l.b16 %v21
  %v69 = vunpack.c.h.b16 %v21
  %v70 = vunpack.c.l.b16 %v22
  %v71 = vpack.c.b16 %v68, %v68
  %v72 = vpack.c.b16 %v69, %v69
  %v73 = vpack.c.b16 %v70, %v70
  %v112 = vunpack.c.l.b16 %v23
  %v113 = vunpack.c.l.b16 %v24
  %v114 = vunpack.c.l.b16 %v25
  %v115 = vunpack.c.l.b16 %v26
  %v116 = vunpack.c.l.b16 %v27
  %v117 = vunpack.c.l.b16 %v28
  %v118 = vunpack.c.l.b16 %v29
  %v119 = vunpack.c.l.b16 %v30
  %v120 = vunpack.c.l.b16 %v31
  %v121 = vunpack.c.l.b16 %v32
  %v122 = vunpack.c.l.b16 %v33
  %v123 = vunpack.c.l.b16 %v34
  %v124 = vunpack.c.l.b16 %v35
  %v125 = vunpack.c.l.b16 %v36
  %v126 = vunpack.c.l.b16 %v37
  %v127 = vunpack.c.l.b16 %v38
  %v128 = vunpack.c.l.b16 %v39
  %v129 = vunpack.c.l.b16 %v40
  %v130 = vunpack.c.l.b16 %v41
  %v131 = vunpack.c.l.b16 %v42
  %v132 = vunpack.c.l.b16 %v43
  %v133 = vunpack.c.l.b16 %v44
  %v134 = vunpack.c.l.b16 %v45
  %v135 = vunpack.c.l.b16 %v46
  %v136 = vunpack.c.l.b16 %v47
  %v137 = vunpack.c.l.b16 %v48
  %v138 = vunpack.c.l.b16 %v49
  %v139 = vunpack.c.l.b16 %v50
  %v140 = vunpack.c.l.b16 %v51
  %v141 = vunpack.c.l.b16 %v52
  %v142 = vunpack.c.l.b16 %v53
  %v143 = vunpack.c.l.b16 %v54
  %v144 = vunpack.c.l.b16 %v55
  %v145 = vunpack.c.l.b16 %v56
  %v146 = vunpack.c.l.b16 %v57
  %v147 = vunpack.c.l.b16 %v58
  %v148 = vpack.c.b16 %v113, %v112
  %v149 = vpack.c.b16 %v115, %v114
  %v150 = vpack.c.b16 %v117, %v116
  %v151 = vpack.c.b16 %v119, %v118
  %v152 = vpack.c.b16 %v121, %v120
  %v153 = vpack.c.b16 %v123, %v122
  %v154 = vpack.c.b16 %v125, %v124
  %v155 = vpack.c.b16 %v127, %v126
  %v156 = vpack.c.b16 %v129, %v128
  %v157 = vpack.c.b16 %v131, %v130
  %v158 = vpack.c.b16 %v133, %v132
  %v159 = vpack.c.b16 %v135, %v134
  %v160 = vpack.c.b16 %v137, %v136
  %v161 = vpack.c.b16 %v139, %v138
  %v162 = vpack.c.b16 %v141, %v140
  %v163 = vpack.c.b16 %v143, %v142
  %v164 = vpack.c.b16 %v145, %v144
  %v165 = vpack.c.b16 %v147, %v146
  %vm184 = vcmask 261120
  %v186 = vsel %vm184, %v73, 0
  %188 = vmatprep.subr.bf16.mxu0 0
  %189 = vmatpush1.bf16.msra.mxu0 %v148
  %190 = vmatprep.subr.bf16.mxu0 0
  %191 = vmatpush1.bf16.msra.mxu0 %v149
  %192 = vmatprep.subr.bf16.mxu0 0
  %193 = vmatpush1.bf16.msra.mxu0 %v150
  %194 = vmatprep.subr.bf16.mxu0 0
  %195 = vmatpush1.bf16.msra.mxu0 %v151
  %196 = vmatprep.subr.bf16.mxu0 0
  %197 = vmatpush1.bf16.msra.mxu0 %v152
  %198 = vmatprep.subr.bf16.mxu0 0
  %199 = vmatpush1.bf16.msra.mxu0 %v153
  %200 = vmatprep.subr.bf16.mxu0 0
  %201 = vmatpush1.bf16.msra.mxu0 %v154
  %202 = vmatprep.subr.bf16.mxu0 0
  %203 = vmatpush1.bf16.msra.mxu0 %v155
  %204 = vmatprep.subr.bf16.mxu0 0
  %205 = vmatpush1.bf16.msra.mxu0 %v156
  %206 = vmatprep.subr.bf16.mxu0 0
  %207 = vmatpush1.bf16.msra.mxu0 %v157
  %208 = vmatprep.subr.bf16.mxu0 0
  %209 = vmatpush1.bf16.msra.mxu0 %v158
  %210 = vmatprep.subr.bf16.mxu0 0
  %211 = vmatpush1.bf16.msra.mxu0 %v159
  %212 = vmatprep.subr.bf16.mxu0 0
  %213 = vmatpush1.bf16.msra.mxu0 %v160
  %214 = vmatprep.subr.bf16.mxu0 0
  %215 = vmatpush1.bf16.msra.mxu0 %v161
  %216 = vmatprep.subr.bf16.mxu0 0
  %217 = vmatpush1.bf16.msra.mxu0 %v162
  %218 = vmatprep.subr.bf16.mxu0 0
  %219 = vmatpush1.bf16.msra.mxu0 %v163
  %220 = vmatprep.mubr.bf16.mxu0 %v72
  %221 = vmatmul.mubr.bf16.gmra.mrb[0].mxu0 %v71
  %v222 = vpop.f32.mrb[0].mxu0
  %v223 = vadd.f32 %v64, %v222
  %v224 = vpop.f32.mrb[0].mxu0
  %v225 = vpop.f32.mrb[0].mxu0
  %v226 = vpop.f32.mrb[0].mxu0
  %227 = vdwg.mxu0
  %228 = vmatprep.subr.bf16.mxu0 0
  %229 = vmatpush1.bf16.msra.mxu0 %v164
  %230 = vmatprep.subr.bf16.mxu0 0
  %231 = vmatpush1.bf16.msra.mxu0 %v165
  %232 = vmatprep.subr.bf16.mxu0 0
  %233 = vmatpush1.bf16.msra.mxu0 0
  %234 = vmatprep.subr.bf16.mxu0 0
  %235 = vmatpush1.bf16.msra.mxu0 0
  %236 = vmatprep.subr.bf16.mxu0 0
  %237 = vmatpush1.bf16.msra.mxu0 0
  %238 = vmatprep.subr.bf16.mxu0 0
  %239 = vmatpush1.bf16.msra.mxu0 0
  %240 = vmatprep.subr.bf16.mxu0 0
  %241 = vmatpush1.bf16.msra.mxu0 0
  %242 = vmatprep.subr.bf16.mxu0 0
  %243 = vmatpush1.bf16.msra.mxu0 0
  %244 = vmatprep.subr.bf16.mxu0 0
  %245 = vmatpush1.bf16.msra.mxu0 0
  %246 = vmatprep.subr.bf16.mxu0 0
  %247 = vmatpush1.bf16.msra.mxu0 0
  %248 = vmatprep.subr.bf16.mxu0 0
  %249 = vmatpush1.bf16.msra.mxu0 0
  %250 = vmatprep.subr.bf16.mxu0 0
  %251 = vmatpush1.bf16.msra.mxu0 0
  %252 = vmatprep.subr.bf16.mxu0 0
  %253 = vmatpush1.bf16.msra.mxu0 0
  %254 = vmatprep.subr.bf16.mxu0 0
  %255 = vmatpush1.bf16.msra.mxu0 0
  %256 = vmatprep.subr.bf16.mxu0 0
  %257 = vmatpush1.bf16.msra.mxu0 0
  %258 = vmatprep.subr.bf16.mxu0 0
  %259 = vmatpush1.bf16.msra.mxu0 0
  %260 = vmatprep.mubr.bf16.mxu0 0
  %261 = vmatmul.mubr.bf16.gmra.mrb[0].mxu0 %v186
  %v262 = vpop.f32.mrb[0].mxu0
  %v263 = vadd.f32 %v223, %v262
  %v264 = vpop.f32.mrb[0].mxu0
  %v265 = vpop.f32.mrb[0].mxu0
  %v266 = vpop.f32.mrb[0].mxu0
  %267 = vdwg.mxu0
  %v268 = vmul.f32 %v263, %v263
  %v269 = vld [vmem:[%s3] sm:$0xff]
  %v270 = vld [vmem:[%s3 + $0x8] sm:$0xff]
  %v271 = vld [vmem:[%s3 + $0x10] sm:$0xff]
  %v272 = vld [vmem:[%s3 + $0x18] sm:$0xff]
  %v273 = vld [vmem:[%s3 + $0x20] sm:$0xff]
  %v274 = vld [vmem:[%s3 + $0x28] sm:$0xff]
  %v275 = vld [vmem:[%s3 + $0x30] sm:$0xff]
  %v276 = vld [vmem:[%s3 + $0x38] sm:$0xff]
  %v277 = vld [vmem:[%s3 + $0x40] sm:$0xff]
  %v278 = vld [vmem:[%s3 + $0x48] sm:$0xff]
  %v279 = vld [vmem:[%s3 + $0x50] sm:$0xff]
  %v280 = vld [vmem:[%s3 + $0x58] sm:$0xff]
  %v281 = vld [vmem:[%s3 + $0x60] sm:$0xff]
  %v282 = vld [vmem:[%s3 + $0x68] sm:$0xff]
  %v283 = vld [vmem:[%s3 + $0x70] sm:$0xff]
  %v284 = vld [vmem:[%s3 + $0x78] sm:$0xff]
  %v285 = vld [vmem:[%s4] sm:$0x1]
  %v287 = vlaneseq
  %v288 = vshrl.u32 %v287, 7
  %v289 = vsub.s32 0, %v288
  %v290 = vrot.slane %v285, %v289
  %292 = vmatprep.subr.mxu0 0.0
  %293 = vmatpush1.msra.mxu0 %v269
  %294 = vmatprep.subr.mxu0 0.0
  %295 = vmatpush1.msra.mxu0 %v270
  %296 = vmatprep.subr.mxu0 0.0
  %297 = vmatpush1.msra.mxu0 %v271
  %298 = vmatprep.subr.mxu0 0.0
  %299 = vmatpush1.msra.mxu0 %v272
  %300 = vmatprep.subr.mxu0 0.0
  %301 = vmatpush1.msra.mxu0 %v273
  %302 = vmatprep.subr.mxu0 0.0
  %303 = vmatpush1.msra.mxu0 %v274
  %304 = vmatprep.subr.mxu0 0.0
  %305 = vmatpush1.msra.mxu0 %v275
  %306 = vmatprep.subr.mxu0 0.0
  %307 = vmatpush1.msra.mxu0 %v276
  %308 = vmatprep.subr.mxu0 0.0
  %309 = vmatpush1.msra.mxu0 %v277
  %310 = vmatprep.subr.mxu0 0.0
  %311 = vmatpush1.msra.mxu0 %v278
  %312 = vmatprep.subr.mxu0 0.0
  %313 = vmatpush1.msra.mxu0 %v279
  %314 = vmatprep.subr.mxu0 0.0
  %315 = vmatpush1.msra.mxu0 %v280
  %316 = vmatprep.subr.mxu0 0.0
  %317 = vmatpush1.msra.mxu0 %v281
  %318 = vmatprep.subr.mxu0 0.0
  %319 = vmatpush1.msra.mxu0 %v282
  %320 = vmatprep.subr.mxu0 0.0
  %321 = vmatpush1.msra.mxu0 %v283
  %322 = vmatprep.subr.mxu0 0.0
  %323 = vmatpush1.msra.mxu0 %v284
  %324 = vmatprep.subr.mxu0 0.0
  %325 = vmatpush1.msra.mxu0 0.0
  %326 = vmatprep.subr.mxu0 0.0
  %327 = vmatpush1.msra.mxu0 0.0
  %328 = vmatprep.subr.mxu0 0.0
  %329 = vmatpush1.msra.mxu0 0.0
  %330 = vmatprep.subr.mxu0 0.0
  %331 = vmatpush1.msra.mxu0 0.0
  %332 = vmatprep.subr.mxu0 0.0
  %333 = vmatpush1.msra.mxu0 0.0
  %334 = vmatprep.subr.mxu0 0.0
  %335 = vmatpush1.msra.mxu0 0.0
  %336 = vmatprep.subr.mxu0 0.0
  %337 = vmatpush1.msra.mxu0 0.0
  %338 = vmatprep.subr.mxu0 0.0
  %339 = vmatpush1.msra.mxu0 0.0
  %340 = vmatprep.subr.mxu0 0.0
  %341 = vmatpush1.msra.mxu0 0.0
  %342 = vmatprep.subr.mxu0 0.0
  %343 = vmatpush1.msra.mxu0 0.0
  %344 = vmatprep.subr.mxu0 0.0
  %345 = vmatpush1.msra.mxu0 0.0
  %346 = vmatprep.subr.mxu0 0.0
  %347 = vmatpush1.msra.mxu0 0.0
  %348 = vmatprep.subr.mxu0 0.0
  %349 = vmatpush1.msra.mxu0 0.0
  %350 = vmatprep.subr.mxu0 0.0
  %351 = vmatpush1.msra.mxu0 0.0
  %352 = vmatprep.subr.mxu0 0.0
  %353 = vmatpush1.msra.mxu0 0.0
  %354 = vmatprep.subr.mxu0 0.0
  %355 = vmatpush1.msra.mxu0 0.0
  %356 = vmatprep.mubr.f32.mxu0 0.0
  %357 = vmatmul.mubr.f32.gmra.mrb[0].mxu0 %v268
  %v358 = vpop.f32.mrb[0].mxu0
  %v359 = vadd.f32 %v290, %v358
  %v360 = vpop.f32.mrb[0].mxu0
  %361 = vdwg.mxu0
  %v362 = vrsqrt.pop %v359
  %v363 = vmul.f32 %v359, %v362
  %vm364 = vcmp.eq.f32.partialorder %v359, inf
  %v365 = vsel %vm364, %v359, %v363
  %vm366 = vcmp.eq.f32.partialorder %v359, 0.0
  %v367 = vand.u32 %v359, 2147483648
  %v368 = vsel %vm366, %v367, %v365
  %v369 = vmul.f32 %v263, %v368
  %370 = vst [vmem:[%s5] sm:$0xff] %v369
  // Predicated region
  $region22: #{edic_forward.13} parent=0 // pred_check
    _
  $region23: #{edic_forward.13} parent=0 // pred_check_branch
    %372 = sbr.rel (0) target = $region25
  $region24: #{edic_forward.13} parent=0 // pred_region
    _
  $region25: #{edic_forward.13} parent=0 // pred_fallthru
    _
  // Predicated region
  $region26: #{edic_forward.13} parent=0 // pred_check
    _
  $region27: #{edic_forward.13} parent=0 // pred_check_branch
    %374 = sbr.rel (0) target = $region29
  $region28: #{edic_forward.13} parent=0 // pred_region
    _
  $region29: #{edic_forward.13} parent=0 // pred_fallthru
    _

// kernel: edic_forward.14
$region0: #{edic_forward.14}
  #allocation0 [shape = 'u32[]', space=smem, size = 0x4, offset = 0x4, fixed_abs, tag = 'smem constant byte address 0x4 - core index']
  #allocation1 [shape = 'u32[144,128]{1,0:T(1,128)}', space=vmem, size = 0x12000, scoped, tag = 'internal scratch']
  %s0 = inlined_call_operand.vmem [shape: bf16[32,288], index: 0, kind: input, shape index: {}]
  %s1 = inlined_call_operand.vmem [shape: bf16[288,128], index: 1, kind: input, shape index: {}]
  %s2 = inlined_call_operand.vmem [shape: f32[1,128], index: 2, kind: input, shape index: {}]
  %s3 = inlined_call_operand.vmem [shape: f32[128,128], index: 3, kind: input, shape index: {}]
  %s4 = inlined_call_operand.vmem [shape: f32[1,128], index: 4, kind: input, shape index: {}]
  %s5 = inlined_call_operand.vmem [shape: f32[32,128], index: 5, kind: output, shape index: {}]
  %s6 = sld [smem:[#allocation0]]
  $region53: #{edic_forward.14} parent=0
    _
  %s8 = ssub.s32 1, %s6
  %s9 = scalar_select 0, %s8, %s6
  loop: start=0, step=1, limit=4
  $region2: #{edic_forward.14} parent=0 // loop_pre_header
    _
  $region3: #{edic_forward.14} parent=0 // loop_header
    %s11 = sphi 0, %s15
    %p12 = scmp.ge.s32.totalorder %s11, 4
    %s21 = sphi 0, %s23
    %s24 = sphi 0, %s21
    %s25 = sphi 0, %s24
    %s41 = sphi 0, %s25
    %s45 = sphi 0, %s45
    %s47 = sphi 0, %s45
    %s48 = sphi 0, %s47
    %s62 = sphi 0, %s48
    %s66 = sphi 0, %s66
    %s68 = sphi 0, %s66
    %s69 = sphi 0, %s68
    %s83 = sphi 0, %s69
    %s87 = sphi 0, %s87
    %s89 = sphi 0, %s87
    %s90 = sphi 0, %s89
    %s104 = sphi 0, %s90
    %s108 = sphi 0, %s108
    %s110 = sphi 0, %s108
    %s111 = sphi 0, %s110
    %s125 = sphi 0, %s111
    %s131 = sphi 0, %s133
    %s134 = sphi 0, %s131
    %s135 = sphi 0, %s134
    %s151 = sphi 0, %s135
  $region4: #{edic_forward.14} parent=0 // loop_header_branch
    %14 = sbr.rel (%p12) target = $region8
  $region5: #{edic_forward.14} parent=0 // loop_body
    %s16 = ssub.s32 %s11, 1
    %s17 = ssub.s32 %s11, 2
    %s18 = sadd.s32 %s11, 1
    %s19 = ssub.s32 %s11, %s18
    %p20 = scmp.eq.s32.totalorder %s19, 0
    %s22 = sadd.s32 %s21, 1
    %s23 = scalar_select %p20, %s21, %s22
    %p26 = pneg %p20
    %p27 = scmp.eq.s32.totalorder %s11, 1
    %p28 = por %p26, %p27
    %p29 = scmp.ne.s32.totalorder %s21, %s24
    %p30 = scmp.eq.s32.totalorder %s11, 0
    %p31 = por %p29, %p30
    %p32 = scmp.ne.s32.totalorder %s21, %s24
    %p33 = scmp.eq.s32.totalorder %s16, 1
    %p34 = por %p32, %p33
    %p35 = scmp.ne.s32.totalorder %s24, %s25
    %p36 = scmp.eq.s32.totalorder %s16, 0
    %p37 = por %p35, %p36
    %p38 = scmp.ne.s32.totalorder %s24, %s25
    %p39 = scmp.eq.s32.totalorder %s17, 1
    %p40 = por %p38, %p39
    %p42 = scmp.ne.s32.totalorder %s25, %s41
    %p43 = scmp.eq.s32.totalorder %s17, 0
    %p44 = por %p42, %p43
    %s46 = sadd.s32 %s45, 1
    %p49 = scmp.eq.s32.totalorder %s11, 1
    %p50 = scmp.ne.s32.totalorder %s45, %s47
    %p51 = scmp.eq.s32.totalorder %s11, 0
    %p52 = por %p50, %p51
    %p53 = scmp.ne.s32.totalorder %s45, %s47
    %p54 = scmp.eq.s32.totalorder %s16, 1
    %p55 = por %p53, %p54
    %p56 = scmp.ne.s32.totalorder %s47, %s48
    %p57 = scmp.eq.s32.totalorder %s16, 0
    %p58 = por %p56, %p57
    %p59 = scmp.ne.s32.totalorder %s47, %s48
    %p60 = scmp.eq.s32.totalorder %s17, 1
    %p61 = por %p59, %p60
    %p63 = scmp.ne.s32.totalorder %s48, %s62
    %p64 = scmp.eq.s32.totalorder %s17, 0
    %p65 = por %p63, %p64
    %s67 = sadd.s32 %s66, 1
    %p70 = scmp.eq.s32.totalorder %s11, 1
    %p71 = scmp.ne.s32.totalorder %s66, %s68
    %p72 = scmp.eq.s32.totalorder %s11, 0
    %p73 = por %p71, %p72
    %p74 = scmp.ne.s32.totalorder %s66, %s68
    %p75 = scmp.eq.s32.totalorder %s16, 1
    %p76 = por %p74, %p75
    %p77 = scmp.ne.s32.totalorder %s68, %s69
    %p78 = scmp.eq.s32.totalorder %s16, 0
    %p79 = por %p77, %p78
    %p80 = scmp.ne.s32.totalorder %s68, %s69
    %p81 = scmp.eq.s32.totalorder %s17, 1
    %p82 = por %p80, %p81
    %p84 = scmp.ne.s32.totalorder %s69, %s83
    %p85 = scmp.eq.s32.totalorder %s17, 0
    %p86 = por %p84, %p85
    %s88 = sadd.s32 %s87, 1
    %p91 = scmp.eq.s32.totalorder %s11, 1
    %p92 = scmp.ne.s32.totalorder %s87, %s89
    %p93 = scmp.eq.s32.totalorder %s11, 0
    %p94 = por %p92, %p93
    %p95 = scmp.ne.s32.totalorder %s87, %s89
    %p96 = scmp.eq.s32.totalorder %s16, 1
    %p97 = por %p95, %p96
    %p98 = scmp.ne.s32.totalorder %s89, %s90
    %p99 = scmp.eq.s32.totalorder %s16, 0
    %p100 = por %p98, %p99
    %p101 = scmp.ne.s32.totalorder %s89, %s90
    %p102 = scmp.eq.s32.totalorder %s17, 1
    %p103 = por %p101, %p102
    %p105 = scmp.ne.s32.totalorder %s90, %s104
    %p106 = scmp.eq.s32.totalorder %s17, 0
    %p107 = por %p105, %p106
    %s109 = sadd.s32 %s108, 1
    %p112 = scmp.eq.s32.totalorder %s11, 1
    %p113 = scmp.ne.s32.totalorder %s108, %s110
    %p114 = scmp.eq.s32.totalorder %s11, 0
    %p115 = por %p113, %p114
    %p116 = scmp.ne.s32.totalorder %s108, %s110
    %p117 = scmp.eq.s32.totalorder %s16, 1
    %p118 = por %p116, %p117
    %p119 = scmp.ne.s32.totalorder %s110, %s111
    %p120 = scmp.eq.s32.totalorder %s16, 0
    %p121 = por %p119, %p120
    %p122 = scmp.ne.s32.totalorder %s110, %s111
    %p123 = scmp.eq.s32.totalorder %s17, 1
    %p124 = por %p122, %p123
    %p126 = scmp.ne.s32.totalorder %s111, %s125
    %p127 = scmp.eq.s32.totalorder %s17, 0
    %p128 = por %p126, %p127
    %s129 = ssub.s32 %s11, %s18
    %p130 = scmp.eq.s32.totalorder %s129, 0
    %s132 = sadd.s32 %s131, 1
    %s133 = scalar_select %p130, %s131, %s132
    %p136 = pneg %p130
    %p137 = scmp.eq.s32.totalorder %s11, 1
    %p138 = por %p136, %p137
    %p139 = scmp.ne.s32.totalorder %s131, %s134
    %p140 = scmp.eq.s32.totalorder %s11, 0
    %p141 = por %p139, %p140
    %p142 = scmp.ne.s32.totalorder %s131, %s134
    %p143 = scmp.eq.s32.totalorder %s16, 1
    %p144 = por %p142, %p143
    %p145 = scmp.ne.s32.totalorder %s134, %s135
    %p146 = scmp.eq.s32.totalorder %s16, 0
    %p147 = por %p145, %p146
    %p148 = scmp.ne.s32.totalorder %s134, %s135
    %p149 = scmp.eq.s32.totalorder %s17, 1
    %p150 = por %p148, %p149
    %p152 = scmp.ne.s32.totalorder %s135, %s151
    %p153 = scmp.eq.s32.totalorder %s17, 0
    %p154 = por %p152, %p153
    %p155 = scmp.le.s32.totalorder 1, %s11
    %p156 = scmp.lt.s32.totalorder %s11, 3
    %p157 = pnand %p155, %p156
    %p158 = pneg %p157
    // Predicated region
    $region9: #{edic_forward.14} parent=5 // pred_check
      _
    $region10: #{edic_forward.14} parent=5 // pred_check_branch
      %160 = sbr.rel (%p157) target = $region12
    $region11: #{edic_forward.14} parent=5 // pred_region
      %s161 = ssub.s32 %s11, 1
      // Predicated region
      $region13: #{edic_forward.14} parent=11 // pred_check
        %p162 = pneg %p58
      $region14: #{edic_forward.14} parent=11 // pred_check_branch
        %164 = sbr.rel (%p162) target = $region16
      $region15: #{edic_forward.14} parent=11 // pred_region
        _
      $region16: #{edic_forward.14} parent=11 // pred_fallthru
        _
      // Predicated region
      $region17: #{edic_forward.14} parent=11 // pred_check
        %p165 = pneg %p79
      $region18: #{edic_forward.14} parent=11 // pred_check_branch
        %167 = sbr.rel (%p165) target = $region20
      $region19: #{edic_forward.14} parent=11 // pred_region
        _
      $region20: #{edic_forward.14} parent=11 // pred_fallthru
        _
      // Predicated region
      $region21: #{edic_forward.14} parent=11 // pred_check
        %p168 = pneg %p100
      $region22: #{edic_forward.14} parent=11 // pred_check_branch
        %170 = sbr.rel (%p168) target = $region24
      $region23: #{edic_forward.14} parent=11 // pred_region
        _
      $region24: #{edic_forward.14} parent=11 // pred_fallthru
        _
      // Predicated region
      $region25: #{edic_forward.14} parent=11 // pred_check
        %p171 = pneg %p121
      $region26: #{edic_forward.14} parent=11 // pred_check_branch
        %173 = sbr.rel (%p171) target = $region28
      $region27: #{edic_forward.14} parent=11 // pred_region
        _
      $region28: #{edic_forward.14} parent=11 // pred_fallthru
        _
    $region12: #{edic_forward.14} parent=5 // pred_fallthru
      _
    %p174 = scmp.lt.s32.totalorder %s11, 2
    // Predicated region
    $region29: #{edic_forward.14} parent=5 // pred_check
      %p175 = pneg %p174
    $region30: #{edic_forward.14} parent=5 // pred_check_branch
      %177 = sbr.rel (%p175) target = $region32
    $region31: #{edic_forward.14} parent=5 // pred_region
      // Predicated region
      $region33: #{edic_forward.14} parent=31 // pred_check
        %p178 = pneg %p31
      $region34: #{edic_forward.14} parent=31 // pred_check_branch
        %180 = sbr.rel (%p178) target = $region36
      $region35: #{edic_forward.14} parent=31 // pred_region
        %s181 = smul.u32 2, %s11
        %p182 = scmp.lt.s32.totalorder %s181, 3
        %s183 = scalar_select %p182, %s181, 3
        %s184 = smul.addr %s183, 3
        %s185 = smul.addr %s184, 4
        %s186 = scalar_lea.vmem %s0, %s185
        %s187 = smul.u32 2, %s11
      $region36: #{edic_forward.14} parent=31 // pred_fallthru
        _
    $region32: #{edic_forward.14} parent=5 // pred_fallthru
      _
    %p188 = scmp.le.s32.totalorder 1, %s11
    %p189 = scmp.lt.s32.totalorder %s11, 3
    %p190 = pnand %p188, %p189
    %p191 = pneg %p190
    // Predicated region
    $region37: #{edic_forward.14} parent=5 // pred_check
      _
    $region38: #{edic_forward.14} parent=5 // pred_check_branch
      %193 = sbr.rel (%p190) target = $region40
    $region39: #{edic_forward.14} parent=5 // pred_region
      %s194 = ssub.s32 %s11, 1
      %s195 = smul.u32 2, %s16
      %p196 = scmp.lt.s32.totalorder %s195, 3
      %s197 = scalar_select %p196, %s195, 3
      %s198 = smul.addr %s197, 3
      %s199 = smul.addr %s198, 4
      %s200 = scalar_lea.vmem %s0, %s199
      %p201 = pneg %p37
      %p202 = pneg %p34
      %p203 = pneg %p58
      %p204 = pneg %p55
      %p205 = pneg %p79
      %p206 = pneg %p76
      %p207 = pneg %p100
      %p208 = pneg %p97
      %p209 = pneg %p121
      %p210 = pneg %p118
      %p211 = pneg %p147
      %p212 = pneg %p144
      %s213 = smul.u32 2, %s16
      %p214 = scmp.lt.s32.totalorder %s213, 3
      %s215 = scalar_select %p214, %s213, 3
      %s216 = smul.addr %s215, 8
      %s217 = scalar_lea.vmem %s5, %s216
      %s218 = smul.u32 2, %s16
      %p219 = scmp.lt.s32.totalorder %s218, 3
      %s220 = scalar_select %p219, %s218, 3
      %s221 = smul.addr %s220, 3
      %s222 = smul.addr %s221, 4
      %s223 = scalar_lea.vmem %s0, %s222
      %s224 = smul.u32 2, %s16
      %s225 = smul.u32 2, %s16
      %p226 = scmp.lt.s32.totalorder %s225, 3
      %s227 = scalar_select %p226, %s225, 3
      %s228 = smul.addr %s227, 8
      %s229 = scalar_lea.vmem %s5, %s228
      %s230 = smul.u32 2, %s16
      %v232 = vld [vmem:[%s223] sm:$0xff]
      %v233 = vld [vmem:[%s223 + $0x8] sm:$0xf]
      %v234 = vld [vmem:[%s223 + $0xc] sm:$0xff]
      %v235 = vld [vmem:[%s223 + $0x14] sm:$0xf]
      %v236 = vld [vmem:[%s1] sm:$0xf]
      %v237 = vld [vmem:[%s1 + $0x4] sm:$0xf]
      %v238 = vld [vmem:[%s1 + $0x8] sm:$0xf]
      %v239 = vld [vmem:[%s1 + $0xc] sm:$0xf]
      %v240 = vld [vmem:[%s1 + $0x10] sm:$0xf]
      %v241 = vld [vmem:[%s1 + $0x14] sm:$0xf]
      %v242 = vld [vmem:[%s1 + $0x18] sm:$0xf]
      %v243 = vld [vmem:[%s1 + $0x1c] sm:$0xf]
      %v244 = vld [vmem:[%s1 + $0x20] sm:$0xf]
      %v245 = vld [vmem:[%s1 + $0x24] sm:$0xf]
      %v246 = vld [vmem:[%s1 + $0x28] sm:$0xf]
      %v247 = vld [vmem:[%s1 + $0x2c] sm:$0xf]
      %v248 = vld [vmem:[%s1 + $0x30] sm:$0xf]
      %v249 = vld [vmem:[%s1 + $0x34] sm:$0xf]
      %v250 = vld [vmem:[%s1 + $0x38] sm:$0xf]
      %v251 = vld [vmem:[%s1 + $0x3c] sm:$0xf]
      %v252 = vld [vmem:[%s1 + $0x40] sm:$0xf]
      %v253 = vld [vmem:[%s1 + $0x44] sm:$0xf]
      %v254 = vld [vmem:[%s1 + $0x48] sm:$0xf]
      %v255 = vld [vmem:[%s1 + $0x4c] sm:$0xf]
      %v256 = vld [vmem:[%s1 + $0x50] sm:$0xf]
      %v257 = vld [vmem:[%s1 + $0x54] sm:$0xf]
      %v258 = vld [vmem:[%s1 + $0x58] sm:$0xf]
      %v259 = vld [vmem:[%s1 + $0x5c] sm:$0xf]
      %v260 = vld [vmem:[%s1 + $0x60] sm:$0xf]
      %v261 = vld [vmem:[%s1 + $0x64] sm:$0xf]
      %v262 = vld [vmem:[%s1 + $0x68] sm:$0xf]
      %v263 = vld [vmem:[%s1 + $0x6c] sm:$0xf]
      %v264 = vld [vmem:[%s1 + $0x70] sm:$0xf]
      %v265 = vld [vmem:[%s1 + $0x74] sm:$0xf]
      %v266 = vld [vmem:[%s1 + $0x78] sm:$0xf]
      %v267 = vld [vmem:[%s1 + $0x7c] sm:$0xf]
      %v268 = vld [vmem:[%s1 + $0x80] sm:$0xf]
      %v269 = vld [vmem:[%s1 + $0x84] sm:$0xf]
      %v270 = vld [vmem:[%s1 + $0x88] sm:$0xf]
      %v271 = vld [vmem:[%s1 + $0x8c] sm:$0xf]
      %v272 = vld [vmem:[%s2] sm:$0x1]
      %v274 = vlaneseq
      %v275 = vshrl.u32 %v274, 7
      %v276 = vsub.s32 0, %v275
      %v277 = vrot.slane %v272, %v276
      %v283 = vunpack.c.l.b16 %v232
      %v284 = vunpack.c.h.b16 %v232
      %v285 = vunpack.c.l.b16 %v233
      %v286 = vunpack.c.l.b16 %v234
      %v287 = vunpack.c.h.b16 %v234
      %v288 = vunpack.c.l.b16 %v235
      %v289 = vpack.c.b16 %v286, %v283
      %v290 = vpack.c.b16 %v287, %v284
      %v291 = vpack.c.b16 %v288, %v285
      %v330 = vunpack.c.l.b16 %v236
      %v331 = vunpack.c.l.b16 %v237
      %v332 = vunpack.c.l.b16 %v238
      %v333 = vunpack.c.l.b16 %v239
      %v334 = vunpack.c.l.b16 %v240
      %v335 = vunpack.c.l.b16 %v241
      %v336 = vunpack.c.l.b16 %v242
      %v337 = vunpack.c.l.b16 %v243
      %v338 = vunpack.c.l.b16 %v244
      %v339 = vunpack.c.l.b16 %v245
      %v340 = vunpack.c.l.b16 %v246
      %v341 = vunpack.c.l.b16 %v247
      %v342 = vunpack.c.l.b16 %v248
      %v343 = vunpack.c.l.b16 %v249
      %v344 = vunpack.c.l.b16 %v250
      %v345 = vunpack.c.l.b16 %v251
      %v346 = vunpack.c.l.b16 %v252
      %v347 = vunpack.c.l.b16 %v253
      %v348 = vunpack.c.l.b16 %v254
      %v349 = vunpack.c.l.b16 %v255
      %v350 = vunpack.c.l.b16 %v256
      %v351 = vunpack.c.l.b16 %v257
      %v352 = vunpack.c.l.b16 %v258
      %v353 = vunpack.c.l.b16 %v259
      %v354 = vunpack.c.l.b16 %v260
      %v355 = vunpack.c.l.b16 %v261
      %v356 = vunpack.c.l.b16 %v262
      %v357 = vunpack.c.l.b16 %v263
      %v358 = vunpack.c.l.b16 %v264
      %v359 = vunpack.c.l.b16 %v265
      %v360 = vunpack.c.l.b16 %v266
      %v361 = vunpack.c.l.b16 %v267
      %v362 = vunpack.c.l.b16 %v268
      %v363 = vunpack.c.l.b16 %v269
      %v364 = vunpack.c.l.b16 %v270
      %v365 = vunpack.c.l.b16 %v271
      %v366 = vpack.c.b16 %v331, %v330
      %v367 = vpack.c.b16 %v333, %v332
      %v368 = vpack.c.b16 %v335, %v334
      %v369 = vpack.c.b16 %v337, %v336
      %v370 = vpack.c.b16 %v339, %v338
      %v371 = vpack.c.b16 %v341, %v340
      %v372 = vpack.c.b16 %v343, %v342
      %v373 = vpack.c.b16 %v345, %v344
      %v374 = vpack.c.b16 %v347, %v346
      %v375 = vpack.c.b16 %v349, %v348
      %v376 = vpack.c.b16 %v351, %v350
      %v377 = vpack.c.b16 %v353, %v352
      %v378 = vpack.c.b16 %v355, %v354
      %v379 = vpack.c.b16 %v357, %v356
      %v380 = vpack.c.b16 %v359, %v358
      %v381 = vpack.c.b16 %v361, %v360
      %v382 = vpack.c.b16 %v363, %v362
      %v383 = vpack.c.b16 %v365, %v364
      %vm402 = vcmask 261120
      %v404 = vsel %vm402, %v291, 0
      %406 = vmatprep.subr.bf16.mxu0 0
      %407 = vmatpush1.bf16.msra.mxu0 %v366
      %408 = vmatprep.subr.bf16.mxu0 0
      %409 = vmatpush1.bf16.msra.mxu0 %v367
      %410 = vmatprep.subr.bf16.mxu0 0
      %411 = vmatpush1.bf16.msra.mxu0 %v368
      %412 = vmatprep.subr.bf16.mxu0 0
      %413 = vmatpush1.bf16.msra.mxu0 %v369
      %414 = vmatprep.subr.bf16.mxu0 0
      %415 = vmatpush1.bf16.msra.mxu0 %v370
      %416 = vmatprep.subr.bf16.mxu0 0
      %417 = vmatpush1.bf16.msra.mxu0 %v371
      %418 = vmatprep.subr.bf16.mxu0 0
      %419 = vmatpush1.bf16.msra.mxu0 %v372
      %420 = vmatprep.subr.bf16.mxu0 0
      %421 = vmatpush1.bf16.msra.mxu0 %v373
      %422 = vmatprep.subr.bf16.mxu0 0
      %423 = vmatpush1.bf16.msra.mxu0 %v374
      %424 = vmatprep.subr.bf16.mxu0 0
      %425 = vmatpush1.bf16.msra.mxu0 %v375
      %426 = vmatprep.subr.bf16.mxu0 0
      %427 = vmatpush1.bf16.msra.mxu0 %v376
      %428 = vmatprep.subr.bf16.mxu0 0
      %429 = vmatpush1.bf16.msra.mxu0 %v377
      %430 = vmatprep.subr.bf16.mxu0 0
      %431 = vmatpush1.bf16.msra.mxu0 %v378
      %432 = vmatprep.subr.bf16.mxu0 0
      %433 = vmatpush1.bf16.msra.mxu0 %v379
      %434 = vmatprep.subr.bf16.mxu0 0
      %435 = vmatpush1.bf16.msra.mxu0 %v380
      %436 = vmatprep.subr.bf16.mxu0 0
      %437 = vmatpush1.bf16.msra.mxu0 %v381
      %438 = vmatprep.mubr.bf16.mxu0 %v290
      %439 = vmatmul.mubr.bf16.gmra.mrb[0].mxu0 %v289
      %v440 = vpop.f32.mrb[0].mxu0
      %v441 = vadd.f32 %v277, %v440
      %v442 = vpop.f32.mrb[0].mxu0
      %v443 = vpop.f32.mrb[0].mxu0
      %v444 = vadd.f32 %v277, %v443
      %v445 = vpop.f32.mrb[0].mxu0
      %446 = vdwg.mxu0
      %447 = vmatprep.subr.bf16.mxu0 0
      %448 = vmatpush1.bf16.msra.mxu0 %v382
      %449 = vmatprep.subr.bf16.mxu0 0
      %450 = vmatpush1.bf16.msra.mxu0 %v383
      %451 = vmatprep.subr.bf16.mxu0 0
      %452 = vmatpush1.bf16.msra.mxu0 0
      %453 = vmatprep.subr.bf16.mxu0 0
      %454 = vmatpush1.bf16.msra.mxu0 0
      %455 = vmatprep.subr.bf16.mxu0 0
      %456 = vmatpush1.bf16.msra.mxu0 0
      %457 = vmatprep.subr.bf16.mxu0 0
      %458 = vmatpush1.bf16.msra.mxu0 0
      %459 = vmatprep.subr.bf16.mxu0 0
      %460 = vmatpush1.bf16.msra.mxu0 0
      %461 = vmatprep.subr.bf16.mxu0 0
      %462 = vmatpush1.bf16.msra.mxu0 0
      %463 = vmatprep.subr.bf16.mxu0 0
      %464 = vmatpush1.bf16.msra.mxu0 0
      %465 = vmatprep.subr.bf16.mxu0 0
      %466 = vmatpush1.bf16.msra.mxu0 0
      %467 = vmatprep.subr.bf16.mxu0 0
      %468 = vmatpush1.bf16.msra.mxu0 0
      %469 = vmatprep.subr.bf16.mxu0 0
      %470 = vmatpush1.bf16.msra.mxu0 0
      %471 = vmatprep.subr.bf16.mxu0 0
      %472 = vmatpush1.bf16.msra.mxu0 0
      %473 = vmatprep.subr.bf16.mxu0 0
      %474 = vmatpush1.bf16.msra.mxu0 0
      %475 = vmatprep.subr.bf16.mxu0 0
      %476 = vmatpush1.bf16.msra.mxu0 0
      %477 = vmatprep.subr.bf16.mxu0 0
      %478 = vmatpush1.bf16.msra.mxu0 0
      %479 = vmatprep.mubr.bf16.mxu0 0
      %480 = vmatmul.mubr.bf16.gmra.mrb[0].mxu0 %v404
      %v481 = vpop.f32.mrb[0].mxu0
      %v482 = vadd.f32 %v441, %v481
      %v483 = vpop.f32.mrb[0].mxu0
      %v484 = vpop.f32.mrb[0].mxu0
      %v485 = vadd.f32 %v444, %v484
      %v486 = vpop.f32.mrb[0].mxu0
      %487 = vdwg.mxu0
      %v488 = vmul.f32 %v482, %v482
      %v489 = vmul.f32 %v485, %v485
      %v490 = vld [vmem:[%s3] sm:$0xff]
      %v491 = vld [vmem:[%s3 + $0x8] sm:$0xff]
      %v492 = vld [vmem:[%s3 + $0x10] sm:$0xff]
      %v493 = vld [vmem:[%s3 + $0x18] sm:$0xff]
      %v494 = vld [vmem:[%s3 + $0x20] sm:$0xff]
      %v495 = vld [vmem:[%s3 + $0x28] sm:$0xff]
      %v496 = vld [vmem:[%s3 + $0x30] sm:$0xff]
      %v497 = vld [vmem:[%s3 + $0x38] sm:$0xff]
      %v498 = vld [vmem:[%s3 + $0x40] sm:$0xff]
      %v499 = vld [vmem:[%s3 + $0x48] sm:$0xff]
      %v500 = vld [vmem:[%s3 + $0x50] sm:$0xff]
      %v501 = vld [vmem:[%s3 + $0x58] sm:$0xff]
      %v502 = vld [vmem:[%s3 + $0x60] sm:$0xff]
      %v503 = vld [vmem:[%s3 + $0x68] sm:$0xff]
      %v504 = vld [vmem:[%s3 + $0x70] sm:$0xff]
      %v505 = vld [vmem:[%s3 + $0x78] sm:$0xff]
      %v506 = vld [vmem:[%s4] sm:$0x1]
      %v508 = vlaneseq
      %v509 = vshrl.u32 %v508, 7
      %v510 = vsub.s32 0, %v509
      %v511 = vrot.slane %v506, %v510
      %513 = vmatprep.subr.mxu0 0.0
      %514 = vmatpush1.msra.mxu0 %v490
      %515 = vmatprep.subr.mxu0 0.0
      %516 = vmatpush1.msra.mxu0 %v491
      %517 = vmatprep.subr.mxu0 0.0
      %518 = vmatpush1.msra.mxu0 %v492
      %519 = vmatprep.subr.mxu0 0.0
      %520 = vmatpush1.msra.mxu0 %v493
      %521 = vmatprep.subr.mxu0 0.0
      %522 = vmatpush1.msra.mxu0 %v494
      %523 = vmatprep.subr.mxu0 0.0
      %524 = vmatpush1.msra.mxu0 %v495
      %525 = vmatprep.subr.mxu0 0.0
      %526 = vmatpush1.msra.mxu0 %v496
      %527 = vmatprep.subr.mxu0 0.0
      %528 = vmatpush1.msra.mxu0 %v497
      %529 = vmatprep.subr.mxu0 0.0
      %530 = vmatpush1.msra.mxu0 %v498
      %531 = vmatprep.subr.mxu0 0.0
      %532 = vmatpush1.msra.mxu0 %v499
      %533 = vmatprep.subr.mxu0 0.0
      %534 = vmatpush1.msra.mxu0 %v500
      %535 = vmatprep.subr.mxu0 0.0
      %536 = vmatpush1.msra.mxu0 %v501
      %537 = vmatprep.subr.mxu0 0.0
      %538 = vmatpush1.msra.mxu0 %v502
      %539 = vmatprep.subr.mxu0 0.0
      %540 = vmatpush1.msra.mxu0 %v503
      %541 = vmatprep.subr.mxu0 0.0
      %542 = vmatpush1.msra.mxu0 %v504
      %543 = vmatprep.subr.mxu0 0.0
      %544 = vmatpush1.msra.mxu0 %v505
      %545 = vmatprep.subr.mxu0 0.0
      %546 = vmatpush1.msra.mxu0 0.0
      %547 = vmatprep.subr.mxu0 0.0
      %548 = vmatpush1.msra.mxu0 0.0
      %549 = vmatprep.subr.mxu0 0.0
      %550 = vmatpush1.msra.mxu0 0.0
      %551 = vmatprep.subr.mxu0 0.0
      %552 = vmatpush1.msra.mxu0 0.0
      %553 = vmatprep.subr.mxu0 0.0
      %554 = vmatpush1.msra.mxu0 0.0
      %555 = vmatprep.subr.mxu0 0.0
      %556 = vmatpush1.msra.mxu0 0.0
      %557 = vmatprep.subr.mxu0 0.0
      %558 = vmatpush1.msra.mxu0 0.0
      %559 = vmatprep.subr.mxu0 0.0
      %560 = vmatpush1.msra.mxu0 0.0
      %561 = vmatprep.subr.mxu0 0.0
      %562 = vmatpush1.msra.mxu0 0.0
      %563 = vmatprep.subr.mxu0 0.0
      %564 = vmatpush1.msra.mxu0 0.0
      %565 = vmatprep.subr.mxu0 0.0
      %566 = vmatpush1.msra.mxu0 0.0
      %567 = vmatprep.subr.mxu0 0.0
      %568 = vmatpush1.msra.mxu0 0.0
      %569 = vmatprep.subr.mxu0 0.0
      %570 = vmatpush1.msra.mxu0 0.0
      %571 = vmatprep.subr.mxu0 0.0
      %572 = vmatpush1.msra.mxu0 0.0
      %573 = vmatprep.subr.mxu0 0.0
      %574 = vmatpush1.msra.mxu0 0.0
      %575 = vmatprep.subr.mxu0 0.0
      %576 = vmatpush1.msra.mxu0 0.0
      %577 = vmatprep.mubr.f32.mxu0 0.0
      %578 = vmatmul.mubr.f32.gmra.mrb[0].mxu0 %v488
      %v579 = vpop.f32.mrb[0].mxu0
      %v580 = vadd.f32 %v511, %v579
      %v581 = vpop.f32.mrb[0].mxu0
      %582 = vmatprep.mubr.f32.mxu0 0.0
      %583 = vmatmul.mubr.f32.gmra.mrb[0].mxu0 %v489
      %v584 = vpop.f32.mrb[0].mxu0
      %v585 = vadd.f32 %v511, %v584
      %v586 = vpop.f32.mrb[0].mxu0
      %587 = vdwg.mxu0
      %v588 = vrsqrt.pop %v580
      %v589 = vmul.f32 %v580, %v588
      %vm590 = vcmp.eq.f32.partialorder %v580, inf
      %v591 = vsel %vm590, %v580, %v589
      %vm592 = vcmp.eq.f32.partialorder %v580, 0.0
      %v593 = vand.u32 %v580, 2147483648
      %v594 = vsel %vm592, %v593, %v591
      %v595 = vrsqrt.pop %v585
      %v596 = vmul.f32 %v585, %v595
      %vm597 = vcmp.eq.f32.partialorder %v585, inf
      %v598 = vsel %vm597, %v585, %v596
      %vm599 = vcmp.eq.f32.partialorder %v585, 0.0
      %v600 = vand.u32 %v585, 2147483648
      %v601 = vsel %vm599, %v600, %v598
      %v602 = vmul.f32 %v482, %v594
      %v603 = vmul.f32 %v485, %v601
      %604 = vst [vmem:[%s229] sm:$0xff] %v602
      %605 = vst [vmem:[%s229 + $0x8] sm:$0xff] %v603
      %s606 = smul.u32 2, %s16
      %p607 = scmp.lt.s32.totalorder %s606, 3
      %s608 = scalar_select %p607, %s606, 3
      %s609 = smul.addr %s608, 8
      %s610 = scalar_lea.vmem %s5, %s609
      // Predicated region
      $region41: #{edic_forward.14} parent=39 // pred_check
        %p611 = pneg %p144
      $region42: #{edic_forward.14} parent=39 // pred_check_branch
        %613 = sbr.rel (%p611) target = $region44
      $region43: #{edic_forward.14} parent=39 // pred_region
        %s614 = smul.u32 2, %s16
      $region44: #{edic_forward.14} parent=39 // pred_fallthru
        _
    $region40: #{edic_forward.14} parent=5 // pred_fallthru
      _
    %p615 = scmp.le.s32.totalorder 2, %s11
    // Predicated region
    $region45: #{edic_forward.14} parent=5 // pred_check
      %p616 = pneg %p615
    $region46: #{edic_forward.14} parent=5 // pred_check_branch
      %618 = sbr.rel (%p616) target = $region48
    $region47: #{edic_forward.14} parent=5 // pred_region
      %s619 = ssub.s32 %s11, 2
      // Predicated region
      $region49: #{edic_forward.14} parent=47 // pred_check
        %p620 = pneg %p150
      $region50: #{edic_forward.14} parent=47 // pred_check_branch
        %622 = sbr.rel (%p620) target = $region52
      $region51: #{edic_forward.14} parent=47 // pred_region
        %s623 = smul.u32 2, %s17
        %p624 = scmp.lt.s32.totalorder %s623, 3
        %s625 = scalar_select %p624, %s623, 3
        %s626 = smul.addr %s625, 8
        %s627 = scalar_lea.vmem %s5, %s626
      $region52: #{edic_forward.14} parent=47 // pred_fallthru
        _
    $region48: #{edic_forward.14} parent=5 // pred_fallthru
      _
  $region6: #{edic_forward.14} parent=0 // loop_footer
    %s15 = sadd.s32 1, %s11
  $region7: #{edic_forward.14} parent=0 // loop_footer_branch
    %10 = sbr.rel target = $region3
  $region8: #{edic_forward.14} parent=0 // loop_exit
    _

// kernel: tile.68
$region0: #{tile.68}
  #allocation0 [shape = 's32[1]{0}', space=sflag, size = 0x4, scoped, tag = 'scoped memory for tile.68']
  %s0 = inlined_call_operand.vmem [shape: f32[3], index: 0, kind: input, shape index: {}]
  %s1 = inlined_call_operand.vmem [shape: f32[4,3], index: 1, kind: output, shape index: {}]
  // Predicated region
  $region2: #{tile.68} parent=0 // pred_check
    _
  $region3: #{tile.68} parent=0 // pred_check_branch
    %3 = sbr.rel (0) target = $region5
  $region4: #{tile.68} parent=0 // pred_region
    _
  $region5: #{tile.68} parent=0 // pred_fallthru
    _
  %v4 = vld [vmem:[%s0] ss:$0 sm:$0xff]
  %5 = vst [vmem:[%s1] sm:$0xf] %v4

// kernel: tile.69
$region0: #{tile.69}
  %s0 = inlined_call_operand.vmem [shape: f32[4,3], index: 0, kind: input, shape index: {}]
  %s1 = inlined_call_operand.vmem [shape: f32[1,12], index: 1, kind: output, shape index: {}]
  $region1: #{tile.69} parent=0
    #allocation0 [shape = 'u8[4096]{0}', space=vmem, size = 0x1000, scoped, tag = 'scoped mem for output reshape']
    #allocation1 [shape = 'u8[4096]{0}', space=vmem, size = 0x1000, scoped, tag = 'scoped mem for input reshape']
    %s3 = sshllo.u32 0, 4
    %v4 = vld [vmem:[%s0] sm:%s3]
    %5 = vst [vmem:[#allocation1] sm:%s3] %v4
    %v6 = vld [vmem:[#allocation1] sm:$0x1]
    %vm7 = vcmask 23552
    %8 = vst.msk [vmem:[#allocation0] sm:$0x1] %vm7, %v6
    %s9 = scalar_lea.vmem [#allocation1], 3
    %v10 = vld [vmem:[%s9] sm:$0x1]
    %11 = vrot.lane.b32.xlu0 %v10, 9
    %v12 = vpop.permute.xlu0 %11
    %vm13 = vcmask 97352
    %14 = vst.msk [vmem:[#allocation0] sm:$0x1] %vm13, %v12
    %s15 = scalar_lea.vmem [#allocation1], 2
    %v16 = vld [vmem:[%s15] sm:$0x1]
    %17 = vrot.lane.b32.xlu0 %v16, 6
    %v18 = vpop.permute.xlu0 %17
    %vm19 = vcmask 72752
    %20 = vst.msk [vmem:[#allocation0] sm:$0x1] %vm19, %v18
    %s21 = scalar_lea.vmem [#allocation1], 1
    %v22 = vld [vmem:[%s21] sm:$0x1]
    %23 = vrot.lane.b32.xlu0 %v22, 3
    %v24 = vpop.permute.xlu0 %23
    %vm25 = vcmask 48152
    %26 = vst.msk [vmem:[#allocation0] sm:$0x1] %vm25, %v24
    %s28 = sshllo.u32 0, 1
    %v30 = vld [vmem:[#allocation0] sm:%s28]
    %s31 = sshllo.u32 0, 1
    %32 = vst [vmem:[%s1] sm:%s31] %v30

// kernel: edic_forward.15
$region0: #{edic_forward.15}
  #allocation0 [shape = 'u32[]', space=smem, size = 0x4, offset = 0x4, fixed_abs, tag = 'smem constant byte address 0x4 - core index']
  #allocation1 [shape = 'u32[144,128]{1,0:T(1,128)}', space=vmem, size = 0x12000, scoped, tag = 'internal scratch']
  %s0 = inlined_call_operand.vmem [shape: bf16[128,288], index: 0, kind: input, shape index: {}]
  %s1 = inlined_call_operand.vmem [shape: bf16[288,12], index: 1, kind: input, shape index: {}]
  %s2 = inlined_call_operand.vmem [shape: f32[1,12], index: 2, kind: input, shape index: {}]
  %s3 = inlined_call_operand.vmem [shape: f32[128,12], index: 3, kind: output, shape index: {}]
  %s4 = sld [smem:[#allocation0]]
  $region45: #{edic_forward.15} parent=0
    _
  %s6 = ssub.s32 1, %s4
  %s7 = scalar_select 0, %s6, %s4
  loop: start=0, step=1, limit=4
  $region2: #{edic_forward.15} parent=0 // loop_pre_header
    _
  $region3: #{edic_forward.15} parent=0 // loop_header
    %s9 = sphi 0, %s13
    %p10 = scmp.ge.s32.totalorder %s9, 4
    %s19 = sphi 0, %s21
    %s22 = sphi 0, %s19
    %s23 = sphi 0, %s22
    %s39 = sphi 0, %s23
    %s43 = sphi 0, %s43
    %s45 = sphi 0, %s43
    %s46 = sphi 0, %s45
    %s60 = sphi 0, %s46
    %s64 = sphi 0, %s64
    %s66 = sphi 0, %s64
    %s67 = sphi 0, %s66
    %s81 = sphi 0, %s67
    %s87 = sphi 0, %s89
    %s90 = sphi 0, %s87
    %s91 = sphi 0, %s90
    %s107 = sphi 0, %s91
  $region4: #{edic_forward.15} parent=0 // loop_header_branch
    %12 = sbr.rel (%p10) target = $region8
  $region5: #{edic_forward.15} parent=0 // loop_body
    %s14 = ssub.s32 %s9, 1
    %s15 = ssub.s32 %s9, 2
    %s16 = sadd.s32 %s9, 1
    %s17 = ssub.s32 %s9, %s16
    %p18 = scmp.eq.s32.totalorder %s17, 0
    %s20 = sadd.s32 %s19, 1
    %s21 = scalar_select %p18, %s19, %s20
    %p24 = pneg %p18
    %p25 = scmp.eq.s32.totalorder %s9, 1
    %p26 = por %p24, %p25
    %p27 = scmp.ne.s32.totalorder %s19, %s22
    %p28 = scmp.eq.s32.totalorder %s9, 0
    %p29 = por %p27, %p28
    %p30 = scmp.ne.s32.totalorder %s19, %s22
    %p31 = scmp.eq.s32.totalorder %s14, 1
    %p32 = por %p30, %p31
    %p33 = scmp.ne.s32.totalorder %s22, %s23
    %p34 = scmp.eq.s32.totalorder %s14, 0
    %p35 = por %p33, %p34
    %p36 = scmp.ne.s32.totalorder %s22, %s23
    %p37 = scmp.eq.s32.totalorder %s15, 1
    %p38 = por %p36, %p37
    %p40 = scmp.ne.s32.totalorder %s23, %s39
    %p41 = scmp.eq.s32.totalorder %s15, 0
    %p42 = por %p40, %p41
    %s44 = sadd.s32 %s43, 1
    %p47 = scmp.eq.s32.totalorder %s9, 1
    %p48 = scmp.ne.s32.totalorder %s43, %s45
    %p49 = scmp.eq.s32.totalorder %s9, 0
    %p50 = por %p48, %p49
    %p51 = scmp.ne.s32.totalorder %s43, %s45
    %p52 = scmp.eq.s32.totalorder %s14, 1
    %p53 = por %p51, %p52
    %p54 = scmp.ne.s32.totalorder %s45, %s46
    %p55 = scmp.eq.s32.totalorder %s14, 0
    %p56 = por %p54, %p55
    %p57 = scmp.ne.s32.totalorder %s45, %s46
    %p58 = scmp.eq.s32.totalorder %s15, 1
    %p59 = por %p57, %p58
    %p61 = scmp.ne.s32.totalorder %s46, %s60
    %p62 = scmp.eq.s32.totalorder %s15, 0
    %p63 = por %p61, %p62
    %s65 = sadd.s32 %s64, 1
    %p68 = scmp.eq.s32.totalorder %s9, 1
    %p69 = scmp.ne.s32.totalorder %s64, %s66
    %p70 = scmp.eq.s32.totalorder %s9, 0
    %p71 = por %p69, %p70
    %p72 = scmp.ne.s32.totalorder %s64, %s66
    %p73 = scmp.eq.s32.totalorder %s14, 1
    %p74 = por %p72, %p73
    %p75 = scmp.ne.s32.totalorder %s66, %s67
    %p76 = scmp.eq.s32.totalorder %s14, 0
    %p77 = por %p75, %p76
    %p78 = scmp.ne.s32.totalorder %s66, %s67
    %p79 = scmp.eq.s32.totalorder %s15, 1
    %p80 = por %p78, %p79
    %p82 = scmp.ne.s32.totalorder %s67, %s81
    %p83 = scmp.eq.s32.totalorder %s15, 0
    %p84 = por %p82, %p83
    %s85 = ssub.s32 %s9, %s16
    %p86 = scmp.eq.s32.totalorder %s85, 0
    %s88 = sadd.s32 %s87, 1
    %s89 = scalar_select %p86, %s87, %s88
    %p92 = pneg %p86
    %p93 = scmp.eq.s32.totalorder %s9, 1
    %p94 = por %p92, %p93
    %p95 = scmp.ne.s32.totalorder %s87, %s90
    %p96 = scmp.eq.s32.totalorder %s9, 0
    %p97 = por %p95, %p96
    %p98 = scmp.ne.s32.totalorder %s87, %s90
    %p99 = scmp.eq.s32.totalorder %s14, 1
    %p100 = por %p98, %p99
    %p101 = scmp.ne.s32.totalorder %s90, %s91
    %p102 = scmp.eq.s32.totalorder %s14, 0
    %p103 = por %p101, %p102
    %p104 = scmp.ne.s32.totalorder %s90, %s91
    %p105 = scmp.eq.s32.totalorder %s15, 1
    %p106 = por %p104, %p105
    %p108 = scmp.ne.s32.totalorder %s91, %s107
    %p109 = scmp.eq.s32.totalorder %s15, 0
    %p110 = por %p108, %p109
    %p111 = scmp.le.s32.totalorder 1, %s9
    %p112 = scmp.lt.s32.totalorder %s9, 3
    %p113 = pnand %p111, %p112
    %p114 = pneg %p113
    // Predicated region
    $region9: #{edic_forward.15} parent=5 // pred_check
      _
    $region10: #{edic_forward.15} parent=5 // pred_check_branch
      %116 = sbr.rel (%p113) target = $region12
    $region11: #{edic_forward.15} parent=5 // pred_region
      %s117 = ssub.s32 %s9, 1
      // Predicated region
      $region13: #{edic_forward.15} parent=11 // pred_check
        %p118 = pneg %p56
      $region14: #{edic_forward.15} parent=11 // pred_check_branch
        %120 = sbr.rel (%p118) target = $region16
      $region15: #{edic_forward.15} parent=11 // pred_region
        _
      $region16: #{edic_forward.15} parent=11 // pred_fallthru
        _
      // Predicated region
      $region17: #{edic_forward.15} parent=11 // pred_check
        %p121 = pneg %p77
      $region18: #{edic_forward.15} parent=11 // pred_check_branch
        %123 = sbr.rel (%p121) target = $region20
      $region19: #{edic_forward.15} parent=11 // pred_region
        _
      $region20: #{edic_forward.15} parent=11 // pred_fallthru
        _
    $region12: #{edic_forward.15} parent=5 // pred_fallthru
      _
    %p124 = scmp.lt.s32.totalorder %s9, 2
    // Predicated region
    $region21: #{edic_forward.15} parent=5 // pred_check
      %p125 = pneg %p124
    $region22: #{edic_forward.15} parent=5 // pred_check_branch
      %127 = sbr.rel (%p125) target = $region24
    $region23: #{edic_forward.15} parent=5 // pred_region
      // Predicated region
      $region25: #{edic_forward.15} parent=23 // pred_check
        %p128 = pneg %p29
      $region26: #{edic_forward.15} parent=23 // pred_check_branch
        %130 = sbr.rel (%p128) target = $region28
      $region27: #{edic_forward.15} parent=23 // pred_region
        %s131 = smul.u32 8, %s9
        %p132 = scmp.lt.s32.totalorder %s131, 15
        %s133 = scalar_select %p132, %s131, 15
        %s134 = smul.addr %s133, 3
        %s135 = smul.addr %s134, 4
        %s136 = scalar_lea.vmem %s0, %s135
        %s137 = smul.u32 8, %s9
      $region28: #{edic_forward.15} parent=23 // pred_fallthru
        _
    $region24: #{edic_forward.15} parent=5 // pred_fallthru
      _
    %p138 = scmp.le.s32.totalorder 1, %s9
    %p139 = scmp.lt.s32.totalorder %s9, 3
    %p140 = pnand %p138, %p139
    %p141 = pneg %p140
    // Predicated region
    $region29: #{edic_forward.15} parent=5 // pred_check
      _
    $region30: #{edic_forward.15} parent=5 // pred_check_branch
      %143 = sbr.rel (%p140) target = $region32
    $region31: #{edic_forward.15} parent=5 // pred_region
      %s144 = ssub.s32 %s9, 1
      %s145 = smul.u32 8, %s14
      %p146 = scmp.lt.s32.totalorder %s145, 15
      %s147 = scalar_select %p146, %s145, 15
      %s148 = smul.addr %s147, 3
      %s149 = smul.addr %s148, 4
      %s150 = scalar_lea.vmem %s0, %s149
      %p151 = pneg %p35
      %p152 = pneg %p32
      %p153 = pneg %p56
      %p154 = pneg %p53
      %p155 = pneg %p77
      %p156 = pneg %p74
      %p157 = pneg %p103
      %p158 = pneg %p100
      %s159 = smul.u32 8, %s14
      %p160 = scmp.lt.s32.totalorder %s159, 15
      %s161 = scalar_select %p160, %s159, 15
      %s162 = smul.addr %s161, 8
      %s163 = scalar_lea.vmem %s3, %s162
      %s164 = smul.u32 8, %s14
      %p165 = scmp.lt.s32.totalorder %s164, 15
      %s166 = scalar_select %p165, %s164, 15
      %s167 = smul.addr %s166, 3
      %s168 = smul.addr %s167, 4
      %s169 = scalar_lea.vmem %s0, %s168
      %s170 = smul.u32 8, %s14
      %s171 = smul.u32 8, %s14
      %p172 = scmp.lt.s32.totalorder %s171, 15
      %s173 = scalar_select %p172, %s171, 15
      %s174 = smul.addr %s173, 8
      %s175 = scalar_lea.vmem %s3, %s174
      %s176 = smul.u32 8, %s14
      %v178 = vld [vmem:[%s169] sm:$0xff]
      %v179 = vld [vmem:[%s169 + $0x8] sm:$0xf]
      %v180 = vld [vmem:[%s169 + $0xc] sm:$0xff]
      %v181 = vld [vmem:[%s169 + $0x14] sm:$0xf]
      %v182 = vld [vmem:[%s169 + $0x18] sm:$0xff]
      %v183 = vld [vmem:[%s169 + $0x20] sm:$0xf]
      %v184 = vld [vmem:[%s169 + $0x24] sm:$0xff]
      %v185 = vld [vmem:[%s169 + $0x2c] sm:$0xf]
      %v186 = vld [vmem:[%s169 + $0x30] sm:$0xff]
      %v187 = vld [vmem:[%s169 + $0x38] sm:$0xf]
      %v188 = vld [vmem:[%s169 + $0x3c] sm:$0xff]
      %v189 = vld [vmem:[%s169 + $0x44] sm:$0xf]
      %v190 = vld [vmem:[%s169 + $0x48] sm:$0xff]
      %v191 = vld [vmem:[%s169 + $0x50] sm:$0xf]
      %v192 = vld [vmem:[%s169 + $0x54] sm:$0xff]
      %v193 = vld [vmem:[%s169 + $0x5c] sm:$0xf]
      %v194 = vld [vmem:[%s1] sm:$0xf]
      %v195 = vld [vmem:[%s1 + $0x4] sm:$0xf]
      %v196 = vld [vmem:[%s1 + $0x8] sm:$0xf]
      %v197 = vld [vmem:[%s1 + $0xc] sm:$0xf]
      %v198 = vld [vmem:[%s1 + $0x10] sm:$0xf]
      %v199 = vld [vmem:[%s1 + $0x14] sm:$0xf]
      %v200 = vld [vmem:[%s1 + $0x18] sm:$0xf]
      %v201 = vld [vmem:[%s1 + $0x1c] sm:$0xf]
      %v202 = vld [vmem:[%s1 + $0x20] sm:$0xf]
      %v203 = vld [vmem:[%s1 + $0x24] sm:$0xf]
      %v204 = vld [vmem:[%s1 + $0x28] sm:$0xf]
      %v205 = vld [vmem:[%s1 + $0x2c] sm:$0xf]
      %v206 = vld [vmem:[%s1 + $0x30] sm:$0xf]
      %v207 = vld [vmem:[%s1 + $0x34] sm:$0xf]
      %v208 = vld [vmem:[%s1 + $0x38] sm:$0xf]
      %v209 = vld [vmem:[%s1 + $0x3c] sm:$0xf]
      %v210 = vld [vmem:[%s1 + $0x40] sm:$0xf]
      %v211 = vld [vmem:[%s1 + $0x44] sm:$0xf]
      %v212 = vld [vmem:[%s1 + $0x48] sm:$0xf]
      %v213 = vld [vmem:[%s1 + $0x4c] sm:$0xf]
      %v214 = vld [vmem:[%s1 + $0x50] sm:$0xf]
      %v215 = vld [vmem:[%s1 + $0x54] sm:$0xf]
      %v216 = vld [vmem:[%s1 + $0x58] sm:$0xf]
      %v217 = vld [vmem:[%s1 + $0x5c] sm:$0xf]
      %v218 = vld [vmem:[%s1 + $0x60] sm:$0xf]
      %v219 = vld [vmem:[%s1 + $0x64] sm:$0xf]
      %v220 = vld [vmem:[%s1 + $0x68] sm:$0xf]
      %v221 = vld [vmem:[%s1 + $0x6c] sm:$0xf]
      %v222 = vld [vmem:[%s1 + $0x70] sm:$0xf]
      %v223 = vld [vmem:[%s1 + $0x74] sm:$0xf]
      %v224 = vld [vmem:[%s1 + $0x78] sm:$0xf]
      %v225 = vld [vmem:[%s1 + $0x7c] sm:$0xf]
      %v226 = vld [vmem:[%s1 + $0x80] sm:$0xf]
      %v227 = vld [vmem:[%s1 + $0x84] sm:$0xf]
      %v228 = vld [vmem:[%s1 + $0x88] sm:$0xf]
      %v229 = vld [vmem:[%s1 + $0x8c] sm:$0xf]
      %v230 = vld [vmem:[%s2] sm:$0x1]
      %v232 = vlaneseq
      %v233 = vshrl.u32 %v232, 7
      %v234 = vsub.s32 0, %v233
      %v235 = vrot.slane %v230, %v234
      %v253 = vunpack.c.l.b16 %v178
      %v254 = vunpack.c.h.b16 %v178
      %v255 = vunpack.c.l.b16 %v179
      %v256 = vunpack.c.l.b16 %v180
      %v257 = vunpack.c.h.b16 %v180
      %v258 = vunpack.c.l.b16 %v181
      %v259 = vunpack.c.l.b16 %v182
      %v260 = vunpack.c.h.b16 %v182
      %v261 = vunpack.c.l.b16 %v183
      %v262 = vunpack.c.l.b16 %v184
      %v263 = vunpack.c.h.b16 %v184
      %v264 = vunpack.c.l.b16 %v185
      %v265 = vunpack.c.l.b16 %v186
      %v266 = vunpack.c.h.b16 %v186
      %v267 = vunpack.c.l.b16 %v187
      %v268 = vunpack.c.l.b16 %v188
      %v269 = vunpack.c.h.b16 %v188
      %v270 = vunpack.c.l.b16 %v189
      %v271 = vunpack.c.l.b16 %v190
      %v272 = vunpack.c.h.b16 %v190
      %v273 = vunpack.c.l.b16 %v191
      %v274 = vunpack.c.l.b16 %v192
      %v275 = vunpack.c.h.b16 %v192
      %v276 = vunpack.c.l.b16 %v193
      %v277 = vpack.c.b16 %v256, %v253
      %v278 = vpack.c.b16 %v257, %v254
      %v279 = vpack.c.b16 %v258, %v255
      %v280 = vpack.c.b16 %v262, %v259
      %v281 = vpack.c.b16 %v263, %v260
      %v282 = vpack.c.b16 %v264, %v261
      %v283 = vpack.c.b16 %v268, %v265
      %v284 = vpack.c.b16 %v269, %v266
      %v285 = vpack.c.b16 %v270, %v267
      %v286 = vpack.c.b16 %v274, %v271
      %v287 = vpack.c.b16 %v275, %v272
      %v288 = vpack.c.b16 %v276, %v273
      %v333 = vunpack.c.l.b16 %v194
      %v334 = vunpack.c.l.b16 %v195
      %v335 = vunpack.c.l.b16 %v196
      %v336 = vunpack.c.l.b16 %v197
      %v337 = vunpack.c.l.b16 %v198
      %v338 = vunpack.c.l.b16 %v199
      %v339 = vunpack.c.l.b16 %v200
      %v340 = vunpack.c.l.b16 %v201
      %v341 = vunpack.c.l.b16 %v202
      %v342 = vunpack.c.l.b16 %v203
      %v343 = vunpack.c.l.b16 %v204
      %v344 = vunpack.c.l.b16 %v205
      %v345 = vunpack.c.l.b16 %v206
      %v346 = vunpack.c.l.b16 %v207
      %v347 = vunpack.c.l.b16 %v208
      %v348 = vunpack.c.l.b16 %v209
      %v349 = vunpack.c.l.b16 %v210
      %v350 = vunpack.c.l.b16 %v211
      %v351 = vunpack.c.l.b16 %v212
      %v352 = vunpack.c.l.b16 %v213
      %v353 = vunpack.c.l.b16 %v214
      %v354 = vunpack.c.l.b16 %v215
      %v355 = vunpack.c.l.b16 %v216
      %v356 = vunpack.c.l.b16 %v217
      %v357 = vunpack.c.l.b16 %v218
      %v358 = vunpack.c.l.b16 %v219
      %v359 = vunpack.c.l.b16 %v220
      %v360 = vunpack.c.l.b16 %v221
      %v361 = vunpack.c.l.b16 %v222
      %v362 = vunpack.c.l.b16 %v223
      %v363 = vunpack.c.l.b16 %v224
      %v364 = vunpack.c.l.b16 %v225
      %v365 = vunpack.c.l.b16 %v226
      %v366 = vunpack.c.l.b16 %v227
      %v367 = vunpack.c.l.b16 %v228
      %v368 = vunpack.c.l.b16 %v229
      %v369 = vpack.c.b16 %v334, %v333
      %v370 = vpack.c.b16 %v336, %v335
      %v371 = vpack.c.b16 %v338, %v337
      %v372 = vpack.c.b16 %v340, %v339
      %v373 = vpack.c.b16 %v342, %v341
      %v374 = vpack.c.b16 %v344, %v343
      %v375 = vpack.c.b16 %v346, %v345
      %v376 = vpack.c.b16 %v348, %v347
      %v377 = vpack.c.b16 %v350, %v349
      %v378 = vpack.c.b16 %v352, %v351
      %v379 = vpack.c.b16 %v354, %v353
      %v380 = vpack.c.b16 %v356, %v355
      %v381 = vpack.c.b16 %v358, %v357
      %v382 = vpack.c.b16 %v360, %v359
      %v383 = vpack.c.b16 %v362, %v361
      %v384 = vpack.c.b16 %v364, %v363
      %v385 = vpack.c.b16 %v366, %v365
      %v386 = vpack.c.b16 %v368, %v367
      %vm405 = vcmask 261120
      %v407 = vsel %vm405, %v279, 0
      %v410 = vsel %vm405, %v282, 0
      %v413 = vsel %vm405, %v285, 0
      %v416 = vsel %vm405, %v288, 0
      %418 = vmatprep.subr.bf16.mxu0 0
      %419 = vmatpush1.bf16.msra.mxu0 %v369
      %420 = vmatprep.subr.bf16.mxu0 0
      %421 = vmatpush1.bf16.msra.mxu0 %v370
      %422 = vmatprep.subr.bf16.mxu0 0
      %423 = vmatpush1.bf16.msra.mxu0 %v371
      %424 = vmatprep.subr.bf16.mxu0 0
      %425 = vmatpush1.bf16.msra.mxu0 %v372
      %426 = vmatprep.subr.bf16.mxu0 0
      %427 = vmatpush1.bf16.msra.mxu0 %v373
      %428 = vmatprep.subr.bf16.mxu0 0
      %429 = vmatpush1.bf16.msra.mxu0 %v374
      %430 = vmatprep.subr.bf16.mxu0 0
      %431 = vmatpush1.bf16.msra.mxu0 %v375
      %432 = vmatprep.subr.bf16.mxu0 0
      %433 = vmatpush1.bf16.msra.mxu0 %v376
      %434 = vmatprep.subr.bf16.mxu0 0
      %435 = vmatpush1.bf16.msra.mxu0 %v377
      %436 = vmatprep.subr.bf16.mxu0 0
      %437 = vmatpush1.bf16.msra.mxu0 %v378
      %438 = vmatprep.subr.bf16.mxu0 0
      %439 = vmatpush1.bf16.msra.mxu0 %v379
      %440 = vmatprep.subr.bf16.mxu0 0
      %441 = vmatpush1.bf16.msra.mxu0 %v380
      %442 = vmatprep.subr.bf16.mxu0 0
      %443 = vmatpush1.bf16.msra.mxu0 %v381
      %444 = vmatprep.subr.bf16.mxu0 0
      %445 = vmatpush1.bf16.msra.mxu0 %v382
      %446 = vmatprep.subr.bf16.mxu0 0
      %447 = vmatpush1.bf16.msra.mxu0 %v383
      %448 = vmatprep.subr.bf16.mxu0 0
      %449 = vmatpush1.bf16.msra.mxu0 %v384
      %450 = vmatprep.mubr.bf16.mxu0 %v278
      %451 = vmatmul.mubr.bf16.gmra.mrb[0].mxu0 %v277
      %v452 = vpop.f32.mrb[0].mxu0
      %v453 = vadd.f32 %v235, %v452
      %v454 = vpop.f32.mrb[0].mxu0
      %v455 = vpop.f32.mrb[0].mxu0
      %v456 = vadd.f32 %v235, %v455
      %v457 = vpop.f32.mrb[0].mxu0
      %458 = vmatprep.mubr.bf16.mxu0 %v281
      %459 = vmatmul.mubr.bf16.gmra.mrb[0].mxu0 %v280
      %v460 = vpop.f32.mrb[0].mxu0
      %v461 = vadd.f32 %v235, %v460
      %v462 = vpop.f32.mrb[0].mxu0
      %v463 = vpop.f32.mrb[0].mxu0
      %v464 = vadd.f32 %v235, %v463
      %v465 = vpop.f32.mrb[0].mxu0
      %466 = vmatprep.mubr.bf16.mxu0 %v284
      %467 = vmatmul.mubr.bf16.gmra.mrb[0].mxu0 %v283
      %v468 = vpop.f32.mrb[0].mxu0
      %v469 = vadd.f32 %v235, %v468
      %v470 = vpop.f32.mrb[0].mxu0
      %v471 = vpop.f32.mrb[0].mxu0
      %v472 = vadd.f32 %v235, %v471
      %v473 = vpop.f32.mrb[0].mxu0
      %474 = vmatprep.mubr.bf16.mxu0 %v287
      %475 = vmatmul.mubr.bf16.gmra.mrb[0].mxu0 %v286
      %v476 = vpop.f32.mrb[0].mxu0
      %v477 = vadd.f32 %v235, %v476
      %v478 = vpop.f32.mrb[0].mxu0
      %v479 = vpop.f32.mrb[0].mxu0
      %v480 = vadd.f32 %v235, %v479
      %v481 = vpop.f32.mrb[0].mxu0
      %482 = vdwg.mxu0
      %483 = vmatprep.subr.bf16.mxu0 0
      %484 = vmatpush1.bf16.msra.mxu0 %v385
      %485 = vmatprep.subr.bf16.mxu0 0
      %486 = vmatpush1.bf16.msra.mxu0 %v386
      %487 = vmatprep.subr.bf16.mxu0 0
      %488 = vmatpush1.bf16.msra.mxu0 0
      %489 = vmatprep.subr.bf16.mxu0 0
      %490 = vmatpush1.bf16.msra.mxu0 0
      %491 = vmatprep.subr.bf16.mxu0 0
      %492 = vmatpush1.bf16.msra.mxu0 0
      %493 = vmatprep.subr.bf16.mxu0 0
      %494 = vmatpush1.bf16.msra.mxu0 0
      %495 = vmatprep.subr.bf16.mxu0 0
      %496 = vmatpush1.bf16.msra.mxu0 0
      %497 = vmatprep.subr.bf16.mxu0 0
      %498 = vmatpush1.bf16.msra.mxu0 0
      %499 = vmatprep.subr.bf16.mxu0 0
      %500 = vmatpush1.bf16.msra.mxu0 0
      %501 = vmatprep.subr.bf16.mxu0 0
      %502 = vmatpush1.bf16.msra.mxu0 0
      %503 = vmatprep.subr.bf16.mxu0 0
      %504 = vmatpush1.bf16.msra.mxu0 0
      %505 = vmatprep.subr.bf16.mxu0 0
      %506 = vmatpush1.bf16.msra.mxu0 0
      %507 = vmatprep.subr.bf16.mxu0 0
      %508 = vmatpush1.bf16.msra.mxu0 0
      %509 = vmatprep.subr.bf16.mxu0 0
      %510 = vmatpush1.bf16.msra.mxu0 0
      %511 = vmatprep.subr.bf16.mxu0 0
      %512 = vmatpush1.bf16.msra.mxu0 0
      %513 = vmatprep.subr.bf16.mxu0 0
      %514 = vmatpush1.bf16.msra.mxu0 0
      %515 = vmatprep.mubr.bf16.mxu0 0
      %516 = vmatmul.mubr.bf16.gmra.mrb[0].mxu0 %v407
      %v517 = vpop.f32.mrb[0].mxu0
      %v518 = vadd.f32 %v453, %v517
      %v519 = vpop.f32.mrb[0].mxu0
      %v520 = vpop.f32.mrb[0].mxu0
      %v521 = vadd.f32 %v456, %v520
      %v522 = vpop.f32.mrb[0].mxu0
      %523 = vmatprep.mubr.bf16.mxu0 0
      %524 = vmatmul.mubr.bf16.gmra.mrb[0].mxu0 %v410
      %v525 = vpop.f32.mrb[0].mxu0
      %v526 = vadd.f32 %v461, %v525
      %v527 = vpop.f32.mrb[0].mxu0
      %v528 = vpop.f32.mrb[0].mxu0
      %v529 = vadd.f32 %v464, %v528
      %v530 = vpop.f32.mrb[0].mxu0
      %531 = vmatprep.mubr.bf16.mxu0 0
      %532 = vmatmul.mubr.bf16.gmra.mrb[0].mxu0 %v413
      %v533 = vpop.f32.mrb[0].mxu0
      %v534 = vadd.f32 %v469, %v533
      %v535 = vpop.f32.mrb[0].mxu0
      %v536 = vpop.f32.mrb[0].mxu0
      %v537 = vadd.f32 %v472, %v536
      %v538 = vpop.f32.mrb[0].mxu0
      %539 = vmatprep.mubr.bf16.mxu0 0
      %540 = vmatmul.mubr.bf16.gmra.mrb[0].mxu0 %v416
      %v541 = vpop.f32.mrb[0].mxu0
      %v542 = vadd.f32 %v477, %v541
      %v543 = vpop.f32.mrb[0].mxu0
      %v544 = vpop.f32.mrb[0].mxu0
      %v545 = vadd.f32 %v480, %v544
      %v546 = vpop.f32.mrb[0].mxu0
      %547 = vdwg.mxu0
      %vm548 = vcmask 97280
      %549 = vst.msk [vmem:[%s175] sm:$0xff] %vm548, %v518
      %550 = vst.msk [vmem:[%s175 + $0x8] sm:$0xff] %vm548, %v521
      %551 = vst.msk [vmem:[%s175 + $0x10] sm:$0xff] %vm548, %v526
      %552 = vst.msk [vmem:[%s175 + $0x18] sm:$0xff] %vm548, %v529
      %553 = vst.msk [vmem:[%s175 + $0x20] sm:$0xff] %vm548, %v534
      %554 = vst.msk [vmem:[%s175 + $0x28] sm:$0xff] %vm548, %v537
      %555 = vst.msk [vmem:[%s175 + $0x30] sm:$0xff] %vm548, %v542
      %556 = vst.msk [vmem:[%s175 + $0x38] sm:$0xff] %vm548, %v545
      %s557 = smul.u32 8, %s14
      %p558 = scmp.lt.s32.totalorder %s557, 15
      %s559 = scalar_select %p558, %s557, 15
      %s560 = smul.addr %s559, 8
      %s561 = scalar_lea.vmem %s3, %s560
      // Predicated region
      $region33: #{edic_forward.15} parent=31 // pred_check
        %p562 = pneg %p100
      $region34: #{edic_forward.15} parent=31 // pred_check_branch
        %564 = sbr.rel (%p562) target = $region36
      $region35: #{edic_forward.15} parent=31 // pred_region
        %s565 = smul.u32 8, %s14
      $region36: #{edic_forward.15} parent=31 // pred_fallthru
        _
    $region32: #{edic_forward.15} parent=5 // pred_fallthru
      _
    %p566 = scmp.le.s32.totalorder 2, %s9
    // Predicated region
    $region37: #{edic_forward.15} parent=5 // pred_check
      %p567 = pneg %p566
    $region38: #{edic_forward.15} parent=5 // pred_check_branch
      %569 = sbr.rel (%p567) target = $region40
    $region39: #{edic_forward.15} parent=5 // pred_region
      %s570 = ssub.s32 %s9, 2
      // Predicated region
      $region41: #{edic_forward.15} parent=39 // pred_check
        %p571 = pneg %p106
      $region42: #{edic_forward.15} parent=39 // pred_check_branch
        %573 = sbr.rel (%p571) target = $region44
      $region43: #{edic_forward.15} parent=39 // pred_region
        %s574 = smul.u32 8, %s15
        %p575 = scmp.lt.s32.totalorder %s574, 15
        %s576 = scalar_select %p575, %s574, 15
        %s577 = smul.addr %s576, 8
        %s578 = scalar_lea.vmem %s3, %s577
      $region44: #{edic_forward.15} parent=39 // pred_fallthru
        _
    $region40: #{edic_forward.15} parent=5 // pred_fallthru
      _
  $region6: #{edic_forward.15} parent=0 // loop_footer
    %s13 = sadd.s32 1, %s9
  $region7: #{edic_forward.15} parent=0 // loop_footer_branch
    %8 = sbr.rel target = $region3
  $region8: #{edic_forward.15} parent=0 // loop_exit
    _

</llo_original>
